<compile_context>
chip_gen: v7x
topology: tpu7x:2x2x1
jax: 0.10.0
libtpu: 0.0.40
codegen_flags: <defaults>
</compile_context>

<pallas_src>
import numpy as np
import jax
import jax.numpy as jnp
from jax import lax
from jax.experimental import pallas as pl
from jax.experimental.pallas import tpu as pltpu


# ----------------------------- Pallas kernel ---------------------------------
def _make_window_attn_kernel(num_heads: int, head_dim: int, dim: int,
                             n_win_step: int, seq_len: int):
    C = dim
    P = head_dim
    nH = num_heads
    WB = n_win_step          # windows handled per grid step (= images_per_step * nW)
    L = seq_len              # tokens per window
    M = WB * L               # rows fed to the projection matmuls
    HB = nH * WB             # batch size of the head-batched attention dots

    def kernel(x_ref, wqkv_ref, bqkv_ref, wproj_ref, bproj_ref, bm_ref, o_ref):
        # x_ref:   (1, M, C)        bf16
        # wqkv:    (C, 3C)          bf16  (Q columns pre-scaled by 1/sqrt(P))
        # bqkv:    (1, 3C)          f32   (Q part pre-scaled)
        # wproj:   (C, C)           bf16
        # bproj:   (1, C)           f32
        # bm_ref:  (nH, WBm, L, L)  bf16  rel-pos bias (+ shift mask); WBm in {1, WB}
        # o_ref:   (1, M, C)        bf16
        x = x_ref[0]                                                    # (M, C)
        qkv = jnp.dot(x, wqkv_ref[...],
                      preferred_element_type=jnp.float32) + bqkv_ref[...]   # (M, 3C)
        qkv = qkv.astype(jnp.bfloat16)

        # Build the head-major batch (nH*WB, L, P) for q / k / v.  The static
        # width-P lane slices are the transpose-free relayout; they now feed a
        # single stacked value per tensor (ONE batched dot each for QK^T and
        # P@V) instead of nH separate matmuls, and nothing goes through VMEM.
        def head_batch(col0):
            parts = [qkv[:, col0 + h * P: col0 + (h + 1) * P].reshape(WB, L, P)
                     for h in range(nH)]
            return jnp.concatenate(parts, axis=0)            # (HB, L, P), index h*WB+w

        q = head_batch(0)
        k = head_batch(C)
        v = head_batch(2 * C)

        # scores: single batched QK^T (contract on P, no materialized transpose)
        attn = lax.dot_general(q, k, (((2,), (2,)), ((0,), (0,))),
                               preferred_element_type=jnp.float32)      # (HB, L, L)

        # relative-position bias (+ shift mask): bf16 resident, f32 add.
        # (bf16 drops the tiny bias on -100-masked entries; harmless -- those
        #  entries underflow to ~0 after softmax.)
        attn = (attn.reshape(nH, WB, L, L)
                + bm_ref[...].astype(jnp.float32)).reshape(HB, L, L)

        # softmax in f32, one pass over all heads; EUP approx reciprocal.
        # TODO(synk): for L << 128 a lane-packed softmax (several windows per
        # vreg row) would raise EUP/VPU lane occupancy; not implemented.
        attn = attn - jnp.max(attn, axis=-1, keepdims=True)
        prob = jnp.exp(attn)
        inv = pl.reciprocal(jnp.sum(prob, axis=-1, keepdims=True), approx=True)
        prob = (prob * inv).astype(jnp.bfloat16)

        # attn_drop / proj_drop have rate 0.0 -> identity at inference.
        ctx = lax.dot_general(prob, v, (((2,), (1,)), ((0,), (0,))),
                              preferred_element_type=jnp.float32)       # (HB, L, P)
        ctx = ctx.reshape(nH, WB, L, P)
        # re-assemble heads along the lane dim in registers (no scratch stores)
        ctx = jnp.concatenate([ctx[h].reshape(M, P) for h in range(nH)],
                              axis=-1).astype(jnp.bfloat16)             # (M, C)

        out = jnp.dot(ctx, wproj_ref[...],
                      preferred_element_type=jnp.float32) + bproj_ref[...]
        o_ref[0] = out.astype(o_ref.dtype)

    return kernel


def window_attention_pallas(x_steps, wqkv, bqkv, wproj, bproj, bm, num_heads):
    """x_steps: (S, M, C) bf16, M = images_per_step * nW * L; returns (S, M, C) bf16."""
    S, M, C = x_steps.shape
    nH, WBm, L, _ = bm.shape
    WB = M // L
    P = C // num_heads
    kernel = _make_window_attn_kernel(num_heads, P, C, WB, L)

    return pl.pallas_call(
        kernel,
        out_shape=jax.ShapeDtypeStruct((S, M, C), jnp.bfloat16),        # bf16 writeback
        grid_spec=pltpu.PrefetchScalarGridSpec(
            num_scalar_prefetch=0,
            grid=(S,),
            in_specs=[
                pl.BlockSpec((1, M, C), lambda s: (s, 0, 0)),           # tokens of step s
                # Resident weights / biases / bias+mask (constant index maps).
                # TODO(synk): at production widths single-buffer these with
                # pipeline_mode=pl.Buffered(1) to save VMEM on v7x.
                pl.BlockSpec((C, 3 * C), lambda s: (0, 0)),
                pl.BlockSpec((1, 3 * C), lambda s: (0, 0)),
                pl.BlockSpec((C, C), lambda s: (0, 0)),
                pl.BlockSpec((1, C), lambda s: (0, 0)),
                pl.BlockSpec((nH, WBm, L, L), lambda s: (0, 0, 0, 0)),
            ],
            out_specs=pl.BlockSpec((1, M, C), lambda s: (s, 0, 0)),
        ),
        compiler_params=pltpu.CompilerParams(
            dimension_semantics=("parallel",),
            vmem_limit_bytes=32 * 1024 * 1024),
    )(x_steps, wqkv, bqkv, wproj, bproj, bm)


# ------------------------------- glue (JAX) ----------------------------------
def _images_per_step(batch, rows_per_image, target_rows=256, max_rows=4096):
    """Fold several images into one grid step so the projections see an
    MXU-filling M, while bounding the per-step block size."""
    best = 1
    for g in range(1, batch + 1):
        if batch % g:
            continue
        if g * rows_per_image > max_rows:
            break
        best = g
        if g * rows_per_image >= target_rows:
            break
    return best


def window_partition(x, ws):
    B, H, W, C = x.shape
    x = x.reshape(B, H // ws, ws, W // ws, ws, C).transpose(0, 1, 3, 2, 4, 5)
    return x.reshape(-1, ws, ws, C)


def window_reverse(xw, ws, H, W):
    C = xw.shape[-1]
    B = xw.shape[0] // ((H // ws) * (W // ws))
    x = xw.reshape(B, H // ws, W // ws, ws, ws, C).transpose(0, 1, 3, 2, 4, 5)
    return x.reshape(B, H, W, C)


def create_shift_mask(H, W, ws, shift):
    img_mask = np.zeros((H, W), np.float32)
    slices = (slice(0, -ws), slice(-ws, -shift), slice(-shift, None))
    cnt = 0
    for h in slices:
        for w in slices:
            img_mask[h, w] = cnt
            cnt += 1
    mw = img_mask.reshape(H // ws, ws, W // ws, ws).transpose(0, 2, 1, 3)
    mw = mw.reshape(-1, ws * ws)                                   # (nW, L)
    am = mw[:, None, :] - mw[:, :, None]                           # (nW, L, L)
    am = np.where(am != 0, -100.0, 0.0).astype(np.float32)
    return jnp.asarray(am)


def relative_position_index(ws):
    coords = np.stack(np.meshgrid(np.arange(ws), np.arange(ws), indexing="ij"))
    cf = coords.reshape(2, -1)
    rel = cf[:, :, None] - cf[:, None, :]
    rel = rel.transpose(1, 2, 0).astype(np.int64)
    rel[:, :, 0] += ws - 1
    rel[:, :, 1] += ws - 1
    rel[:, :, 0] *= 2 * ws - 1
    return rel.sum(-1)                                             # (L, L)


def window_attention_forward(x, params, window_size, num_heads, shift, use_pallas=True):
    B, H, W, C = x.shape
    ws = window_size
    L = ws * ws
    shift_size = ws // 2 if shift else 0
    nW = (H // ws) * (W // ws)
    P = C // num_heads
    scale = float(P) ** (-0.5)

    if shift_size > 0:
        x = jnp.roll(x, shift=(-shift_size, -shift_size), axis=(1, 2))
        mask = create_shift_mask(H, W, ws, shift_size)             # (nW, L, L)
    else:
        mask = None

    xw = window_partition(x, ws).reshape(-1, L, C)                 # (Bn, L, C)
    Bn = xw.shape[0]

    # relative position bias: gather from table -> (nH, L, L)
    rel_idx = jnp.asarray(relative_position_index(ws))
    rel_bias = params["rpb_table"][rel_idx.reshape(-1)].reshape(L, L, num_heads)
    rel_bias = jnp.transpose(rel_bias, (2, 0, 1)).astype(jnp.float32)

    wqkv = params["qkv_w"].T.astype(jnp.float32)    # (C, 3C)  (nn.Linear stores (out, in))
    bqkv = params["qkv_b"].reshape(1, -1).astype(jnp.float32)
    wproj = params["proj_w"].T.astype(jnp.float32)  # (C, C)
    bproj = params["proj_b"].reshape(1, -1).astype(jnp.float32)

    if use_pallas:
        G = _images_per_step(B, nW * L)
        S = B // G
        # fold 1/sqrt(P) into the Q projection (weights + bias) -> no in-kernel scale
        qscale = jnp.concatenate(
            [jnp.full((1, C), scale, jnp.float32),
             jnp.ones((1, 2 * C), jnp.float32)], axis=1)           # (1, 3C)
        wqkv_s = (wqkv * qscale).astype(jnp.bfloat16)
        bqkv_s = bqkv * qscale
        # pre-combine rel-pos bias with the shift mask, head-major, bf16 resident.
        if mask is not None:
            bm = rel_bias[:, None, :, :] + mask[None, :, :, :]     # (nH, nW, L, L)
            if G > 1:
                # mask pattern repeats for every image folded into the step;
                # for production (large nW) choose G=1 so no tiling is needed.
                bm = jnp.tile(bm, (1, G, 1, 1))                    # (nH, G*nW, L, L)
        else:
            bm = rel_bias[:, None, :, :]                           # (nH, 1, L, L)
        bm = bm.astype(jnp.bfloat16)
        x_steps = xw.reshape(S, G * nW * L, C).astype(jnp.bfloat16)
        out = window_attention_pallas(x_steps, wqkv_s, bqkv_s,
                                      wproj.astype(jnp.bfloat16), bproj,
                                      bm, num_heads)
        out = out.reshape(Bn, L, C).astype(jnp.float32)
    else:
        # pure-JAX f32 reference mirroring the PyTorch math
        qkv = xw @ wqkv + bqkv                                     # (Bn, L, 3C)
        qkv = qkv.reshape(Bn, L, 3, num_heads, P).transpose(2, 0, 3, 1, 4)
        q, k, v = qkv[0] * scale, qkv[1], qkv[2]                   # (Bn, nH, L, P)
        attn = jnp.einsum("bhqp,bhkp->bhqk", q, k)
        attn = attn + rel_bias[None]
        if mask is not None:
            attn = attn + jnp.tile(mask, (B, 1, 1))[:, None]
        attn = jax.nn.softmax(attn, axis=-1)
        o = jnp.einsum("bhqk,bhkp->bhqp", attn, v)
        out = o.transpose(0, 2, 1, 3).reshape(Bn, L, C)
        out = out @ wproj + bproj

    out = window_reverse(out.reshape(Bn, ws, ws, C), ws, H, W)     # (B, H, W, C)
    if shift_size > 0:
        out = jnp.roll(out, shift=(shift_size, shift_size), axis=(1, 2))
    return out


# --------------------------------- main ---------------------------------------
if __name__ == "__main__":
    B, H, W = 2, 8, 8
    dim = 32
    window_size = 4
    num_heads = 4

    key = jax.random.PRNGKey(0)
    k_x, k_rpb, k_qw, k_qb, k_pw, k_pb = jax.random.split(key, 6)

    x = jax.random.normal(k_x, (B, H, W, dim), jnp.float32)

    params = {
        # trunc_normal(std=0.02) approximated by clipped normal (deterministic)
        "rpb_table": jnp.clip(
            0.02 * jax.random.normal(k_rpb, ((2 * window_size - 1) ** 2, num_heads)),
            -0.04, 0.04).astype(jnp.float32),
        "qkv_w": 0.05 * jax.random.normal(k_qw, (3 * dim, dim), jnp.float32),
        "qkv_b": 0.05 * jax.random.normal(k_qb, (3 * dim,), jnp.float32),
        "proj_w": 0.05 * jax.random.normal(k_pw, (dim, dim), jnp.float32),
        "proj_b": 0.05 * jax.random.normal(k_pb, (dim,), jnp.float32),
    }
    # TODO(synk): attn_drop / proj_drop use default rate 0.0 -> identity; stochastic dropout not implemented.

    ok = True
    for shift in (True, False):        # shifted and non-shifted Swin blocks
        out = window_attention_forward(x, params, window_size, num_heads, shift,
                                       use_pallas=True)
        out = jax.block_until_ready(out)
        ref = window_attention_forward(x, params, window_size, num_heads, shift,
                                       use_pallas=False)
        ref = jax.block_until_ready(ref)
        ok &= out.shape == (B, H, W, dim)
        ok &= bool(np.allclose(np.asarray(out), np.asarray(ref), atol=5e-2, rtol=5e-2))

    assert ok
    print("KERNEL_OK")
</pallas_src>

<mosaic_0001>
module attributes {stable_mosaic.version = 11 : i64} {
  func.func @kernel(%arg0: i32, %arg1: memref<1x128x32xbf16, #tpu.memory_space<vmem>>, %arg2: memref<32x96xbf16, #tpu.memory_space<vmem>>, %arg3: memref<1x96xf32, #tpu.memory_space<vmem>>, %arg4: memref<32x32xbf16, #tpu.memory_space<vmem>>, %arg5: memref<1x32xf32, #tpu.memory_space<vmem>>, %arg6: memref<4x8x16x16xbf16, #tpu.memory_space<vmem>>, %arg7: memref<1x128x32xbf16, #tpu.memory_space<vmem>>) attributes {dimension_semantics = [#tpu.dimension_semantics<parallel>], iteration_bounds = array<i64: 1>, scalar_prefetch = 0 : i64, scratch_operands = 0 : i64, tpu.core_type = #tpu.core_type<tc>, window_params = [{transform_indices = @transform_0, window_bounds = array<i64: 1, 128, 32>}, {pipeline_mode = #tpu.pipeline_mode<synchronous>, transform_indices = @transform_1, window_bounds = array<i64: 32, 96>}, {pipeline_mode = #tpu.pipeline_mode<synchronous>, transform_indices = @transform_2, window_bounds = array<i64: 1, 96>}, {pipeline_mode = #tpu.pipeline_mode<synchronous>, transform_indices = @transform_3, window_bounds = array<i64: 32, 32>}, {pipeline_mode = #tpu.pipeline_mode<synchronous>, transform_indices = @transform_4, window_bounds = array<i64: 1, 32>}, {pipeline_mode = #tpu.pipeline_mode<synchronous>, transform_indices = @transform_5, window_bounds = array<i64: 4, 8, 16, 16>}, {transform_indices = @transform_6, window_bounds = array<i64: 1, 128, 32>}]} {
    %c0 = arith.constant 0 : index
    %c0_0 = arith.constant 0 : index
    %c0_1 = arith.constant 0 : index
    %0 = vector.load %arg1[%c0, %c0_0, %c0_1] : memref<1x128x32xbf16, #tpu.memory_space<vmem>>, vector<1x128x32xbf16>
    %1 = vector.shape_cast %0 : vector<1x128x32xbf16> to vector<128x32xbf16>
    %c0_2 = arith.constant 0 : index
    %c0_3 = arith.constant 0 : index
    %2 = vector.load %arg2[%c0_2, %c0_3] : memref<32x96xbf16, #tpu.memory_space<vmem>>, vector<32x96xbf16>
    %cst = arith.constant dense<0.000000e+00> : vector<128x96xf32>
    %3 = tpu.matmul %1, %2, %cst {dimension_numbers = #tpu.dot_dimension_numbers<[1], [0], [0], [1], [0, 0, 1, 1], [], []>} : vector<128x32xbf16>, vector<32x96xbf16>, vector<128x96xf32> -> vector<128x96xf32>
    %c0_4 = arith.constant 0 : index
    %c0_5 = arith.constant 0 : index
    %4 = vector.load %arg3[%c0_4, %c0_5] : memref<1x96xf32, #tpu.memory_space<vmem>>, vector<1x96xf32>
    %5 = vector.broadcast %4 : vector<1x96xf32> to vector<128x96xf32>
    %6 = arith.addf %3, %5 : vector<128x96xf32>
    %7 = arith.truncf %6 : vector<128x96xf32> to vector<128x96xbf16>
    %8 = vector.extract_strided_slice %7 {offsets = [0, 0], sizes = [128, 8], strides = [1, 1]} : vector<128x96xbf16> to vector<128x8xbf16>
    %9 = vector.shape_cast %8 : vector<128x8xbf16> to vector<8x16x8xbf16>
    %10 = vector.extract_strided_slice %7 {offsets = [0, 8], sizes = [128, 8], strides = [1, 1]} : vector<128x96xbf16> to vector<128x8xbf16>
    %11 = vector.shape_cast %10 : vector<128x8xbf16> to vector<8x16x8xbf16>
    %12 = vector.extract_strided_slice %7 {offsets = [0, 16], sizes = [128, 8], strides = [1, 1]} : vector<128x96xbf16> to vector<128x8xbf16>
    %13 = vector.shape_cast %12 : vector<128x8xbf16> to vector<8x16x8xbf16>
    %14 = vector.extract_strided_slice %7 {offsets = [0, 24], sizes = [128, 8], strides = [1, 1]} : vector<128x96xbf16> to vector<128x8xbf16>
    %15 = vector.shape_cast %14 : vector<128x8xbf16> to vector<8x16x8xbf16>
    %16 = tpu.concatenate %9, %11, %13, %15 in 0 : vector<8x16x8xbf16>, vector<8x16x8xbf16>, vector<8x16x8xbf16>, vector<8x16x8xbf16> -> vector<32x16x8xbf16>
    %17 = vector.extract_strided_slice %7 {offsets = [0, 32], sizes = [128, 8], strides = [1, 1]} : vector<128x96xbf16> to vector<128x8xbf16>
    %18 = vector.shape_cast %17 : vector<128x8xbf16> to vector<8x16x8xbf16>
    %19 = vector.extract_strided_slice %7 {offsets = [0, 40], sizes = [128, 8], strides = [1, 1]} : vector<128x96xbf16> to vector<128x8xbf16>
    %20 = vector.shape_cast %19 : vector<128x8xbf16> to vector<8x16x8xbf16>
    %21 = vector.extract_strided_slice %7 {offsets = [0, 48], sizes = [128, 8], strides = [1, 1]} : vector<128x96xbf16> to vector<128x8xbf16>
    %22 = vector.shape_cast %21 : vector<128x8xbf16> to vector<8x16x8xbf16>
    %23 = vector.extract_strided_slice %7 {offsets = [0, 56], sizes = [128, 8], strides = [1, 1]} : vector<128x96xbf16> to vector<128x8xbf16>
    %24 = vector.shape_cast %23 : vector<128x8xbf16> to vector<8x16x8xbf16>
    %25 = tpu.concatenate %18, %20, %22, %24 in 0 : vector<8x16x8xbf16>, vector<8x16x8xbf16>, vector<8x16x8xbf16>, vector<8x16x8xbf16> -> vector<32x16x8xbf16>
    %26 = vector.extract_strided_slice %7 {offsets = [0, 64], sizes = [128, 8], strides = [1, 1]} : vector<128x96xbf16> to vector<128x8xbf16>
    %27 = vector.shape_cast %26 : vector<128x8xbf16> to vector<8x16x8xbf16>
    %28 = vector.extract_strided_slice %7 {offsets = [0, 72], sizes = [128, 8], strides = [1, 1]} : vector<128x96xbf16> to vector<128x8xbf16>
    %29 = vector.shape_cast %28 : vector<128x8xbf16> to vector<8x16x8xbf16>
    %30 = vector.extract_strided_slice %7 {offsets = [0, 80], sizes = [128, 8], strides = [1, 1]} : vector<128x96xbf16> to vector<128x8xbf16>
    %31 = vector.shape_cast %30 : vector<128x8xbf16> to vector<8x16x8xbf16>
    %32 = vector.extract_strided_slice %7 {offsets = [0, 88], sizes = [128, 8], strides = [1, 1]} : vector<128x96xbf16> to vector<128x8xbf16>
    %33 = vector.shape_cast %32 : vector<128x8xbf16> to vector<8x16x8xbf16>
    %34 = tpu.concatenate %27, %29, %31, %33 in 0 : vector<8x16x8xbf16>, vector<8x16x8xbf16>, vector<8x16x8xbf16>, vector<8x16x8xbf16> -> vector<32x16x8xbf16>
    %cst_6 = arith.constant dense<0.000000e+00> : vector<32x16x16xf32>
    %35 = tpu.matmul %16, %25, %cst_6 {dimension_numbers = #tpu.dot_dimension_numbers<[2], [2], [1], [1], [0, 0, 0, 1, 1, 1], [0], [0]>} : vector<32x16x8xbf16>, vector<32x16x8xbf16>, vector<32x16x16xf32> -> vector<32x16x16xf32>
    %36 = vector.shape_cast %35 : vector<32x16x16xf32> to vector<4x8x16x16xf32>
    %c0_7 = arith.constant 0 : index
    %c0_8 = arith.constant 0 : index
    %c0_9 = arith.constant 0 : index
    %c0_10 = arith.constant 0 : index
    %37 = vector.load %arg6[%c0_7, %c0_8, %c0_9, %c0_10] : memref<4x8x16x16xbf16, #tpu.memory_space<vmem>>, vector<4x8x16x16xbf16>
    %38 = arith.extf %37 : vector<4x8x16x16xbf16> to vector<4x8x16x16xf32>
    %39 = arith.addf %36, %38 : vector<4x8x16x16xf32>
    %40 = vector.shape_cast %39 : vector<4x8x16x16xf32> to vector<32x16x16xf32>
    %cst_11 = arith.constant dense<0xFF800000> : vector<32x16xf32>
    %41 = vector.multi_reduction <maximumf>, %40, %cst_11 [2] : vector<32x16x16xf32> to vector<32x16xf32>
    %42 = vector.shape_cast %41 : vector<32x16xf32> to vector<32x16x1xf32>
    %43 = vector.broadcast %42 : vector<32x16x1xf32> to vector<32x16x16xf32>
    %44 = arith.subf %40, %43 : vector<32x16x16xf32>
    %45 = math.exp %44 : vector<32x16x16xf32>
    %cst_12 = arith.constant dense<0.000000e+00> : vector<32x16xf32>
    %46 = vector.multi_reduction <add>, %45, %cst_12 [2] : vector<32x16x16xf32> to vector<32x16xf32>
    %47 = vector.shape_cast %46 : vector<32x16xf32> to vector<32x16x1xf32>
    %48 = tpu.reciprocal %47 {approx = true} : vector<32x16x1xf32> -> vector<32x16x1xf32>
    %49 = vector.broadcast %48 : vector<32x16x1xf32> to vector<32x16x16xf32>
    %50 = arith.mulf %45, %49 : vector<32x16x16xf32>
    %51 = arith.truncf %50 : vector<32x16x16xf32> to vector<32x16x16xbf16>
    %cst_13 = arith.constant dense<0.000000e+00> : vector<32x16x8xf32>
    %52 = tpu.matmul %51, %34, %cst_13 {dimension_numbers = #tpu.dot_dimension_numbers<[2], [1], [1], [2], [0, 0, 0, 1, 1, 2], [0], [0]>} : vector<32x16x16xbf16>, vector<32x16x8xbf16>, vector<32x16x8xf32> -> vector<32x16x8xf32>
    %53 = vector.shape_cast %52 : vector<32x16x8xf32> to vector<4x8x16x8xf32>
    %54 = vector.extract_strided_slice %53 {offsets = [0, 0, 0, 0], sizes = [1, 8, 16, 8], strides = [1, 1, 1, 1]} : vector<4x8x16x8xf32> to vector<1x8x16x8xf32>
    %55 = vector.shape_cast %54 : vector<1x8x16x8xf32> to vector<8x16x8xf32>
    %56 = vector.shape_cast %55 : vector<8x16x8xf32> to vector<128x8xf32>
    %57 = vector.extract_strided_slice %53 {offsets = [1, 0, 0, 0], sizes = [1, 8, 16, 8], strides = [1, 1, 1, 1]} : vector<4x8x16x8xf32> to vector<1x8x16x8xf32>
    %58 = vector.shape_cast %57 : vector<1x8x16x8xf32> to vector<8x16x8xf32>
    %59 = vector.shape_cast %58 : vector<8x16x8xf32> to vector<128x8xf32>
    %60 = vector.extract_strided_slice %53 {offsets = [2, 0, 0, 0], sizes = [1, 8, 16, 8], strides = [1, 1, 1, 1]} : vector<4x8x16x8xf32> to vector<1x8x16x8xf32>
    %61 = vector.shape_cast %60 : vector<1x8x16x8xf32> to vector<8x16x8xf32>
    %62 = vector.shape_cast %61 : vector<8x16x8xf32> to vector<128x8xf32>
    %63 = vector.extract_strided_slice %53 {offsets = [3, 0, 0, 0], sizes = [1, 8, 16, 8], strides = [1, 1, 1, 1]} : vector<4x8x16x8xf32> to vector<1x8x16x8xf32>
    %64 = vector.shape_cast %63 : vector<1x8x16x8xf32> to vector<8x16x8xf32>
    %65 = vector.shape_cast %64 : vector<8x16x8xf32> to vector<128x8xf32>
    %66 = tpu.concatenate %56, %59, %62, %65 in 1 : vector<128x8xf32>, vector<128x8xf32>, vector<128x8xf32>, vector<128x8xf32> -> vector<128x32xf32>
    %67 = arith.truncf %66 : vector<128x32xf32> to vector<128x32xbf16>
    %c0_14 = arith.constant 0 : index
    %c0_15 = arith.constant 0 : index
    %68 = vector.load %arg4[%c0_14, %c0_15] : memref<32x32xbf16, #tpu.memory_space<vmem>>, vector<32x32xbf16>
    %cst_16 = arith.constant dense<0.000000e+00> : vector<128x32xf32>
    %69 = tpu.matmul %67, %68, %cst_16 {dimension_numbers = #tpu.dot_dimension_numbers<[1], [0], [0], [1], [0, 0, 1, 1], [], []>} : vector<128x32xbf16>, vector<32x32xbf16>, vector<128x32xf32> -> vector<128x32xf32>
    %c0_17 = arith.constant 0 : index
    %c0_18 = arith.constant 0 : index
    %70 = vector.load %arg5[%c0_17, %c0_18] : memref<1x32xf32, #tpu.memory_space<vmem>>, vector<1x32xf32>
    %71 = vector.broadcast %70 : vector<1x32xf32> to vector<128x32xf32>
    %72 = arith.addf %69, %71 : vector<128x32xf32>
    %73 = arith.truncf %72 : vector<128x32xf32> to vector<128x32xbf16>
    %c0_19 = arith.constant 0 : index
    %c0_20 = arith.constant 0 : index
    %c0_21 = arith.constant 0 : index
    %74 = vector.load %arg7[%c0_19, %c0_20, %c0_21] : memref<1x128x32xbf16, #tpu.memory_space<vmem>>, vector<1x128x32xbf16>
    %75 = vector.shape_cast %74 : vector<1x128x32xbf16> to vector<128x32xbf16>
    %76 = vector.shape_cast %73 : vector<128x32xbf16> to vector<1x128x32xbf16>
    tpu.vector_store %arg7[%c0_19, %c0_20, %c0_21], %76 {strides = array<i32>} : memref<1x128x32xbf16, #tpu.memory_space<vmem>>, vector<1x128x32xbf16>,
    return
  }
  func.func @transform_0(%arg0: i32) -> (i32, i32, i32) {
    %c0_i32 = arith.constant 0 : i32
    %c0_i32_0 = arith.constant 0 : i32
    %c0_i32_1 = arith.constant 0 : i32
    return %arg0, %c0_i32, %c0_i32_0 : i32, i32, i32
  }
  func.func @transform_1(%arg0: i32) -> (i32, i32) {
    %c0_i32 = arith.constant 0 : i32
    %c0_i32_0 = arith.constant 0 : i32
    %c0_i32_1 = arith.constant 0 : i32
    return %c0_i32, %c0_i32_0 : i32, i32
  }
  func.func @transform_2(%arg0: i32) -> (i32, i32) {
    %c0_i32 = arith.constant 0 : i32
    %c0_i32_0 = arith.constant 0 : i32
    %c0_i32_1 = arith.constant 0 : i32
    return %c0_i32, %c0_i32_0 : i32, i32
  }
  func.func @transform_3(%arg0: i32) -> (i32, i32) {
    %c0_i32 = arith.constant 0 : i32
    %c0_i32_0 = arith.constant 0 : i32
    %c0_i32_1 = arith.constant 0 : i32
    return %c0_i32, %c0_i32_0 : i32, i32
  }
  func.func @transform_4(%arg0: i32) -> (i32, i32) {
    %c0_i32 = arith.constant 0 : i32
    %c0_i32_0 = arith.constant 0 : i32
    %c0_i32_1 = arith.constant 0 : i32
    return %c0_i32, %c0_i32_0 : i32, i32
  }
  func.func @transform_5(%arg0: i32) -> (i32, i32, i32, i32) {
    %c0_i32 = arith.constant 0 : i32
    %c0_i32_0 = arith.constant 0 : i32
    %c0_i32_1 = arith.constant 0 : i32
    %c0_i32_2 = arith.constant 0 : i32
    %c0_i32_3 = arith.constant 0 : i32
    return %c0_i32, %c0_i32_0, %c0_i32_1, %c0_i32_2 : i32, i32, i32, i32
  }
  func.func @transform_6(%arg0: i32) -> (i32, i32, i32) {
    %c0_i32 = arith.constant 0 : i32
    %c0_i32_0 = arith.constant 0 : i32
    %c0_i32_1 = arith.constant 0 : i32
    return %arg0, %c0_i32, %c0_i32_0 : i32, i32, i32
  }
}

</mosaic_0001>

<llo_original>
// kernel: tpu_custom_call.1
$region0: #{tpu_custom_call.1}
  #allocation0 [shape = 'u32[]', space=smem, size = 0x4, offset = 0x4, fixed_abs, tag = 'smem constant byte address 0x4 - core index']
  #allocation1 [shape = 'u32[144,128]{1,0:T(1,128)}', space=vmem, size = 0x12000, scoped, tag = 'internal scratch']
  %s0 = inlined_call_operand.vmem [shape: bf16[1,128,32], index: 0, kind: input, shape index: {}]
  %s1 = inlined_call_operand.vmem [shape: bf16[32,96], index: 1, kind: input, shape index: {}]
  %s2 = inlined_call_operand.vmem [shape: f32[1,96], index: 2, kind: input, shape index: {}]
  %s3 = inlined_call_operand.vmem [shape: bf16[32,32], index: 3, kind: input, shape index: {}]
  %s4 = inlined_call_operand.vmem [shape: f32[1,32], index: 4, kind: input, shape index: {}]
  %s5 = inlined_call_operand.hbm [shape: bf16[4,8,16,16], index: 5, kind: input, shape index: {}]
  %s6 = inlined_call_operand.vmem [shape: bf16[1,128,32], index: 6, kind: output, shape index: {}]
  %s7 = sld [smem:[#allocation0]]
  $region38: #{tpu_custom_call.1} parent=0
    _
  %s9 = ssub.s32 1, %s7
  %s10 = scalar_select 0, %s9, %s7
  $region1: #{tpu_custom_call.1} parent=0
    #allocation2 [shape = 'u8[131072]{0}', space=vmem, size = 0x20000, scoped, tag = 'input window, operand 5, single buffered']
    #allocation3 [shape = 's32[1]{0}', space=sflag, size = 0x4, scoped, tag = 'scoped memory for tpu_custom_call.1']
    %11 = vsyncpa [#allocation3], 0
    // Predicated region
    $region2: #{tpu_custom_call.1} parent=1 // pred_check
      _
    $region3: #{tpu_custom_call.1} parent=1 // pred_check_branch
      %13 = sbr.rel (0) target = $region5
    $region4: #{tpu_custom_call.1} parent=1 // pred_region
      _
    $region5: #{tpu_custom_call.1} parent=1 // pred_fallthru
      _
    // Predicated region
    $region6: #{tpu_custom_call.1} parent=1 // pred_check
      _
    $region7: #{tpu_custom_call.1} parent=1 // pred_check_branch
      %15 = sbr.rel (0) target = $region9
    $region8: #{tpu_custom_call.1} parent=1 // pred_region
      _
    $region9: #{tpu_custom_call.1} parent=1 // pred_fallthru
      _
    // Predicated region
    $region10: #{tpu_custom_call.1} parent=1 // pred_check
      _
    $region11: #{tpu_custom_call.1} parent=1 // pred_check_branch
      %17 = sbr.rel (0) target = $region13
    $region12: #{tpu_custom_call.1} parent=1 // pred_region
      _
    $region13: #{tpu_custom_call.1} parent=1 // pred_fallthru
      _
    // Predicated region
    $region14: #{tpu_custom_call.1} parent=1 // pred_check
      _
    $region15: #{tpu_custom_call.1} parent=1 // pred_check_branch
      %19 = sbr.rel (0) target = $region17
    $region16: #{tpu_custom_call.1} parent=1 // pred_region
      _
    $region17: #{tpu_custom_call.1} parent=1 // pred_fallthru
      _
    // Predicated region
    $region18: #{tpu_custom_call.1} parent=1 // pred_check
      _
    $region19: #{tpu_custom_call.1} parent=1 // pred_check_branch
      %21 = sbr.rel (0) target = $region21
    $region20: #{tpu_custom_call.1} parent=1 // pred_region
      _
    $region21: #{tpu_custom_call.1} parent=1 // pred_fallthru
      _
    // Predicated region
    $region22: #{tpu_custom_call.1} parent=1 // pred_check
      _
    $region23: #{tpu_custom_call.1} parent=1 // pred_check_branch
      %23 = sbr.rel (0) target = $region25
    $region24: #{tpu_custom_call.1} parent=1 // pred_region
      %s25 = ssub.s32 4096, 4096
      %26 = vsyncadd [#allocation3], %s25
      %s27 = sshll.u32 [#allocation2], 4
      %s28 = int_to_ptr.vmem [resolvable:$true] %s27
      %33 = dma.hbm_to_vmem [thread:$0]  %s5, 4096, %s28, [#allocation3], 64, 64, 4
    $region25: #{tpu_custom_call.1} parent=1 // pred_fallthru
      _
    // Predicated region
    $region26: #{tpu_custom_call.1} parent=1 // pred_check
      _
    $region27: #{tpu_custom_call.1} parent=1 // pred_check_branch
      %35 = sbr.rel (0) target = $region29
    $region28: #{tpu_custom_call.1} parent=1 // pred_region
      %36 = dma.done [#allocation3], 4096
    $region29: #{tpu_custom_call.1} parent=1 // pred_fallthru
      _
    %v38 = vld [vmem:[%s0] sm:$0xf]
    %v39 = vld [vmem:[%s0 + $0x4] sm:$0xf]
    %v40 = vld [vmem:[%s0 + $0x8] sm:$0xf]
    %v41 = vld [vmem:[%s0 + $0xc] sm:$0xf]
    %v42 = vld [vmem:[%s0 + $0x10] sm:$0xf]
    %v43 = vld [vmem:[%s0 + $0x14] sm:$0xf]
    %v44 = vld [vmem:[%s0 + $0x18] sm:$0xf]
    %v45 = vld [vmem:[%s0 + $0x1c] sm:$0xf]
    %v46 = vld [vmem:[%s0 + $0x20] sm:$0xf]
    %v47 = vld [vmem:[%s0 + $0x24] sm:$0xf]
    %v48 = vld [vmem:[%s0 + $0x28] sm:$0xf]
    %v49 = vld [vmem:[%s0 + $0x2c] sm:$0xf]
    %v50 = vld [vmem:[%s0 + $0x30] sm:$0xf]
    %v51 = vld [vmem:[%s0 + $0x34] sm:$0xf]
    %v52 = vld [vmem:[%s0 + $0x38] sm:$0xf]
    %v53 = vld [vmem:[%s0 + $0x3c] sm:$0xf]
    %v54 = vld [vmem:[%s1] sm:$0xf]
    %v55 = vld [vmem:[%s1 + $0x4] sm:$0xf]
    %v56 = vld [vmem:[%s1 + $0x8] sm:$0xf]
    %v57 = vld [vmem:[%s1 + $0xc] sm:$0xf]
    %v58 = vld [vmem:[%s2] sm:$0x1]
    %v60 = vlaneseq
    %v61 = vshrl.u32 %v60, 7
    %v62 = vsub.s32 0, %v61
    %v63 = vrot.slane %v58, %v62
    %v81 = vunpack.c.l.b16 %v38
    %v82 = vunpack.c.l.b16 %v39
    %v83 = vunpack.c.l.b16 %v40
    %v84 = vunpack.c.l.b16 %v41
    %v85 = vunpack.c.l.b16 %v42
    %v86 = vunpack.c.l.b16 %v43
    %v87 = vunpack.c.l.b16 %v44
    %v88 = vunpack.c.l.b16 %v45
    %v89 = vunpack.c.l.b16 %v46
    %v90 = vunpack.c.l.b16 %v47
    %v91 = vunpack.c.l.b16 %v48
    %v92 = vunpack.c.l.b16 %v49
    %v93 = vunpack.c.l.b16 %v50
    %v94 = vunpack.c.l.b16 %v51
    %v95 = vunpack.c.l.b16 %v52
    %v96 = vunpack.c.l.b16 %v53
    %v97 = vpack.c.b16 %v82, %v81
    %v98 = vpack.c.b16 %v84, %v83
    %v99 = vpack.c.b16 %v86, %v85
    %v100 = vpack.c.b16 %v88, %v87
    %v101 = vpack.c.b16 %v90, %v89
    %v102 = vpack.c.b16 %v92, %v91
    %v103 = vpack.c.b16 %v94, %v93
    %v104 = vpack.c.b16 %v96, %v95
    %v109 = vunpack.c.l.b16 %v54
    %v110 = vunpack.c.l.b16 %v55
    %v111 = vunpack.c.l.b16 %v56
    %v112 = vunpack.c.l.b16 %v57
    %v113 = vpack.c.b16 %v110, %v109
    %v114 = vpack.c.b16 %v112, %v111
    %vm117 = vcmask 261120
    %v119 = vsel %vm117, %v97, 0
    %v122 = vsel %vm117, %v98, 0
    %v125 = vsel %vm117, %v99, 0
    %v128 = vsel %vm117, %v100, 0
    %v131 = vsel %vm117, %v101, 0
    %v134 = vsel %vm117, %v102, 0
    %v137 = vsel %vm117, %v103, 0
    %v140 = vsel %vm117, %v104, 0
    %142 = vmatprep.subr.bf16.mxu0 0
    %143 = vmatpush1.bf16.msra.mxu0 %v113
    %144 = vmatprep.subr.bf16.mxu0 0
    %145 = vmatpush1.bf16.msra.mxu0 %v114
    %146 = vmatprep.subr.bf16.mxu0 0
    %147 = vmatpush1.bf16.msra.mxu0 0
    %148 = vmatprep.subr.bf16.mxu0 0
    %149 = vmatpush1.bf16.msra.mxu0 0
    %150 = vmatprep.subr.bf16.mxu0 0
    %151 = vmatpush1.bf16.msra.mxu0 0
    %152 = vmatprep.subr.bf16.mxu0 0
    %153 = vmatpush1.bf16.msra.mxu0 0
    %154 = vmatprep.subr.bf16.mxu0 0
    %155 = vmatpush1.bf16.msra.mxu0 0
    %156 = vmatprep.subr.bf16.mxu0 0
    %157 = vmatpush1.bf16.msra.mxu0 0
    %158 = vmatprep.subr.bf16.mxu0 0
    %159 = vmatpush1.bf16.msra.mxu0 0
    %160 = vmatprep.subr.bf16.mxu0 0
    %161 = vmatpush1.bf16.msra.mxu0 0
    %162 = vmatprep.subr.bf16.mxu0 0
    %163 = vmatpush1.bf16.msra.mxu0 0
    %164 = vmatprep.subr.bf16.mxu0 0
    %165 = vmatpush1.bf16.msra.mxu0 0
    %166 = vmatprep.subr.bf16.mxu0 0
    %167 = vmatpush1.bf16.msra.mxu0 0
    %168 = vmatprep.subr.bf16.mxu0 0
    %169 = vmatpush1.bf16.msra.mxu0 0
    %170 = vmatprep.subr.bf16.mxu0 0
    %171 = vmatpush1.bf16.msra.mxu0 0
    %172 = vmatprep.subr.bf16.mxu0 0
    %173 = vmatpush1.bf16.msra.mxu0 0
    %174 = vmatprep.mubr.bf16.mxu0 0
    %175 = vmatmul.mubr.bf16.gmra.mrb[0].mxu0 %v119
    %v176 = vpop.f32.mrb[0].mxu0
    %v177 = vadd.f32 %v63, %v176
    %v178 = vpop.f32.mrb[0].mxu0
    %v179 = vpop.f32.mrb[0].mxu0
    %v180 = vadd.f32 %v63, %v179
    %v181 = vpop.f32.mrb[0].mxu0
    %182 = vmatprep.mubr.bf16.mxu0 0
    %183 = vmatmul.mubr.bf16.gmra.mrb[0].mxu0 %v122
    %v184 = vpop.f32.mrb[0].mxu0
    %v185 = vadd.f32 %v63, %v184
    %v186 = vpop.f32.mrb[0].mxu0
    %v187 = vpop.f32.mrb[0].mxu0
    %v188 = vadd.f32 %v63, %v187
    %v189 = vpop.f32.mrb[0].mxu0
    %190 = vmatprep.mubr.bf16.mxu0 0
    %191 = vmatmul.mubr.bf16.gmra.mrb[0].mxu0 %v125
    %v192 = vpop.f32.mrb[0].mxu0
    %v193 = vadd.f32 %v63, %v192
    %v194 = vpop.f32.mrb[0].mxu0
    %v195 = vpop.f32.mrb[0].mxu0
    %v196 = vadd.f32 %v63, %v195
    %v197 = vpop.f32.mrb[0].mxu0
    %198 = vmatprep.mubr.bf16.mxu0 0
    %199 = vmatmul.mubr.bf16.gmra.mrb[0].mxu0 %v128
    %v200 = vpop.f32.mrb[0].mxu0
    %v201 = vadd.f32 %v63, %v200
    %v202 = vpop.f32.mrb[0].mxu0
    %v203 = vpop.f32.mrb[0].mxu0
    %v204 = vadd.f32 %v63, %v203
    %v205 = vpop.f32.mrb[0].mxu0
    %206 = vmatprep.mubr.bf16.mxu0 0
    %207 = vmatmul.mubr.bf16.gmra.mrb[0].mxu0 %v131
    %v208 = vpop.f32.mrb[0].mxu0
    %v209 = vadd.f32 %v63, %v208
    %v210 = vpop.f32.mrb[0].mxu0
    %v211 = vpop.f32.mrb[0].mxu0
    %v212 = vadd.f32 %v63, %v211
    %v213 = vpop.f32.mrb[0].mxu0
    %214 = vmatprep.mubr.bf16.mxu0 0
    %215 = vmatmul.mubr.bf16.gmra.mrb[0].mxu0 %v134
    %v216 = vpop.f32.mrb[0].mxu0
    %v217 = vadd.f32 %v63, %v216
    %v218 = vpop.f32.mrb[0].mxu0
    %v219 = vpop.f32.mrb[0].mxu0
    %v220 = vadd.f32 %v63, %v219
    %v221 = vpop.f32.mrb[0].mxu0
    %222 = vmatprep.mubr.bf16.mxu0 0
    %223 = vmatmul.mubr.bf16.gmra.mrb[0].mxu0 %v137
    %v224 = vpop.f32.mrb[0].mxu0
    %v225 = vadd.f32 %v63, %v224
    %v226 = vpop.f32.mrb[0].mxu0
    %v227 = vpop.f32.mrb[0].mxu0
    %v228 = vadd.f32 %v63, %v227
    %v229 = vpop.f32.mrb[0].mxu0
    %230 = vmatprep.mubr.bf16.mxu0 0
    %231 = vmatmul.mubr.bf16.gmra.mrb[0].mxu0 %v140
    %v232 = vpop.f32.mrb[0].mxu0
    %v233 = vadd.f32 %v63, %v232
    %v234 = vpop.f32.mrb[0].mxu0
    %v235 = vpop.f32.mrb[0].mxu0
    %v236 = vadd.f32 %v63, %v235
    %v237 = vpop.f32.mrb[0].mxu0
    %238 = vdwg.mxu0
    %v239 = vpack.c.bf16 %v180, %v177
    %v240 = vpack.c.bf16 %v188, %v185
    %v241 = vpack.c.bf16 %v196, %v193
    %v242 = vpack.c.bf16 %v204, %v201
    %v243 = vpack.c.bf16 %v212, %v209
    %v244 = vpack.c.bf16 %v220, %v217
    %v245 = vpack.c.bf16 %v228, %v225
    %v246 = vpack.c.bf16 %v236, %v233
    %255 = vrot.lane.b32.xlu0 %v239, 120
    %v256 = vpop.permute.xlu0 %255
    %257 = vrot.lane.b32.xlu0 %v240, 120
    %v258 = vpop.permute.xlu0 %257
    %259 = vrot.lane.b32.xlu0 %v241, 120
    %v260 = vpop.permute.xlu0 %259
    %261 = vrot.lane.b32.xlu0 %v242, 120
    %v262 = vpop.permute.xlu0 %261
    %263 = vrot.lane.b32.xlu0 %v243, 120
    %v264 = vpop.permute.xlu0 %263
    %265 = vrot.lane.b32.xlu0 %v244, 120
    %v266 = vpop.permute.xlu0 %265
    %267 = vrot.lane.b32.xlu0 %v245, 120
    %v268 = vpop.permute.xlu0 %267
    %269 = vrot.lane.b32.xlu0 %v246, 120
    %v270 = vpop.permute.xlu0 %269
    %271 = vrot.lane.b32.xlu0 %v239, 112
    %v272 = vpop.permute.xlu0 %271
    %273 = vrot.lane.b32.xlu0 %v240, 112
    %v274 = vpop.permute.xlu0 %273
    %275 = vrot.lane.b32.xlu0 %v241, 112
    %v276 = vpop.permute.xlu0 %275
    %277 = vrot.lane.b32.xlu0 %v242, 112
    %v278 = vpop.permute.xlu0 %277
    %279 = vrot.lane.b32.xlu0 %v243, 112
    %v280 = vpop.permute.xlu0 %279
    %281 = vrot.lane.b32.xlu0 %v244, 112
    %v282 = vpop.permute.xlu0 %281
    %283 = vrot.lane.b32.xlu0 %v245, 112
    %v284 = vpop.permute.xlu0 %283
    %285 = vrot.lane.b32.xlu0 %v246, 112
    %v286 = vpop.permute.xlu0 %285
    %287 = vrot.lane.b32.xlu0 %v239, 104
    %v288 = vpop.permute.xlu0 %287
    %289 = vrot.lane.b32.xlu0 %v240, 104
    %v290 = vpop.permute.xlu0 %289
    %291 = vrot.lane.b32.xlu0 %v241, 104
    %v292 = vpop.permute.xlu0 %291
    %293 = vrot.lane.b32.xlu0 %v242, 104
    %v294 = vpop.permute.xlu0 %293
    %295 = vrot.lane.b32.xlu0 %v243, 104
    %v296 = vpop.permute.xlu0 %295
    %297 = vrot.lane.b32.xlu0 %v244, 104
    %v298 = vpop.permute.xlu0 %297
    %299 = vrot.lane.b32.xlu0 %v245, 104
    %v300 = vpop.permute.xlu0 %299
    %301 = vrot.lane.b32.xlu0 %v246, 104
    %v302 = vpop.permute.xlu0 %301
    %303 = vrot.lane.b32.xlu0 %v239, 96
    %v304 = vpop.permute.xlu0 %303
    %vm305 = vcmask 64512
    %v307 = vsel %vm305, %v239, 0
    %v310 = vsel %vm305, %v304, 0
    %312 = vmatprep.subr.bf16.mxu0 0
    %313 = vmatpush1.bf16.xpose.msra.mxu0 %v310
    %314 = vmatprep.subr.bf16.mxu0 0
    %315 = vmatpush1.bf16.xpose.msra.mxu0 0
    %316 = vmatprep.subr.bf16.mxu0 0
    %317 = vmatpush1.bf16.xpose.msra.mxu0 0
    %318 = vmatprep.subr.bf16.mxu0 0
    %319 = vmatpush1.bf16.xpose.msra.mxu0 0
    %320 = vmatprep.subr.bf16.mxu0 0
    %321 = vmatpush1.bf16.xpose.msra.mxu0 0
    %322 = vmatprep.subr.bf16.mxu0 0
    %323 = vmatpush1.bf16.xpose.msra.mxu0 0
    %324 = vmatprep.subr.bf16.mxu0 0
    %325 = vmatpush1.bf16.xpose.msra.mxu0 0
    %326 = vmatprep.subr.bf16.mxu0 0
    %327 = vmatpush1.bf16.xpose.msra.mxu0 0
    %328 = vmatprep.subr.bf16.mxu0 0
    %329 = vmatpush1.bf16.xpose.msra.mxu0 0
    %330 = vmatprep.subr.bf16.mxu0 0
    %331 = vmatpush1.bf16.xpose.msra.mxu0 0
    %332 = vmatprep.subr.bf16.mxu0 0
    %333 = vmatpush1.bf16.xpose.msra.mxu0 0
    %334 = vmatprep.subr.bf16.mxu0 0
    %335 = vmatpush1.bf16.xpose.msra.mxu0 0
    %336 = vmatprep.subr.bf16.mxu0 0
    %337 = vmatpush1.bf16.xpose.msra.mxu0 0
    %338 = vmatprep.subr.bf16.mxu0 0
    %339 = vmatpush1.bf16.xpose.msra.mxu0 0
    %340 = vmatprep.subr.bf16.mxu0 0
    %341 = vmatpush1.bf16.xpose.msra.mxu0 0
    %342 = vmatprep.subr.bf16.mxu0 0
    %343 = vmatpush1.bf16.xpose.msra.mxu0 0
    %344 = vmatprep.mubr.bf16.mxu0 0
    %345 = vmatmul.mubr.bf16.gmra.mrb[0].mxu0 %v307
    %v346 = vpop.f32.mrb[0].mxu0
    %v347 = vadd.f32 0.0, %v346
    %v348 = vpop.f32.mrb[0].mxu0
    %v349 = vpop.f32.mrb[0].mxu0
    %v350 = vadd.f32 0.0, %v349
    %v351 = vpop.f32.mrb[0].mxu0
    %352 = vdwg.mxu0
    %353 = vrot.lane.b32.xlu0 %v240, 96
    %v354 = vpop.permute.xlu0 %353
    %v356 = vsel %vm305, %v240, 0
    %v359 = vsel %vm305, %v354, 0
    %361 = vmatprep.subr.bf16.mxu0 0
    %362 = vmatpush1.bf16.xpose.msra.mxu0 %v359
    %363 = vmatprep.subr.bf16.mxu0 0
    %364 = vmatpush1.bf16.xpose.msra.mxu0 0
    %365 = vmatprep.subr.bf16.mxu0 0
    %366 = vmatpush1.bf16.xpose.msra.mxu0 0
    %367 = vmatprep.subr.bf16.mxu0 0
    %368 = vmatpush1.bf16.xpose.msra.mxu0 0
    %369 = vmatprep.subr.bf16.mxu0 0
    %370 = vmatpush1.bf16.xpose.msra.mxu0 0
    %371 = vmatprep.subr.bf16.mxu0 0
    %372 = vmatpush1.bf16.xpose.msra.mxu0 0
    %373 = vmatprep.subr.bf16.mxu0 0
    %374 = vmatpush1.bf16.xpose.msra.mxu0 0
    %375 = vmatprep.subr.bf16.mxu0 0
    %376 = vmatpush1.bf16.xpose.msra.mxu0 0
    %377 = vmatprep.subr.bf16.mxu0 0
    %378 = vmatpush1.bf16.xpose.msra.mxu0 0
    %379 = vmatprep.subr.bf16.mxu0 0
    %380 = vmatpush1.bf16.xpose.msra.mxu0 0
    %381 = vmatprep.subr.bf16.mxu0 0
    %382 = vmatpush1.bf16.xpose.msra.mxu0 0
    %383 = vmatprep.subr.bf16.mxu0 0
    %384 = vmatpush1.bf16.xpose.msra.mxu0 0
    %385 = vmatprep.subr.bf16.mxu0 0
    %386 = vmatpush1.bf16.xpose.msra.mxu0 0
    %387 = vmatprep.subr.bf16.mxu0 0
    %388 = vmatpush1.bf16.xpose.msra.mxu0 0
    %389 = vmatprep.subr.bf16.mxu0 0
    %390 = vmatpush1.bf16.xpose.msra.mxu0 0
    %391 = vmatprep.subr.bf16.mxu0 0
    %392 = vmatpush1.bf16.xpose.msra.mxu0 0
    %393 = vmatprep.mubr.bf16.mxu0 0
    %394 = vmatmul.mubr.bf16.gmra.mrb[0].mxu0 %v356
    %v395 = vpop.f32.mrb[0].mxu0
    %v396 = vadd.f32 0.0, %v395
    %v397 = vpop.f32.mrb[0].mxu0
    %v398 = vpop.f32.mrb[0].mxu0
    %v399 = vadd.f32 0.0, %v398
    %v400 = vpop.f32.mrb[0].mxu0
    %401 = vdwg.mxu0
    %402 = vrot.lane.b32.xlu0 %v241, 96
    %v403 = vpop.permute.xlu0 %402
    %v405 = vsel %vm305, %v241, 0
    %v408 = vsel %vm305, %v403, 0
    %410 = vmatprep.subr.bf16.mxu0 0
    %411 = vmatpush1.bf16.xpose.msra.mxu0 %v408
    %412 = vmatprep.subr.bf16.mxu0 0
    %413 = vmatpush1.bf16.xpose.msra.mxu0 0
    %414 = vmatprep.subr.bf16.mxu0 0
    %415 = vmatpush1.bf16.xpose.msra.mxu0 0
    %416 = vmatprep.subr.bf16.mxu0 0
    %417 = vmatpush1.bf16.xpose.msra.mxu0 0
    %418 = vmatprep.subr.bf16.mxu0 0
    %419 = vmatpush1.bf16.xpose.msra.mxu0 0
    %420 = vmatprep.subr.bf16.mxu0 0
    %421 = vmatpush1.bf16.xpose.msra.mxu0 0
    %422 = vmatprep.subr.bf16.mxu0 0
    %423 = vmatpush1.bf16.xpose.msra.mxu0 0
    %424 = vmatprep.subr.bf16.mxu0 0
    %425 = vmatpush1.bf16.xpose.msra.mxu0 0
    %426 = vmatprep.subr.bf16.mxu0 0
    %427 = vmatpush1.bf16.xpose.msra.mxu0 0
    %428 = vmatprep.subr.bf16.mxu0 0
    %429 = vmatpush1.bf16.xpose.msra.mxu0 0
    %430 = vmatprep.subr.bf16.mxu0 0
    %431 = vmatpush1.bf16.xpose.msra.mxu0 0
    %432 = vmatprep.subr.bf16.mxu0 0
    %433 = vmatpush1.bf16.xpose.msra.mxu0 0
    %434 = vmatprep.subr.bf16.mxu0 0
    %435 = vmatpush1.bf16.xpose.msra.mxu0 0
    %436 = vmatprep.subr.bf16.mxu0 0
    %437 = vmatpush1.bf16.xpose.msra.mxu0 0
    %438 = vmatprep.subr.bf16.mxu0 0
    %439 = vmatpush1.bf16.xpose.msra.mxu0 0
    %440 = vmatprep.subr.bf16.mxu0 0
    %441 = vmatpush1.bf16.xpose.msra.mxu0 0
    %442 = vmatprep.mubr.bf16.mxu0 0
    %443 = vmatmul.mubr.bf16.gmra.mrb[0].mxu0 %v405
    %v444 = vpop.f32.mrb[0].mxu0
    %v445 = vadd.f32 0.0, %v444
    %v446 = vpop.f32.mrb[0].mxu0
    %v447 = vpop.f32.mrb[0].mxu0
    %v448 = vadd.f32 0.0, %v447
    %v449 = vpop.f32.mrb[0].mxu0
    %450 = vdwg.mxu0
    %451 = vrot.lane.b32.xlu0 %v242, 96
    %v452 = vpop.permute.xlu0 %451
    %v454 = vsel %vm305, %v242, 0
    %v457 = vsel %vm305, %v452, 0
    %459 = vmatprep.subr.bf16.mxu0 0
    %460 = vmatpush1.bf16.xpose.msra.mxu0 %v457
    %461 = vmatprep.subr.bf16.mxu0 0
    %462 = vmatpush1.bf16.xpose.msra.mxu0 0
    %463 = vmatprep.subr.bf16.mxu0 0
    %464 = vmatpush1.bf16.xpose.msra.mxu0 0
    %465 = vmatprep.subr.bf16.mxu0 0
    %466 = vmatpush1.bf16.xpose.msra.mxu0 0
    %467 = vmatprep.subr.bf16.mxu0 0
    %468 = vmatpush1.bf16.xpose.msra.mxu0 0
    %469 = vmatprep.subr.bf16.mxu0 0
    %470 = vmatpush1.bf16.xpose.msra.mxu0 0
    %471 = vmatprep.subr.bf16.mxu0 0
    %472 = vmatpush1.bf16.xpose.msra.mxu0 0
    %473 = vmatprep.subr.bf16.mxu0 0
    %474 = vmatpush1.bf16.xpose.msra.mxu0 0
    %475 = vmatprep.subr.bf16.mxu0 0
    %476 = vmatpush1.bf16.xpose.msra.mxu0 0
    %477 = vmatprep.subr.bf16.mxu0 0
    %478 = vmatpush1.bf16.xpose.msra.mxu0 0
    %479 = vmatprep.subr.bf16.mxu0 0
    %480 = vmatpush1.bf16.xpose.msra.mxu0 0
    %481 = vmatprep.subr.bf16.mxu0 0
    %482 = vmatpush1.bf16.xpose.msra.mxu0 0
    %483 = vmatprep.subr.bf16.mxu0 0
    %484 = vmatpush1.bf16.xpose.msra.mxu0 0
    %485 = vmatprep.subr.bf16.mxu0 0
    %486 = vmatpush1.bf16.xpose.msra.mxu0 0
    %487 = vmatprep.subr.bf16.mxu0 0
    %488 = vmatpush1.bf16.xpose.msra.mxu0 0
    %489 = vmatprep.subr.bf16.mxu0 0
    %490 = vmatpush1.bf16.xpose.msra.mxu0 0
    %491 = vmatprep.mubr.bf16.mxu0 0
    %492 = vmatmul.mubr.bf16.gmra.mrb[0].mxu0 %v454
    %v493 = vpop.f32.mrb[0].mxu0
    %v494 = vadd.f32 0.0, %v493
    %v495 = vpop.f32.mrb[0].mxu0
    %v496 = vpop.f32.mrb[0].mxu0
    %v497 = vadd.f32 0.0, %v496
    %v498 = vpop.f32.mrb[0].mxu0
    %499 = vdwg.mxu0
    %500 = vrot.lane.b32.xlu0 %v243, 96
    %v501 = vpop.permute.xlu0 %500
    %v503 = vsel %vm305, %v243, 0
    %v506 = vsel %vm305, %v501, 0
    %508 = vmatprep.subr.bf16.mxu0 0
    %509 = vmatpush1.bf16.xpose.msra.mxu0 %v506
    %510 = vmatprep.subr.bf16.mxu0 0
    %511 = vmatpush1.bf16.xpose.msra.mxu0 0
    %512 = vmatprep.subr.bf16.mxu0 0
    %513 = vmatpush1.bf16.xpose.msra.mxu0 0
    %514 = vmatprep.subr.bf16.mxu0 0
    %515 = vmatpush1.bf16.xpose.msra.mxu0 0
    %516 = vmatprep.subr.bf16.mxu0 0
    %517 = vmatpush1.bf16.xpose.msra.mxu0 0
    %518 = vmatprep.subr.bf16.mxu0 0
    %519 = vmatpush1.bf16.xpose.msra.mxu0 0
    %520 = vmatprep.subr.bf16.mxu0 0
    %521 = vmatpush1.bf16.xpose.msra.mxu0 0
    %522 = vmatprep.subr.bf16.mxu0 0
    %523 = vmatpush1.bf16.xpose.msra.mxu0 0
    %524 = vmatprep.subr.bf16.mxu0 0
    %525 = vmatpush1.bf16.xpose.msra.mxu0 0
    %526 = vmatprep.subr.bf16.mxu0 0
    %527 = vmatpush1.bf16.xpose.msra.mxu0 0
    %528 = vmatprep.subr.bf16.mxu0 0
    %529 = vmatpush1.bf16.xpose.msra.mxu0 0
    %530 = vmatprep.subr.bf16.mxu0 0
    %531 = vmatpush1.bf16.xpose.msra.mxu0 0
    %532 = vmatprep.subr.bf16.mxu0 0
    %533 = vmatpush1.bf16.xpose.msra.mxu0 0
    %534 = vmatprep.subr.bf16.mxu0 0
    %535 = vmatpush1.bf16.xpose.msra.mxu0 0
    %536 = vmatprep.subr.bf16.mxu0 0
    %537 = vmatpush1.bf16.xpose.msra.mxu0 0
    %538 = vmatprep.subr.bf16.mxu0 0
    %539 = vmatpush1.bf16.xpose.msra.mxu0 0
    %540 = vmatprep.mubr.bf16.mxu0 0
    %541 = vmatmul.mubr.bf16.gmra.mrb[0].mxu0 %v503
    %v542 = vpop.f32.mrb[0].mxu0
    %v543 = vadd.f32 0.0, %v542
    %v544 = vpop.f32.mrb[0].mxu0
    %v545 = vpop.f32.mrb[0].mxu0
    %v546 = vadd.f32 0.0, %v545
    %v547 = vpop.f32.mrb[0].mxu0
    %548 = vdwg.mxu0
    %549 = vrot.lane.b32.xlu0 %v244, 96
    %v550 = vpop.permute.xlu0 %549
    %v552 = vsel %vm305, %v244, 0
    %v555 = vsel %vm305, %v550, 0
    %557 = vmatprep.subr.bf16.mxu0 0
    %558 = vmatpush1.bf16.xpose.msra.mxu0 %v555
    %559 = vmatprep.subr.bf16.mxu0 0
    %560 = vmatpush1.bf16.xpose.msra.mxu0 0
    %561 = vmatprep.subr.bf16.mxu0 0
    %562 = vmatpush1.bf16.xpose.msra.mxu0 0
    %563 = vmatprep.subr.bf16.mxu0 0
    %564 = vmatpush1.bf16.xpose.msra.mxu0 0
    %565 = vmatprep.subr.bf16.mxu0 0
    %566 = vmatpush1.bf16.xpose.msra.mxu0 0
    %567 = vmatprep.subr.bf16.mxu0 0
    %568 = vmatpush1.bf16.xpose.msra.mxu0 0
    %569 = vmatprep.subr.bf16.mxu0 0
    %570 = vmatpush1.bf16.xpose.msra.mxu0 0
    %571 = vmatprep.subr.bf16.mxu0 0
    %572 = vmatpush1.bf16.xpose.msra.mxu0 0
    %573 = vmatprep.subr.bf16.mxu0 0
    %574 = vmatpush1.bf16.xpose.msra.mxu0 0
    %575 = vmatprep.subr.bf16.mxu0 0
    %576 = vmatpush1.bf16.xpose.msra.mxu0 0
    %577 = vmatprep.subr.bf16.mxu0 0
    %578 = vmatpush1.bf16.xpose.msra.mxu0 0
    %579 = vmatprep.subr.bf16.mxu0 0
    %580 = vmatpush1.bf16.xpose.msra.mxu0 0
    %581 = vmatprep.subr.bf16.mxu0 0
    %582 = vmatpush1.bf16.xpose.msra.mxu0 0
    %583 = vmatprep.subr.bf16.mxu0 0
    %584 = vmatpush1.bf16.xpose.msra.mxu0 0
    %585 = vmatprep.subr.bf16.mxu0 0
    %586 = vmatpush1.bf16.xpose.msra.mxu0 0
    %587 = vmatprep.subr.bf16.mxu0 0
    %588 = vmatpush1.bf16.xpose.msra.mxu0 0
    %589 = vmatprep.mubr.bf16.mxu0 0
    %590 = vmatmul.mubr.bf16.gmra.mrb[0].mxu0 %v552
    %v591 = vpop.f32.mrb[0].mxu0
    %v592 = vadd.f32 0.0, %v591
    %v593 = vpop.f32.mrb[0].mxu0
    %v594 = vpop.f32.mrb[0].mxu0
    %v595 = vadd.f32 0.0, %v594
    %v596 = vpop.f32.mrb[0].mxu0
    %597 = vdwg.mxu0
    %598 = vrot.lane.b32.xlu0 %v245, 96
    %v599 = vpop.permute.xlu0 %598
    %v601 = vsel %vm305, %v245, 0
    %v604 = vsel %vm305, %v599, 0
    %606 = vmatprep.subr.bf16.mxu0 0
    %607 = vmatpush1.bf16.xpose.msra.mxu0 %v604
    %608 = vmatprep.subr.bf16.mxu0 0
    %609 = vmatpush1.bf16.xpose.msra.mxu0 0
    %610 = vmatprep.subr.bf16.mxu0 0
    %611 = vmatpush1.bf16.xpose.msra.mxu0 0
    %612 = vmatprep.subr.bf16.mxu0 0
    %613 = vmatpush1.bf16.xpose.msra.mxu0 0
    %614 = vmatprep.subr.bf16.mxu0 0
    %615 = vmatpush1.bf16.xpose.msra.mxu0 0
    %616 = vmatprep.subr.bf16.mxu0 0
    %617 = vmatpush1.bf16.xpose.msra.mxu0 0
    %618 = vmatprep.subr.bf16.mxu0 0
    %619 = vmatpush1.bf16.xpose.msra.mxu0 0
    %620 = vmatprep.subr.bf16.mxu0 0
    %621 = vmatpush1.bf16.xpose.msra.mxu0 0
    %622 = vmatprep.subr.bf16.mxu0 0
    %623 = vmatpush1.bf16.xpose.msra.mxu0 0
    %624 = vmatprep.subr.bf16.mxu0 0
    %625 = vmatpush1.bf16.xpose.msra.mxu0 0
    %626 = vmatprep.subr.bf16.mxu0 0
    %627 = vmatpush1.bf16.xpose.msra.mxu0 0
    %628 = vmatprep.subr.bf16.mxu0 0
    %629 = vmatpush1.bf16.xpose.msra.mxu0 0
    %630 = vmatprep.subr.bf16.mxu0 0
    %631 = vmatpush1.bf16.xpose.msra.mxu0 0
    %632 = vmatprep.subr.bf16.mxu0 0
    %633 = vmatpush1.bf16.xpose.msra.mxu0 0
    %634 = vmatprep.subr.bf16.mxu0 0
    %635 = vmatpush1.bf16.xpose.msra.mxu0 0
    %636 = vmatprep.subr.bf16.mxu0 0
    %637 = vmatpush1.bf16.xpose.msra.mxu0 0
    %638 = vmatprep.mubr.bf16.mxu0 0
    %639 = vmatmul.mubr.bf16.gmra.mrb[0].mxu0 %v601
    %v640 = vpop.f32.mrb[0].mxu0
    %v641 = vadd.f32 0.0, %v640
    %v642 = vpop.f32.mrb[0].mxu0
    %v643 = vpop.f32.mrb[0].mxu0
    %v644 = vadd.f32 0.0, %v643
    %v645 = vpop.f32.mrb[0].mxu0
    %646 = vdwg.mxu0
    %647 = vrot.lane.b32.xlu0 %v246, 96
    %v648 = vpop.permute.xlu0 %647
    %v650 = vsel %vm305, %v246, 0
    %v653 = vsel %vm305, %v648, 0
    %655 = vmatprep.subr.bf16.mxu0 0
    %656 = vmatpush1.bf16.xpose.msra.mxu0 %v653
    %657 = vmatprep.subr.bf16.mxu0 0
    %658 = vmatpush1.bf16.xpose.msra.mxu0 0
    %659 = vmatprep.subr.bf16.mxu0 0
    %660 = vmatpush1.bf16.xpose.msra.mxu0 0
    %661 = vmatprep.subr.bf16.mxu0 0
    %662 = vmatpush1.bf16.xpose.msra.mxu0 0
    %663 = vmatprep.subr.bf16.mxu0 0
    %664 = vmatpush1.bf16.xpose.msra.mxu0 0
    %665 = vmatprep.subr.bf16.mxu0 0
    %666 = vmatpush1.bf16.xpose.msra.mxu0 0
    %667 = vmatprep.subr.bf16.mxu0 0
    %668 = vmatpush1.bf16.xpose.msra.mxu0 0
    %669 = vmatprep.subr.bf16.mxu0 0
    %670 = vmatpush1.bf16.xpose.msra.mxu0 0
    %671 = vmatprep.subr.bf16.mxu0 0
    %672 = vmatpush1.bf16.xpose.msra.mxu0 0
    %673 = vmatprep.subr.bf16.mxu0 0
    %674 = vmatpush1.bf16.xpose.msra.mxu0 0
    %675 = vmatprep.subr.bf16.mxu0 0
    %676 = vmatpush1.bf16.xpose.msra.mxu0 0
    %677 = vmatprep.subr.bf16.mxu0 0
    %678 = vmatpush1.bf16.xpose.msra.mxu0 0
    %679 = vmatprep.subr.bf16.mxu0 0
    %680 = vmatpush1.bf16.xpose.msra.mxu0 0
    %681 = vmatprep.subr.bf16.mxu0 0
    %682 = vmatpush1.bf16.xpose.msra.mxu0 0
    %683 = vmatprep.subr.bf16.mxu0 0
    %684 = vmatpush1.bf16.xpose.msra.mxu0 0
    %685 = vmatprep.subr.bf16.mxu0 0
    %686 = vmatpush1.bf16.xpose.msra.mxu0 0
    %687 = vmatprep.mubr.bf16.mxu0 0
    %688 = vmatmul.mubr.bf16.gmra.mrb[0].mxu0 %v650
    %v689 = vpop.f32.mrb[0].mxu0
    %v690 = vadd.f32 0.0, %v689
    %v691 = vpop.f32.mrb[0].mxu0
    %v692 = vpop.f32.mrb[0].mxu0
    %v693 = vadd.f32 0.0, %v692
    %v694 = vpop.f32.mrb[0].mxu0
    %695 = vdwg.mxu0
    %696 = vrot.lane.b32.xlu0 %v256, 96
    %v697 = vpop.permute.xlu0 %696
    %v699 = vsel %vm305, %v256, 0
    %v702 = vsel %vm305, %v697, 0
    %704 = vmatprep.subr.bf16.mxu0 0
    %705 = vmatpush1.bf16.xpose.msra.mxu0 %v702
    %706 = vmatprep.subr.bf16.mxu0 0
    %707 = vmatpush1.bf16.xpose.msra.mxu0 0
    %708 = vmatprep.subr.bf16.mxu0 0
    %709 = vmatpush1.bf16.xpose.msra.mxu0 0
    %710 = vmatprep.subr.bf16.mxu0 0
    %711 = vmatpush1.bf16.xpose.msra.mxu0 0
    %712 = vmatprep.subr.bf16.mxu0 0
    %713 = vmatpush1.bf16.xpose.msra.mxu0 0
    %714 = vmatprep.subr.bf16.mxu0 0
    %715 = vmatpush1.bf16.xpose.msra.mxu0 0
    %716 = vmatprep.subr.bf16.mxu0 0
    %717 = vmatpush1.bf16.xpose.msra.mxu0 0
    %718 = vmatprep.subr.bf16.mxu0 0
    %719 = vmatpush1.bf16.xpose.msra.mxu0 0
    %720 = vmatprep.subr.bf16.mxu0 0
    %721 = vmatpush1.bf16.xpose.msra.mxu0 0
    %722 = vmatprep.subr.bf16.mxu0 0
    %723 = vmatpush1.bf16.xpose.msra.mxu0 0
    %724 = vmatprep.subr.bf16.mxu0 0
    %725 = vmatpush1.bf16.xpose.msra.mxu0 0
    %726 = vmatprep.subr.bf16.mxu0 0
    %727 = vmatpush1.bf16.xpose.msra.mxu0 0
    %728 = vmatprep.subr.bf16.mxu0 0
    %729 = vmatpush1.bf16.xpose.msra.mxu0 0
    %730 = vmatprep.subr.bf16.mxu0 0
    %731 = vmatpush1.bf16.xpose.msra.mxu0 0
    %732 = vmatprep.subr.bf16.mxu0 0
    %733 = vmatpush1.bf16.xpose.msra.mxu0 0
    %734 = vmatprep.subr.bf16.mxu0 0
    %735 = vmatpush1.bf16.xpose.msra.mxu0 0
    %736 = vmatprep.mubr.bf16.mxu0 0
    %737 = vmatmul.mubr.bf16.gmra.mrb[0].mxu0 %v699
    %v738 = vpop.f32.mrb[0].mxu0
    %v739 = vadd.f32 0.0, %v738
    %v740 = vpop.f32.mrb[0].mxu0
    %v741 = vpop.f32.mrb[0].mxu0
    %v742 = vadd.f32 0.0, %v741
    %v743 = vpop.f32.mrb[0].mxu0
    %744 = vdwg.mxu0
    %745 = vrot.lane.b32.xlu0 %v258, 96
    %v746 = vpop.permute.xlu0 %745
    %v748 = vsel %vm305, %v258, 0
    %v751 = vsel %vm305, %v746, 0
    %753 = vmatprep.subr.bf16.mxu0 0
    %754 = vmatpush1.bf16.xpose.msra.mxu0 %v751
    %755 = vmatprep.subr.bf16.mxu0 0
    %756 = vmatpush1.bf16.xpose.msra.mxu0 0
    %757 = vmatprep.subr.bf16.mxu0 0
    %758 = vmatpush1.bf16.xpose.msra.mxu0 0
    %759 = vmatprep.subr.bf16.mxu0 0
    %760 = vmatpush1.bf16.xpose.msra.mxu0 0
    %761 = vmatprep.subr.bf16.mxu0 0
    %762 = vmatpush1.bf16.xpose.msra.mxu0 0
    %763 = vmatprep.subr.bf16.mxu0 0
    %764 = vmatpush1.bf16.xpose.msra.mxu0 0
    %765 = vmatprep.subr.bf16.mxu0 0
    %766 = vmatpush1.bf16.xpose.msra.mxu0 0
    %767 = vmatprep.subr.bf16.mxu0 0
    %768 = vmatpush1.bf16.xpose.msra.mxu0 0
    %769 = vmatprep.subr.bf16.mxu0 0
    %770 = vmatpush1.bf16.xpose.msra.mxu0 0
    %771 = vmatprep.subr.bf16.mxu0 0
    %772 = vmatpush1.bf16.xpose.msra.mxu0 0
    %773 = vmatprep.subr.bf16.mxu0 0
    %774 = vmatpush1.bf16.xpose.msra.mxu0 0
    %775 = vmatprep.subr.bf16.mxu0 0
    %776 = vmatpush1.bf16.xpose.msra.mxu0 0
    %777 = vmatprep.subr.bf16.mxu0 0
    %778 = vmatpush1.bf16.xpose.msra.mxu0 0
    %779 = vmatprep.subr.bf16.mxu0 0
    %780 = vmatpush1.bf16.xpose.msra.mxu0 0
    %781 = vmatprep.subr.bf16.mxu0 0
    %782 = vmatpush1.bf16.xpose.msra.mxu0 0
    %783 = vmatprep.subr.bf16.mxu0 0
    %784 = vmatpush1.bf16.xpose.msra.mxu0 0
    %785 = vmatprep.mubr.bf16.mxu0 0
    %786 = vmatmul.mubr.bf16.gmra.mrb[0].mxu0 %v748
    %v787 = vpop.f32.mrb[0].mxu0
    %v788 = vadd.f32 0.0, %v787
    %v789 = vpop.f32.mrb[0].mxu0
    %v790 = vpop.f32.mrb[0].mxu0
    %v791 = vadd.f32 0.0, %v790
    %v792 = vpop.f32.mrb[0].mxu0
    %793 = vdwg.mxu0
    %794 = vrot.lane.b32.xlu0 %v260, 96
    %v795 = vpop.permute.xlu0 %794
    %v797 = vsel %vm305, %v260, 0
    %v800 = vsel %vm305, %v795, 0
    %802 = vmatprep.subr.bf16.mxu0 0
    %803 = vmatpush1.bf16.xpose.msra.mxu0 %v800
    %804 = vmatprep.subr.bf16.mxu0 0
    %805 = vmatpush1.bf16.xpose.msra.mxu0 0
    %806 = vmatprep.subr.bf16.mxu0 0
    %807 = vmatpush1.bf16.xpose.msra.mxu0 0
    %808 = vmatprep.subr.bf16.mxu0 0
    %809 = vmatpush1.bf16.xpose.msra.mxu0 0
    %810 = vmatprep.subr.bf16.mxu0 0
    %811 = vmatpush1.bf16.xpose.msra.mxu0 0
    %812 = vmatprep.subr.bf16.mxu0 0
    %813 = vmatpush1.bf16.xpose.msra.mxu0 0
    %814 = vmatprep.subr.bf16.mxu0 0
    %815 = vmatpush1.bf16.xpose.msra.mxu0 0
    %816 = vmatprep.subr.bf16.mxu0 0
    %817 = vmatpush1.bf16.xpose.msra.mxu0 0
    %818 = vmatprep.subr.bf16.mxu0 0
    %819 = vmatpush1.bf16.xpose.msra.mxu0 0
    %820 = vmatprep.subr.bf16.mxu0 0
    %821 = vmatpush1.bf16.xpose.msra.mxu0 0
    %822 = vmatprep.subr.bf16.mxu0 0
    %823 = vmatpush1.bf16.xpose.msra.mxu0 0
    %824 = vmatprep.subr.bf16.mxu0 0
    %825 = vmatpush1.bf16.xpose.msra.mxu0 0
    %826 = vmatprep.subr.bf16.mxu0 0
    %827 = vmatpush1.bf16.xpose.msra.mxu0 0
    %828 = vmatprep.subr.bf16.mxu0 0
    %829 = vmatpush1.bf16.xpose.msra.mxu0 0
    %830 = vmatprep.subr.bf16.mxu0 0
    %831 = vmatpush1.bf16.xpose.msra.mxu0 0
    %832 = vmatprep.subr.bf16.mxu0 0
    %833 = vmatpush1.bf16.xpose.msra.mxu0 0
    %834 = vmatprep.mubr.bf16.mxu0 0
    %835 = vmatmul.mubr.bf16.gmra.mrb[0].mxu0 %v797
    %v836 = vpop.f32.mrb[0].mxu0
    %v837 = vadd.f32 0.0, %v836
    %v838 = vpop.f32.mrb[0].mxu0
    %v839 = vpop.f32.mrb[0].mxu0
    %v840 = vadd.f32 0.0, %v839
    %v841 = vpop.f32.mrb[0].mxu0
    %842 = vdwg.mxu0
    %843 = vrot.lane.b32.xlu0 %v262, 96
    %v844 = vpop.permute.xlu0 %843
    %v846 = vsel %vm305, %v262, 0
    %v849 = vsel %vm305, %v844, 0
    %851 = vmatprep.subr.bf16.mxu0 0
    %852 = vmatpush1.bf16.xpose.msra.mxu0 %v849
    %853 = vmatprep.subr.bf16.mxu0 0
    %854 = vmatpush1.bf16.xpose.msra.mxu0 0
    %855 = vmatprep.subr.bf16.mxu0 0
    %856 = vmatpush1.bf16.xpose.msra.mxu0 0
    %857 = vmatprep.subr.bf16.mxu0 0
    %858 = vmatpush1.bf16.xpose.msra.mxu0 0
    %859 = vmatprep.subr.bf16.mxu0 0
    %860 = vmatpush1.bf16.xpose.msra.mxu0 0
    %861 = vmatprep.subr.bf16.mxu0 0
    %862 = vmatpush1.bf16.xpose.msra.mxu0 0
    %863 = vmatprep.subr.bf16.mxu0 0
    %864 = vmatpush1.bf16.xpose.msra.mxu0 0
    %865 = vmatprep.subr.bf16.mxu0 0
    %866 = vmatpush1.bf16.xpose.msra.mxu0 0
    %867 = vmatprep.subr.bf16.mxu0 0
    %868 = vmatpush1.bf16.xpose.msra.mxu0 0
    %869 = vmatprep.subr.bf16.mxu0 0
    %870 = vmatpush1.bf16.xpose.msra.mxu0 0
    %871 = vmatprep.subr.bf16.mxu0 0
    %872 = vmatpush1.bf16.xpose.msra.mxu0 0
    %873 = vmatprep.subr.bf16.mxu0 0
    %874 = vmatpush1.bf16.xpose.msra.mxu0 0
    %875 = vmatprep.subr.bf16.mxu0 0
    %876 = vmatpush1.bf16.xpose.msra.mxu0 0
    %877 = vmatprep.subr.bf16.mxu0 0
    %878 = vmatpush1.bf16.xpose.msra.mxu0 0
    %879 = vmatprep.subr.bf16.mxu0 0
    %880 = vmatpush1.bf16.xpose.msra.mxu0 0
    %881 = vmatprep.subr.bf16.mxu0 0
    %882 = vmatpush1.bf16.xpose.msra.mxu0 0
    %883 = vmatprep.mubr.bf16.mxu0 0
    %884 = vmatmul.mubr.bf16.gmra.mrb[0].mxu0 %v846
    %v885 = vpop.f32.mrb[0].mxu0
    %v886 = vadd.f32 0.0, %v885
    %v887 = vpop.f32.mrb[0].mxu0
    %v888 = vpop.f32.mrb[0].mxu0
    %v889 = vadd.f32 0.0, %v888
    %v890 = vpop.f32.mrb[0].mxu0
    %891 = vdwg.mxu0
    %892 = vrot.lane.b32.xlu0 %v264, 96
    %v893 = vpop.permute.xlu0 %892
    %v895 = vsel %vm305, %v264, 0
    %v898 = vsel %vm305, %v893, 0
    %900 = vmatprep.subr.bf16.mxu0 0
    %901 = vmatpush1.bf16.xpose.msra.mxu0 %v898
    %902 = vmatprep.subr.bf16.mxu0 0
    %903 = vmatpush1.bf16.xpose.msra.mxu0 0
    %904 = vmatprep.subr.bf16.mxu0 0
    %905 = vmatpush1.bf16.xpose.msra.mxu0 0
    %906 = vmatprep.subr.bf16.mxu0 0
    %907 = vmatpush1.bf16.xpose.msra.mxu0 0
    %908 = vmatprep.subr.bf16.mxu0 0
    %909 = vmatpush1.bf16.xpose.msra.mxu0 0
    %910 = vmatprep.subr.bf16.mxu0 0
    %911 = vmatpush1.bf16.xpose.msra.mxu0 0
    %912 = vmatprep.subr.bf16.mxu0 0
    %913 = vmatpush1.bf16.xpose.msra.mxu0 0
    %914 = vmatprep.subr.bf16.mxu0 0
    %915 = vmatpush1.bf16.xpose.msra.mxu0 0
    %916 = vmatprep.subr.bf16.mxu0 0
    %917 = vmatpush1.bf16.xpose.msra.mxu0 0
    %918 = vmatprep.subr.bf16.mxu0 0
    %919 = vmatpush1.bf16.xpose.msra.mxu0 0
    %920 = vmatprep.subr.bf16.mxu0 0
    %921 = vmatpush1.bf16.xpose.msra.mxu0 0
    %922 = vmatprep.subr.bf16.mxu0 0
    %923 = vmatpush1.bf16.xpose.msra.mxu0 0
    %924 = vmatprep.subr.bf16.mxu0 0
    %925 = vmatpush1.bf16.xpose.msra.mxu0 0
    %926 = vmatprep.subr.bf16.mxu0 0
    %927 = vmatpush1.bf16.xpose.msra.mxu0 0
    %928 = vmatprep.subr.bf16.mxu0 0
    %929 = vmatpush1.bf16.xpose.msra.mxu0 0
    %930 = vmatprep.subr.bf16.mxu0 0
    %931 = vmatpush1.bf16.xpose.msra.mxu0 0
    %932 = vmatprep.mubr.bf16.mxu0 0
    %933 = vmatmul.mubr.bf16.gmra.mrb[0].mxu0 %v895
    %v934 = vpop.f32.mrb[0].mxu0
    %v935 = vadd.f32 0.0, %v934
    %v936 = vpop.f32.mrb[0].mxu0
    %v937 = vpop.f32.mrb[0].mxu0
    %v938 = vadd.f32 0.0, %v937
    %v939 = vpop.f32.mrb[0].mxu0
    %940 = vdwg.mxu0
    %941 = vrot.lane.b32.xlu0 %v266, 96
    %v942 = vpop.permute.xlu0 %941
    %v944 = vsel %vm305, %v266, 0
    %v947 = vsel %vm305, %v942, 0
    %949 = vmatprep.subr.bf16.mxu0 0
    %950 = vmatpush1.bf16.xpose.msra.mxu0 %v947
    %951 = vmatprep.subr.bf16.mxu0 0
    %952 = vmatpush1.bf16.xpose.msra.mxu0 0
    %953 = vmatprep.subr.bf16.mxu0 0
    %954 = vmatpush1.bf16.xpose.msra.mxu0 0
    %955 = vmatprep.subr.bf16.mxu0 0
    %956 = vmatpush1.bf16.xpose.msra.mxu0 0
    %957 = vmatprep.subr.bf16.mxu0 0
    %958 = vmatpush1.bf16.xpose.msra.mxu0 0
    %959 = vmatprep.subr.bf16.mxu0 0
    %960 = vmatpush1.bf16.xpose.msra.mxu0 0
    %961 = vmatprep.subr.bf16.mxu0 0
    %962 = vmatpush1.bf16.xpose.msra.mxu0 0
    %963 = vmatprep.subr.bf16.mxu0 0
    %964 = vmatpush1.bf16.xpose.msra.mxu0 0
    %965 = vmatprep.subr.bf16.mxu0 0
    %966 = vmatpush1.bf16.xpose.msra.mxu0 0
    %967 = vmatprep.subr.bf16.mxu0 0
    %968 = vmatpush1.bf16.xpose.msra.mxu0 0
    %969 = vmatprep.subr.bf16.mxu0 0
    %970 = vmatpush1.bf16.xpose.msra.mxu0 0
    %971 = vmatprep.subr.bf16.mxu0 0
    %972 = vmatpush1.bf16.xpose.msra.mxu0 0
    %973 = vmatprep.subr.bf16.mxu0 0
    %974 = vmatpush1.bf16.xpose.msra.mxu0 0
    %975 = vmatprep.subr.bf16.mxu0 0
    %976 = vmatpush1.bf16.xpose.msra.mxu0 0
    %977 = vmatprep.subr.bf16.mxu0 0
    %978 = vmatpush1.bf16.xpose.msra.mxu0 0
    %979 = vmatprep.subr.bf16.mxu0 0
    %980 = vmatpush1.bf16.xpose.msra.mxu0 0
    %981 = vmatprep.mubr.bf16.mxu0 0
    %982 = vmatmul.mubr.bf16.gmra.mrb[0].mxu0 %v944
    %v983 = vpop.f32.mrb[0].mxu0
    %v984 = vadd.f32 0.0, %v983
    %v985 = vpop.f32.mrb[0].mxu0
    %v986 = vpop.f32.mrb[0].mxu0
    %v987 = vadd.f32 0.0, %v986
    %v988 = vpop.f32.mrb[0].mxu0
    %989 = vdwg.mxu0
    %990 = vrot.lane.b32.xlu0 %v268, 96
    %v991 = vpop.permute.xlu0 %990
    %v993 = vsel %vm305, %v268, 0
    %v996 = vsel %vm305, %v991, 0
    %998 = vmatprep.subr.bf16.mxu0 0
    %999 = vmatpush1.bf16.xpose.msra.mxu0 %v996
    %1000 = vmatprep.subr.bf16.mxu0 0
    %1001 = vmatpush1.bf16.xpose.msra.mxu0 0
    %1002 = vmatprep.subr.bf16.mxu0 0
    %1003 = vmatpush1.bf16.xpose.msra.mxu0 0
    %1004 = vmatprep.subr.bf16.mxu0 0
    %1005 = vmatpush1.bf16.xpose.msra.mxu0 0
    %1006 = vmatprep.subr.bf16.mxu0 0
    %1007 = vmatpush1.bf16.xpose.msra.mxu0 0
    %1008 = vmatprep.subr.bf16.mxu0 0
    %1009 = vmatpush1.bf16.xpose.msra.mxu0 0
    %1010 = vmatprep.subr.bf16.mxu0 0
    %1011 = vmatpush1.bf16.xpose.msra.mxu0 0
    %1012 = vmatprep.subr.bf16.mxu0 0
    %1013 = vmatpush1.bf16.xpose.msra.mxu0 0
    %1014 = vmatprep.subr.bf16.mxu0 0
    %1015 = vmatpush1.bf16.xpose.msra.mxu0 0
    %1016 = vmatprep.subr.bf16.mxu0 0
    %1017 = vmatpush1.bf16.xpose.msra.mxu0 0
    %1018 = vmatprep.subr.bf16.mxu0 0
    %1019 = vmatpush1.bf16.xpose.msra.mxu0 0
    %1020 = vmatprep.subr.bf16.mxu0 0
    %1021 = vmatpush1.bf16.xpose.msra.mxu0 0
    %1022 = vmatprep.subr.bf16.mxu0 0
    %1023 = vmatpush1.bf16.xpose.msra.mxu0 0
    %1024 = vmatprep.subr.bf16.mxu0 0
    %1025 = vmatpush1.bf16.xpose.msra.mxu0 0
    %1026 = vmatprep.subr.bf16.mxu0 0
    %1027 = vmatpush1.bf16.xpose.msra.mxu0 0
    %1028 = vmatprep.subr.bf16.mxu0 0
    %1029 = vmatpush1.bf16.xpose.msra.mxu0 0
    %1030 = vmatprep.mubr.bf16.mxu0 0
    %1031 = vmatmul.mubr.bf16.gmra.mrb[0].mxu0 %v993
    %v1032 = vpop.f32.mrb[0].mxu0
    %v1033 = vadd.f32 0.0, %v1032
    %v1034 = vpop.f32.mrb[0].mxu0
    %v1035 = vpop.f32.mrb[0].mxu0
    %v1036 = vadd.f32 0.0, %v1035
    %v1037 = vpop.f32.mrb[0].mxu0
    %1038 = vdwg.mxu0
    %1039 = vrot.lane.b32.xlu0 %v270, 96
    %v1040 = vpop.permute.xlu0 %1039
    %v1042 = vsel %vm305, %v270, 0
    %v1045 = vsel %vm305, %v1040, 0
    %1047 = vmatprep.subr.bf16.mxu0 0
    %1048 = vmatpush1.bf16.xpose.msra.mxu0 %v1045
    %1049 = vmatprep.subr.bf16.mxu0 0
    %1050 = vmatpush1.bf16.xpose.msra.mxu0 0
    %1051 = vmatprep.subr.bf16.mxu0 0
    %1052 = vmatpush1.bf16.xpose.msra.mxu0 0
    %1053 = vmatprep.subr.bf16.mxu0 0
    %1054 = vmatpush1.bf16.xpose.msra.mxu0 0
    %1055 = vmatprep.subr.bf16.mxu0 0
    %1056 = vmatpush1.bf16.xpose.msra.mxu0 0
    %1057 = vmatprep.subr.bf16.mxu0 0
    %1058 = vmatpush1.bf16.xpose.msra.mxu0 0
    %1059 = vmatprep.subr.bf16.mxu0 0
    %1060 = vmatpush1.bf16.xpose.msra.mxu0 0
    %1061 = vmatprep.subr.bf16.mxu0 0
    %1062 = vmatpush1.bf16.xpose.msra.mxu0 0
    %1063 = vmatprep.subr.bf16.mxu0 0
    %1064 = vmatpush1.bf16.xpose.msra.mxu0 0
    %1065 = vmatprep.subr.bf16.mxu0 0
    %1066 = vmatpush1.bf16.xpose.msra.mxu0 0
    %1067 = vmatprep.subr.bf16.mxu0 0
    %1068 = vmatpush1.bf16.xpose.msra.mxu0 0
    %1069 = vmatprep.subr.bf16.mxu0 0
    %1070 = vmatpush1.bf16.xpose.msra.mxu0 0
    %1071 = vmatprep.subr.bf16.mxu0 0
    %1072 = vmatpush1.bf16.xpose.msra.mxu0 0
    %1073 = vmatprep.subr.bf16.mxu0 0
    %1074 = vmatpush1.bf16.xpose.msra.mxu0 0
    %1075 = vmatprep.subr.bf16.mxu0 0
    %1076 = vmatpush1.bf16.xpose.msra.mxu0 0
    %1077 = vmatprep.subr.bf16.mxu0 0
    %1078 = vmatpush1.bf16.xpose.msra.mxu0 0
    %1079 = vmatprep.mubr.bf16.mxu0 0
    %1080 = vmatmul.mubr.bf16.gmra.mrb[0].mxu0 %v1042
    %v1081 = vpop.f32.mrb[0].mxu0
    %v1082 = vadd.f32 0.0, %v1081
    %v1083 = vpop.f32.mrb[0].mxu0
    %v1084 = vpop.f32.mrb[0].mxu0
    %v1085 = vadd.f32 0.0, %v1084
    %v1086 = vpop.f32.mrb[0].mxu0
    %1087 = vdwg.mxu0
    %1088 = vrot.lane.b32.xlu0 %v272, 96
    %v1089 = vpop.permute.xlu0 %1088
    %v1091 = vsel %vm305, %v272, 0
    %v1094 = vsel %vm305, %v1089, 0
    %1096 = vmatprep.subr.bf16.mxu0 0
    %1097 = vmatpush1.bf16.xpose.msra.mxu0 %v1094
    %1098 = vmatprep.subr.bf16.mxu0 0
    %1099 = vmatpush1.bf16.xpose.msra.mxu0 0
    %1100 = vmatprep.subr.bf16.mxu0 0
    %1101 = vmatpush1.bf16.xpose.msra.mxu0 0
    %1102 = vmatprep.subr.bf16.mxu0 0
    %1103 = vmatpush1.bf16.xpose.msra.mxu0 0
    %1104 = vmatprep.subr.bf16.mxu0 0
    %1105 = vmatpush1.bf16.xpose.msra.mxu0 0
    %1106 = vmatprep.subr.bf16.mxu0 0
    %1107 = vmatpush1.bf16.xpose.msra.mxu0 0
    %1108 = vmatprep.subr.bf16.mxu0 0
    %1109 = vmatpush1.bf16.xpose.msra.mxu0 0
    %1110 = vmatprep.subr.bf16.mxu0 0
    %1111 = vmatpush1.bf16.xpose.msra.mxu0 0
    %1112 = vmatprep.subr.bf16.mxu0 0
    %1113 = vmatpush1.bf16.xpose.msra.mxu0 0
    %1114 = vmatprep.subr.bf16.mxu0 0
    %1115 = vmatpush1.bf16.xpose.msra.mxu0 0
    %1116 = vmatprep.subr.bf16.mxu0 0
    %1117 = vmatpush1.bf16.xpose.msra.mxu0 0
    %1118 = vmatprep.subr.bf16.mxu0 0
    %1119 = vmatpush1.bf16.xpose.msra.mxu0 0
    %1120 = vmatprep.subr.bf16.mxu0 0
    %1121 = vmatpush1.bf16.xpose.msra.mxu0 0
    %1122 = vmatprep.subr.bf16.mxu0 0
    %1123 = vmatpush1.bf16.xpose.msra.mxu0 0
    %1124 = vmatprep.subr.bf16.mxu0 0
    %1125 = vmatpush1.bf16.xpose.msra.mxu0 0
    %1126 = vmatprep.subr.bf16.mxu0 0
    %1127 = vmatpush1.bf16.xpose.msra.mxu0 0
    %1128 = vmatprep.mubr.bf16.mxu0 0
    %1129 = vmatmul.mubr.bf16.gmra.mrb[0].mxu0 %v1091
    %v1130 = vpop.f32.mrb[0].mxu0
    %v1131 = vadd.f32 0.0, %v1130
    %v1132 = vpop.f32.mrb[0].mxu0
    %v1133 = vpop.f32.mrb[0].mxu0
    %v1134 = vadd.f32 0.0, %v1133
    %v1135 = vpop.f32.mrb[0].mxu0
    %1136 = vdwg.mxu0
    %1137 = vrot.lane.b32.xlu0 %v274, 96
    %v1138 = vpop.permute.xlu0 %1137
    %v1140 = vsel %vm305, %v274, 0
    %v1143 = vsel %vm305, %v1138, 0
    %1145 = vmatprep.subr.bf16.mxu0 0
    %1146 = vmatpush1.bf16.xpose.msra.mxu0 %v1143
    %1147 = vmatprep.subr.bf16.mxu0 0
    %1148 = vmatpush1.bf16.xpose.msra.mxu0 0
    %1149 = vmatprep.subr.bf16.mxu0 0
    %1150 = vmatpush1.bf16.xpose.msra.mxu0 0
    %1151 = vmatprep.subr.bf16.mxu0 0
    %1152 = vmatpush1.bf16.xpose.msra.mxu0 0
    %1153 = vmatprep.subr.bf16.mxu0 0
    %1154 = vmatpush1.bf16.xpose.msra.mxu0 0
    %1155 = vmatprep.subr.bf16.mxu0 0
    %1156 = vmatpush1.bf16.xpose.msra.mxu0 0
    %1157 = vmatprep.subr.bf16.mxu0 0
    %1158 = vmatpush1.bf16.xpose.msra.mxu0 0
    %1159 = vmatprep.subr.bf16.mxu0 0
    %1160 = vmatpush1.bf16.xpose.msra.mxu0 0
    %1161 = vmatprep.subr.bf16.mxu0 0
    %1162 = vmatpush1.bf16.xpose.msra.mxu0 0
    %1163 = vmatprep.subr.bf16.mxu0 0
    %1164 = vmatpush1.bf16.xpose.msra.mxu0 0
    %1165 = vmatprep.subr.bf16.mxu0 0
    %1166 = vmatpush1.bf16.xpose.msra.mxu0 0
    %1167 = vmatprep.subr.bf16.mxu0 0
    %1168 = vmatpush1.bf16.xpose.msra.mxu0 0
    %1169 = vmatprep.subr.bf16.mxu0 0
    %1170 = vmatpush1.bf16.xpose.msra.mxu0 0
    %1171 = vmatprep.subr.bf16.mxu0 0
    %1172 = vmatpush1.bf16.xpose.msra.mxu0 0
    %1173 = vmatprep.subr.bf16.mxu0 0
    %1174 = vmatpush1.bf16.xpose.msra.mxu0 0
    %1175 = vmatprep.subr.bf16.mxu0 0
    %1176 = vmatpush1.bf16.xpose.msra.mxu0 0
    %1177 = vmatprep.mubr.bf16.mxu0 0
    %1178 = vmatmul.mubr.bf16.gmra.mrb[0].mxu0 %v1140
    %v1179 = vpop.f32.mrb[0].mxu0
    %v1180 = vadd.f32 0.0, %v1179
    %v1181 = vpop.f32.mrb[0].mxu0
    %v1182 = vpop.f32.mrb[0].mxu0
    %v1183 = vadd.f32 0.0, %v1182
    %v1184 = vpop.f32.mrb[0].mxu0
    %1185 = vdwg.mxu0
    %1186 = vrot.lane.b32.xlu0 %v276, 96
    %v1187 = vpop.permute.xlu0 %1186
    %v1189 = vsel %vm305, %v276, 0
    %v1192 = vsel %vm305, %v1187, 0
    %1194 = vmatprep.subr.bf16.mxu0 0
    %1195 = vmatpush1.bf16.xpose.msra.mxu0 %v1192
    %1196 = vmatprep.subr.bf16.mxu0 0
    %1197 = vmatpush1.bf16.xpose.msra.mxu0 0
    %1198 = vmatprep.subr.bf16.mxu0 0
    %1199 = vmatpush1.bf16.xpose.msra.mxu0 0
    %1200 = vmatprep.subr.bf16.mxu0 0
    %1201 = vmatpush1.bf16.xpose.msra.mxu0 0
    %1202 = vmatprep.subr.bf16.mxu0 0
    %1203 = vmatpush1.bf16.xpose.msra.mxu0 0
    %1204 = vmatprep.subr.bf16.mxu0 0
    %1205 = vmatpush1.bf16.xpose.msra.mxu0 0
    %1206 = vmatprep.subr.bf16.mxu0 0
    %1207 = vmatpush1.bf16.xpose.msra.mxu0 0
    %1208 = vmatprep.subr.bf16.mxu0 0
    %1209 = vmatpush1.bf16.xpose.msra.mxu0 0
    %1210 = vmatprep.subr.bf16.mxu0 0
    %1211 = vmatpush1.bf16.xpose.msra.mxu0 0
    %1212 = vmatprep.subr.bf16.mxu0 0
    %1213 = vmatpush1.bf16.xpose.msra.mxu0 0
    %1214 = vmatprep.subr.bf16.mxu0 0
    %1215 = vmatpush1.bf16.xpose.msra.mxu0 0
    %1216 = vmatprep.subr.bf16.mxu0 0
    %1217 = vmatpush1.bf16.xpose.msra.mxu0 0
    %1218 = vmatprep.subr.bf16.mxu0 0
    %1219 = vmatpush1.bf16.xpose.msra.mxu0 0
    %1220 = vmatprep.subr.bf16.mxu0 0
    %1221 = vmatpush1.bf16.xpose.msra.mxu0 0
    %1222 = vmatprep.subr.bf16.mxu0 0
    %1223 = vmatpush1.bf16.xpose.msra.mxu0 0
    %1224 = vmatprep.subr.bf16.mxu0 0
    %1225 = vmatpush1.bf16.xpose.msra.mxu0 0
    %1226 = vmatprep.mubr.bf16.mxu0 0
    %1227 = vmatmul.mubr.bf16.gmra.mrb[0].mxu0 %v1189
    %v1228 = vpop.f32.mrb[0].mxu0
    %v1229 = vadd.f32 0.0, %v1228
    %v1230 = vpop.f32.mrb[0].mxu0
    %v1231 = vpop.f32.mrb[0].mxu0
    %v1232 = vadd.f32 0.0, %v1231
    %v1233 = vpop.f32.mrb[0].mxu0
    %1234 = vdwg.mxu0
    %1235 = vrot.lane.b32.xlu0 %v278, 96
    %v1236 = vpop.permute.xlu0 %1235
    %v1238 = vsel %vm305, %v278, 0
    %v1241 = vsel %vm305, %v1236, 0
    %1243 = vmatprep.subr.bf16.mxu0 0
    %1244 = vmatpush1.bf16.xpose.msra.mxu0 %v1241
    %1245 = vmatprep.subr.bf16.mxu0 0
    %1246 = vmatpush1.bf16.xpose.msra.mxu0 0
    %1247 = vmatprep.subr.bf16.mxu0 0
    %1248 = vmatpush1.bf16.xpose.msra.mxu0 0
    %1249 = vmatprep.subr.bf16.mxu0 0
    %1250 = vmatpush1.bf16.xpose.msra.mxu0 0
    %1251 = vmatprep.subr.bf16.mxu0 0
    %1252 = vmatpush1.bf16.xpose.msra.mxu0 0
    %1253 = vmatprep.subr.bf16.mxu0 0
    %1254 = vmatpush1.bf16.xpose.msra.mxu0 0
    %1255 = vmatprep.subr.bf16.mxu0 0
    %1256 = vmatpush1.bf16.xpose.msra.mxu0 0
    %1257 = vmatprep.subr.bf16.mxu0 0
    %1258 = vmatpush1.bf16.xpose.msra.mxu0 0
    %1259 = vmatprep.subr.bf16.mxu0 0
    %1260 = vmatpush1.bf16.xpose.msra.mxu0 0
    %1261 = vmatprep.subr.bf16.mxu0 0
    %1262 = vmatpush1.bf16.xpose.msra.mxu0 0
    %1263 = vmatprep.subr.bf16.mxu0 0
    %1264 = vmatpush1.bf16.xpose.msra.mxu0 0
    %1265 = vmatprep.subr.bf16.mxu0 0
    %1266 = vmatpush1.bf16.xpose.msra.mxu0 0
    %1267 = vmatprep.subr.bf16.mxu0 0
    %1268 = vmatpush1.bf16.xpose.msra.mxu0 0
    %1269 = vmatprep.subr.bf16.mxu0 0
    %1270 = vmatpush1.bf16.xpose.msra.mxu0 0
    %1271 = vmatprep.subr.bf16.mxu0 0
    %1272 = vmatpush1.bf16.xpose.msra.mxu0 0
    %1273 = vmatprep.subr.bf16.mxu0 0
    %1274 = vmatpush1.bf16.xpose.msra.mxu0 0
    %1275 = vmatprep.mubr.bf16.mxu0 0
    %1276 = vmatmul.mubr.bf16.gmra.mrb[0].mxu0 %v1238
    %v1277 = vpop.f32.mrb[0].mxu0
    %v1278 = vadd.f32 0.0, %v1277
    %v1279 = vpop.f32.mrb[0].mxu0
    %v1280 = vpop.f32.mrb[0].mxu0
    %v1281 = vadd.f32 0.0, %v1280
    %v1282 = vpop.f32.mrb[0].mxu0
    %1283 = vdwg.mxu0
    %1284 = vrot.lane.b32.xlu0 %v280, 96
    %v1285 = vpop.permute.xlu0 %1284
    %v1287 = vsel %vm305, %v280, 0
    %v1290 = vsel %vm305, %v1285, 0
    %1292 = vmatprep.subr.bf16.mxu0 0
    %1293 = vmatpush1.bf16.xpose.msra.mxu0 %v1290
    %1294 = vmatprep.subr.bf16.mxu0 0
    %1295 = vmatpush1.bf16.xpose.msra.mxu0 0
    %1296 = vmatprep.subr.bf16.mxu0 0
    %1297 = vmatpush1.bf16.xpose.msra.mxu0 0
    %1298 = vmatprep.subr.bf16.mxu0 0
    %1299 = vmatpush1.bf16.xpose.msra.mxu0 0
    %1300 = vmatprep.subr.bf16.mxu0 0
    %1301 = vmatpush1.bf16.xpose.msra.mxu0 0
    %1302 = vmatprep.subr.bf16.mxu0 0
    %1303 = vmatpush1.bf16.xpose.msra.mxu0 0
    %1304 = vmatprep.subr.bf16.mxu0 0
    %1305 = vmatpush1.bf16.xpose.msra.mxu0 0
    %1306 = vmatprep.subr.bf16.mxu0 0
    %1307 = vmatpush1.bf16.xpose.msra.mxu0 0
    %1308 = vmatprep.subr.bf16.mxu0 0
    %1309 = vmatpush1.bf16.xpose.msra.mxu0 0
    %1310 = vmatprep.subr.bf16.mxu0 0
    %1311 = vmatpush1.bf16.xpose.msra.mxu0 0
    %1312 = vmatprep.subr.bf16.mxu0 0
    %1313 = vmatpush1.bf16.xpose.msra.mxu0 0
    %1314 = vmatprep.subr.bf16.mxu0 0
    %1315 = vmatpush1.bf16.xpose.msra.mxu0 0
    %1316 = vmatprep.subr.bf16.mxu0 0
    %1317 = vmatpush1.bf16.xpose.msra.mxu0 0
    %1318 = vmatprep.subr.bf16.mxu0 0
    %1319 = vmatpush1.bf16.xpose.msra.mxu0 0
    %1320 = vmatprep.subr.bf16.mxu0 0
    %1321 = vmatpush1.bf16.xpose.msra.mxu0 0
    %1322 = vmatprep.subr.bf16.mxu0 0
    %1323 = vmatpush1.bf16.xpose.msra.mxu0 0
    %1324 = vmatprep.mubr.bf16.mxu0 0
    %1325 = vmatmul.mubr.bf16.gmra.mrb[0].mxu0 %v1287
    %v1326 = vpop.f32.mrb[0].mxu0
    %v1327 = vadd.f32 0.0, %v1326
    %v1328 = vpop.f32.mrb[0].mxu0
    %v1329 = vpop.f32.mrb[0].mxu0
    %v1330 = vadd.f32 0.0, %v1329
    %v1331 = vpop.f32.mrb[0].mxu0
    %1332 = vdwg.mxu0
    %1333 = vrot.lane.b32.xlu0 %v282, 96
    %v1334 = vpop.permute.xlu0 %1333
    %v1336 = vsel %vm305, %v282, 0
    %v1339 = vsel %vm305, %v1334, 0
    %1341 = vmatprep.subr.bf16.mxu0 0
    %1342 = vmatpush1.bf16.xpose.msra.mxu0 %v1339
    %1343 = vmatprep.subr.bf16.mxu0 0
    %1344 = vmatpush1.bf16.xpose.msra.mxu0 0
    %1345 = vmatprep.subr.bf16.mxu0 0
    %1346 = vmatpush1.bf16.xpose.msra.mxu0 0
    %1347 = vmatprep.subr.bf16.mxu0 0
    %1348 = vmatpush1.bf16.xpose.msra.mxu0 0
    %1349 = vmatprep.subr.bf16.mxu0 0
    %1350 = vmatpush1.bf16.xpose.msra.mxu0 0
    %1351 = vmatprep.subr.bf16.mxu0 0
    %1352 = vmatpush1.bf16.xpose.msra.mxu0 0
    %1353 = vmatprep.subr.bf16.mxu0 0
    %1354 = vmatpush1.bf16.xpose.msra.mxu0 0
    %1355 = vmatprep.subr.bf16.mxu0 0
    %1356 = vmatpush1.bf16.xpose.msra.mxu0 0
    %1357 = vmatprep.subr.bf16.mxu0 0
    %1358 = vmatpush1.bf16.xpose.msra.mxu0 0
    %1359 = vmatprep.subr.bf16.mxu0 0
    %1360 = vmatpush1.bf16.xpose.msra.mxu0 0
    %1361 = vmatprep.subr.bf16.mxu0 0
    %1362 = vmatpush1.bf16.xpose.msra.mxu0 0
    %1363 = vmatprep.subr.bf16.mxu0 0
    %1364 = vmatpush1.bf16.xpose.msra.mxu0 0
    %1365 = vmatprep.subr.bf16.mxu0 0
    %1366 = vmatpush1.bf16.xpose.msra.mxu0 0
    %1367 = vmatprep.subr.bf16.mxu0 0
    %1368 = vmatpush1.bf16.xpose.msra.mxu0 0
    %1369 = vmatprep.subr.bf16.mxu0 0
    %1370 = vmatpush1.bf16.xpose.msra.mxu0 0
    %1371 = vmatprep.subr.bf16.mxu0 0
    %1372 = vmatpush1.bf16.xpose.msra.mxu0 0
    %1373 = vmatprep.mubr.bf16.mxu0 0
    %1374 = vmatmul.mubr.bf16.gmra.mrb[0].mxu0 %v1336
    %v1375 = vpop.f32.mrb[0].mxu0
    %v1376 = vadd.f32 0.0, %v1375
    %v1377 = vpop.f32.mrb[0].mxu0
    %v1378 = vpop.f32.mrb[0].mxu0
    %v1379 = vadd.f32 0.0, %v1378
    %v1380 = vpop.f32.mrb[0].mxu0
    %1381 = vdwg.mxu0
    %1382 = vrot.lane.b32.xlu0 %v284, 96
    %v1383 = vpop.permute.xlu0 %1382
    %v1385 = vsel %vm305, %v284, 0
    %v1388 = vsel %vm305, %v1383, 0
    %1390 = vmatprep.subr.bf16.mxu0 0
    %1391 = vmatpush1.bf16.xpose.msra.mxu0 %v1388
    %1392 = vmatprep.subr.bf16.mxu0 0
    %1393 = vmatpush1.bf16.xpose.msra.mxu0 0
    %1394 = vmatprep.subr.bf16.mxu0 0
    %1395 = vmatpush1.bf16.xpose.msra.mxu0 0
    %1396 = vmatprep.subr.bf16.mxu0 0
    %1397 = vmatpush1.bf16.xpose.msra.mxu0 0
    %1398 = vmatprep.subr.bf16.mxu0 0
    %1399 = vmatpush1.bf16.xpose.msra.mxu0 0
    %1400 = vmatprep.subr.bf16.mxu0 0
    %1401 = vmatpush1.bf16.xpose.msra.mxu0 0
    %1402 = vmatprep.subr.bf16.mxu0 0
    %1403 = vmatpush1.bf16.xpose.msra.mxu0 0
    %1404 = vmatprep.subr.bf16.mxu0 0
    %1405 = vmatpush1.bf16.xpose.msra.mxu0 0
    %1406 = vmatprep.subr.bf16.mxu0 0
    %1407 = vmatpush1.bf16.xpose.msra.mxu0 0
    %1408 = vmatprep.subr.bf16.mxu0 0
    %1409 = vmatpush1.bf16.xpose.msra.mxu0 0
    %1410 = vmatprep.subr.bf16.mxu0 0
    %1411 = vmatpush1.bf16.xpose.msra.mxu0 0
    %1412 = vmatprep.subr.bf16.mxu0 0
    %1413 = vmatpush1.bf16.xpose.msra.mxu0 0
    %1414 = vmatprep.subr.bf16.mxu0 0
    %1415 = vmatpush1.bf16.xpose.msra.mxu0 0
    %1416 = vmatprep.subr.bf16.mxu0 0
    %1417 = vmatpush1.bf16.xpose.msra.mxu0 0
    %1418 = vmatprep.subr.bf16.mxu0 0
    %1419 = vmatpush1.bf16.xpose.msra.mxu0 0
    %1420 = vmatprep.subr.bf16.mxu0 0
    %1421 = vmatpush1.bf16.xpose.msra.mxu0 0
    %1422 = vmatprep.mubr.bf16.mxu0 0
    %1423 = vmatmul.mubr.bf16.gmra.mrb[0].mxu0 %v1385
    %v1424 = vpop.f32.mrb[0].mxu0
    %v1425 = vadd.f32 0.0, %v1424
    %v1426 = vpop.f32.mrb[0].mxu0
    %v1427 = vpop.f32.mrb[0].mxu0
    %v1428 = vadd.f32 0.0, %v1427
    %v1429 = vpop.f32.mrb[0].mxu0
    %1430 = vdwg.mxu0
    %1431 = vrot.lane.b32.xlu0 %v286, 96
    %v1432 = vpop.permute.xlu0 %1431
    %v1434 = vsel %vm305, %v286, 0
    %v1437 = vsel %vm305, %v1432, 0
    %1439 = vmatprep.subr.bf16.mxu0 0
    %1440 = vmatpush1.bf16.xpose.msra.mxu0 %v1437
    %1441 = vmatprep.subr.bf16.mxu0 0
    %1442 = vmatpush1.bf16.xpose.msra.mxu0 0
    %1443 = vmatprep.subr.bf16.mxu0 0
    %1444 = vmatpush1.bf16.xpose.msra.mxu0 0
    %1445 = vmatprep.subr.bf16.mxu0 0
    %1446 = vmatpush1.bf16.xpose.msra.mxu0 0
    %1447 = vmatprep.subr.bf16.mxu0 0
    %1448 = vmatpush1.bf16.xpose.msra.mxu0 0
    %1449 = vmatprep.subr.bf16.mxu0 0
    %1450 = vmatpush1.bf16.xpose.msra.mxu0 0
    %1451 = vmatprep.subr.bf16.mxu0 0
    %1452 = vmatpush1.bf16.xpose.msra.mxu0 0
    %1453 = vmatprep.subr.bf16.mxu0 0
    %1454 = vmatpush1.bf16.xpose.msra.mxu0 0
    %1455 = vmatprep.subr.bf16.mxu0 0
    %1456 = vmatpush1.bf16.xpose.msra.mxu0 0
    %1457 = vmatprep.subr.bf16.mxu0 0
    %1458 = vmatpush1.bf16.xpose.msra.mxu0 0
    %1459 = vmatprep.subr.bf16.mxu0 0
    %1460 = vmatpush1.bf16.xpose.msra.mxu0 0
    %1461 = vmatprep.subr.bf16.mxu0 0
    %1462 = vmatpush1.bf16.xpose.msra.mxu0 0
    %1463 = vmatprep.subr.bf16.mxu0 0
    %1464 = vmatpush1.bf16.xpose.msra.mxu0 0
    %1465 = vmatprep.subr.bf16.mxu0 0
    %1466 = vmatpush1.bf16.xpose.msra.mxu0 0
    %1467 = vmatprep.subr.bf16.mxu0 0
    %1468 = vmatpush1.bf16.xpose.msra.mxu0 0
    %1469 = vmatprep.subr.bf16.mxu0 0
    %1470 = vmatpush1.bf16.xpose.msra.mxu0 0
    %1471 = vmatprep.mubr.bf16.mxu0 0
    %1472 = vmatmul.mubr.bf16.gmra.mrb[0].mxu0 %v1434
    %v1473 = vpop.f32.mrb[0].mxu0
    %v1474 = vadd.f32 0.0, %v1473
    %v1475 = vpop.f32.mrb[0].mxu0
    %v1476 = vpop.f32.mrb[0].mxu0
    %v1477 = vadd.f32 0.0, %v1476
    %v1478 = vpop.f32.mrb[0].mxu0
    %1479 = vdwg.mxu0
    %1480 = vrot.lane.b32.xlu0 %v288, 96
    %v1481 = vpop.permute.xlu0 %1480
    %v1483 = vsel %vm305, %v288, 0
    %v1486 = vsel %vm305, %v1481, 0
    %1488 = vmatprep.subr.bf16.mxu0 0
    %1489 = vmatpush1.bf16.xpose.msra.mxu0 %v1486
    %1490 = vmatprep.subr.bf16.mxu0 0
    %1491 = vmatpush1.bf16.xpose.msra.mxu0 0
    %1492 = vmatprep.subr.bf16.mxu0 0
    %1493 = vmatpush1.bf16.xpose.msra.mxu0 0
    %1494 = vmatprep.subr.bf16.mxu0 0
    %1495 = vmatpush1.bf16.xpose.msra.mxu0 0
    %1496 = vmatprep.subr.bf16.mxu0 0
    %1497 = vmatpush1.bf16.xpose.msra.mxu0 0
    %1498 = vmatprep.subr.bf16.mxu0 0
    %1499 = vmatpush1.bf16.xpose.msra.mxu0 0
    %1500 = vmatprep.subr.bf16.mxu0 0
    %1501 = vmatpush1.bf16.xpose.msra.mxu0 0
    %1502 = vmatprep.subr.bf16.mxu0 0
    %1503 = vmatpush1.bf16.xpose.msra.mxu0 0
    %1504 = vmatprep.subr.bf16.mxu0 0
    %1505 = vmatpush1.bf16.xpose.msra.mxu0 0
    %1506 = vmatprep.subr.bf16.mxu0 0
    %1507 = vmatpush1.bf16.xpose.msra.mxu0 0
    %1508 = vmatprep.subr.bf16.mxu0 0
    %1509 = vmatpush1.bf16.xpose.msra.mxu0 0
    %1510 = vmatprep.subr.bf16.mxu0 0
    %1511 = vmatpush1.bf16.xpose.msra.mxu0 0
    %1512 = vmatprep.subr.bf16.mxu0 0
    %1513 = vmatpush1.bf16.xpose.msra.mxu0 0
    %1514 = vmatprep.subr.bf16.mxu0 0
    %1515 = vmatpush1.bf16.xpose.msra.mxu0 0
    %1516 = vmatprep.subr.bf16.mxu0 0
    %1517 = vmatpush1.bf16.xpose.msra.mxu0 0
    %1518 = vmatprep.subr.bf16.mxu0 0
    %1519 = vmatpush1.bf16.xpose.msra.mxu0 0
    %1520 = vmatprep.mubr.bf16.mxu0 0
    %1521 = vmatmul.mubr.bf16.gmra.mrb[0].mxu0 %v1483
    %v1522 = vpop.f32.mrb[0].mxu0
    %v1523 = vadd.f32 0.0, %v1522
    %v1524 = vpop.f32.mrb[0].mxu0
    %v1525 = vpop.f32.mrb[0].mxu0
    %v1526 = vadd.f32 0.0, %v1525
    %v1527 = vpop.f32.mrb[0].mxu0
    %1528 = vdwg.mxu0
    %1529 = vrot.lane.b32.xlu0 %v290, 96
    %v1530 = vpop.permute.xlu0 %1529
    %v1532 = vsel %vm305, %v290, 0
    %v1535 = vsel %vm305, %v1530, 0
    %1537 = vmatprep.subr.bf16.mxu0 0
    %1538 = vmatpush1.bf16.xpose.msra.mxu0 %v1535
    %1539 = vmatprep.subr.bf16.mxu0 0
    %1540 = vmatpush1.bf16.xpose.msra.mxu0 0
    %1541 = vmatprep.subr.bf16.mxu0 0
    %1542 = vmatpush1.bf16.xpose.msra.mxu0 0
    %1543 = vmatprep.subr.bf16.mxu0 0
    %1544 = vmatpush1.bf16.xpose.msra.mxu0 0
    %1545 = vmatprep.subr.bf16.mxu0 0
    %1546 = vmatpush1.bf16.xpose.msra.mxu0 0
    %1547 = vmatprep.subr.bf16.mxu0 0
    %1548 = vmatpush1.bf16.xpose.msra.mxu0 0
    %1549 = vmatprep.subr.bf16.mxu0 0
    %1550 = vmatpush1.bf16.xpose.msra.mxu0 0
    %1551 = vmatprep.subr.bf16.mxu0 0
    %1552 = vmatpush1.bf16.xpose.msra.mxu0 0
    %1553 = vmatprep.subr.bf16.mxu0 0
    %1554 = vmatpush1.bf16.xpose.msra.mxu0 0
    %1555 = vmatprep.subr.bf16.mxu0 0
    %1556 = vmatpush1.bf16.xpose.msra.mxu0 0
    %1557 = vmatprep.subr.bf16.mxu0 0
    %1558 = vmatpush1.bf16.xpose.msra.mxu0 0
    %1559 = vmatprep.subr.bf16.mxu0 0
    %1560 = vmatpush1.bf16.xpose.msra.mxu0 0
    %1561 = vmatprep.subr.bf16.mxu0 0
    %1562 = vmatpush1.bf16.xpose.msra.mxu0 0
    %1563 = vmatprep.subr.bf16.mxu0 0
    %1564 = vmatpush1.bf16.xpose.msra.mxu0 0
    %1565 = vmatprep.subr.bf16.mxu0 0
    %1566 = vmatpush1.bf16.xpose.msra.mxu0 0
    %1567 = vmatprep.subr.bf16.mxu0 0
    %1568 = vmatpush1.bf16.xpose.msra.mxu0 0
    %1569 = vmatprep.mubr.bf16.mxu0 0
    %1570 = vmatmul.mubr.bf16.gmra.mrb[0].mxu0 %v1532
    %v1571 = vpop.f32.mrb[0].mxu0
    %v1572 = vadd.f32 0.0, %v1571
    %v1573 = vpop.f32.mrb[0].mxu0
    %v1574 = vpop.f32.mrb[0].mxu0
    %v1575 = vadd.f32 0.0, %v1574
    %v1576 = vpop.f32.mrb[0].mxu0
    %1577 = vdwg.mxu0
    %1578 = vrot.lane.b32.xlu0 %v292, 96
    %v1579 = vpop.permute.xlu0 %1578
    %v1581 = vsel %vm305, %v292, 0
    %v1584 = vsel %vm305, %v1579, 0
    %1586 = vmatprep.subr.bf16.mxu0 0
    %1587 = vmatpush1.bf16.xpose.msra.mxu0 %v1584
    %1588 = vmatprep.subr.bf16.mxu0 0
    %1589 = vmatpush1.bf16.xpose.msra.mxu0 0
    %1590 = vmatprep.subr.bf16.mxu0 0
    %1591 = vmatpush1.bf16.xpose.msra.mxu0 0
    %1592 = vmatprep.subr.bf16.mxu0 0
    %1593 = vmatpush1.bf16.xpose.msra.mxu0 0
    %1594 = vmatprep.subr.bf16.mxu0 0
    %1595 = vmatpush1.bf16.xpose.msra.mxu0 0
    %1596 = vmatprep.subr.bf16.mxu0 0
    %1597 = vmatpush1.bf16.xpose.msra.mxu0 0
    %1598 = vmatprep.subr.bf16.mxu0 0
    %1599 = vmatpush1.bf16.xpose.msra.mxu0 0
    %1600 = vmatprep.subr.bf16.mxu0 0
    %1601 = vmatpush1.bf16.xpose.msra.mxu0 0
    %1602 = vmatprep.subr.bf16.mxu0 0
    %1603 = vmatpush1.bf16.xpose.msra.mxu0 0
    %1604 = vmatprep.subr.bf16.mxu0 0
    %1605 = vmatpush1.bf16.xpose.msra.mxu0 0
    %1606 = vmatprep.subr.bf16.mxu0 0
    %1607 = vmatpush1.bf16.xpose.msra.mxu0 0
    %1608 = vmatprep.subr.bf16.mxu0 0
    %1609 = vmatpush1.bf16.xpose.msra.mxu0 0
    %1610 = vmatprep.subr.bf16.mxu0 0
    %1611 = vmatpush1.bf16.xpose.msra.mxu0 0
    %1612 = vmatprep.subr.bf16.mxu0 0
    %1613 = vmatpush1.bf16.xpose.msra.mxu0 0
    %1614 = vmatprep.subr.bf16.mxu0 0
    %1615 = vmatpush1.bf16.xpose.msra.mxu0 0
    %1616 = vmatprep.subr.bf16.mxu0 0
    %1617 = vmatpush1.bf16.xpose.msra.mxu0 0
    %1618 = vmatprep.mubr.bf16.mxu0 0
    %1619 = vmatmul.mubr.bf16.gmra.mrb[0].mxu0 %v1581
    %v1620 = vpop.f32.mrb[0].mxu0
    %v1621 = vadd.f32 0.0, %v1620
    %v1622 = vpop.f32.mrb[0].mxu0
    %v1623 = vpop.f32.mrb[0].mxu0
    %v1624 = vadd.f32 0.0, %v1623
    %v1625 = vpop.f32.mrb[0].mxu0
    %1626 = vdwg.mxu0
    %1627 = vrot.lane.b32.xlu0 %v294, 96
    %v1628 = vpop.permute.xlu0 %1627
    %v1630 = vsel %vm305, %v294, 0
    %v1633 = vsel %vm305, %v1628, 0
    %1635 = vmatprep.subr.bf16.mxu0 0
    %1636 = vmatpush1.bf16.xpose.msra.mxu0 %v1633
    %1637 = vmatprep.subr.bf16.mxu0 0
    %1638 = vmatpush1.bf16.xpose.msra.mxu0 0
    %1639 = vmatprep.subr.bf16.mxu0 0
    %1640 = vmatpush1.bf16.xpose.msra.mxu0 0
    %1641 = vmatprep.subr.bf16.mxu0 0
    %1642 = vmatpush1.bf16.xpose.msra.mxu0 0
    %1643 = vmatprep.subr.bf16.mxu0 0
    %1644 = vmatpush1.bf16.xpose.msra.mxu0 0
    %1645 = vmatprep.subr.bf16.mxu0 0
    %1646 = vmatpush1.bf16.xpose.msra.mxu0 0
    %1647 = vmatprep.subr.bf16.mxu0 0
    %1648 = vmatpush1.bf16.xpose.msra.mxu0 0
    %1649 = vmatprep.subr.bf16.mxu0 0
    %1650 = vmatpush1.bf16.xpose.msra.mxu0 0
    %1651 = vmatprep.subr.bf16.mxu0 0
    %1652 = vmatpush1.bf16.xpose.msra.mxu0 0
    %1653 = vmatprep.subr.bf16.mxu0 0
    %1654 = vmatpush1.bf16.xpose.msra.mxu0 0
    %1655 = vmatprep.subr.bf16.mxu0 0
    %1656 = vmatpush1.bf16.xpose.msra.mxu0 0
    %1657 = vmatprep.subr.bf16.mxu0 0
    %1658 = vmatpush1.bf16.xpose.msra.mxu0 0
    %1659 = vmatprep.subr.bf16.mxu0 0
    %1660 = vmatpush1.bf16.xpose.msra.mxu0 0
    %1661 = vmatprep.subr.bf16.mxu0 0
    %1662 = vmatpush1.bf16.xpose.msra.mxu0 0
    %1663 = vmatprep.subr.bf16.mxu0 0
    %1664 = vmatpush1.bf16.xpose.msra.mxu0 0
    %1665 = vmatprep.subr.bf16.mxu0 0
    %1666 = vmatpush1.bf16.xpose.msra.mxu0 0
    %1667 = vmatprep.mubr.bf16.mxu0 0
    %1668 = vmatmul.mubr.bf16.gmra.mrb[0].mxu0 %v1630
    %v1669 = vpop.f32.mrb[0].mxu0
    %v1670 = vadd.f32 0.0, %v1669
    %v1671 = vpop.f32.mrb[0].mxu0
    %v1672 = vpop.f32.mrb[0].mxu0
    %v1673 = vadd.f32 0.0, %v1672
    %v1674 = vpop.f32.mrb[0].mxu0
    %1675 = vdwg.mxu0
    %1676 = vrot.lane.b32.xlu0 %v296, 96
    %v1677 = vpop.permute.xlu0 %1676
    %v1679 = vsel %vm305, %v296, 0
    %v1682 = vsel %vm305, %v1677, 0
    %1684 = vmatprep.subr.bf16.mxu0 0
    %1685 = vmatpush1.bf16.xpose.msra.mxu0 %v1682
    %1686 = vmatprep.subr.bf16.mxu0 0
    %1687 = vmatpush1.bf16.xpose.msra.mxu0 0
    %1688 = vmatprep.subr.bf16.mxu0 0
    %1689 = vmatpush1.bf16.xpose.msra.mxu0 0
    %1690 = vmatprep.subr.bf16.mxu0 0
    %1691 = vmatpush1.bf16.xpose.msra.mxu0 0
    %1692 = vmatprep.subr.bf16.mxu0 0
    %1693 = vmatpush1.bf16.xpose.msra.mxu0 0
    %1694 = vmatprep.subr.bf16.mxu0 0
    %1695 = vmatpush1.bf16.xpose.msra.mxu0 0
    %1696 = vmatprep.subr.bf16.mxu0 0
    %1697 = vmatpush1.bf16.xpose.msra.mxu0 0
    %1698 = vmatprep.subr.bf16.mxu0 0
    %1699 = vmatpush1.bf16.xpose.msra.mxu0 0
    %1700 = vmatprep.subr.bf16.mxu0 0
    %1701 = vmatpush1.bf16.xpose.msra.mxu0 0
    %1702 = vmatprep.subr.bf16.mxu0 0
    %1703 = vmatpush1.bf16.xpose.msra.mxu0 0
    %1704 = vmatprep.subr.bf16.mxu0 0
    %1705 = vmatpush1.bf16.xpose.msra.mxu0 0
    %1706 = vmatprep.subr.bf16.mxu0 0
    %1707 = vmatpush1.bf16.xpose.msra.mxu0 0
    %1708 = vmatprep.subr.bf16.mxu0 0
    %1709 = vmatpush1.bf16.xpose.msra.mxu0 0
    %1710 = vmatprep.subr.bf16.mxu0 0
    %1711 = vmatpush1.bf16.xpose.msra.mxu0 0
    %1712 = vmatprep.subr.bf16.mxu0 0
    %1713 = vmatpush1.bf16.xpose.msra.mxu0 0
    %1714 = vmatprep.subr.bf16.mxu0 0
    %1715 = vmatpush1.bf16.xpose.msra.mxu0 0
    %1716 = vmatprep.mubr.bf16.mxu0 0
    %1717 = vmatmul.mubr.bf16.gmra.mrb[0].mxu0 %v1679
    %v1718 = vpop.f32.mrb[0].mxu0
    %v1719 = vadd.f32 0.0, %v1718
    %v1720 = vpop.f32.mrb[0].mxu0
    %v1721 = vpop.f32.mrb[0].mxu0
    %v1722 = vadd.f32 0.0, %v1721
    %v1723 = vpop.f32.mrb[0].mxu0
    %1724 = vdwg.mxu0
    %1725 = vrot.lane.b32.xlu0 %v298, 96
    %v1726 = vpop.permute.xlu0 %1725
    %v1728 = vsel %vm305, %v298, 0
    %v1731 = vsel %vm305, %v1726, 0
    %1733 = vmatprep.subr.bf16.mxu0 0
    %1734 = vmatpush1.bf16.xpose.msra.mxu0 %v1731
    %1735 = vmatprep.subr.bf16.mxu0 0
    %1736 = vmatpush1.bf16.xpose.msra.mxu0 0
    %1737 = vmatprep.subr.bf16.mxu0 0
    %1738 = vmatpush1.bf16.xpose.msra.mxu0 0
    %1739 = vmatprep.subr.bf16.mxu0 0
    %1740 = vmatpush1.bf16.xpose.msra.mxu0 0
    %1741 = vmatprep.subr.bf16.mxu0 0
    %1742 = vmatpush1.bf16.xpose.msra.mxu0 0
    %1743 = vmatprep.subr.bf16.mxu0 0
    %1744 = vmatpush1.bf16.xpose.msra.mxu0 0
    %1745 = vmatprep.subr.bf16.mxu0 0
    %1746 = vmatpush1.bf16.xpose.msra.mxu0 0
    %1747 = vmatprep.subr.bf16.mxu0 0
    %1748 = vmatpush1.bf16.xpose.msra.mxu0 0
    %1749 = vmatprep.subr.bf16.mxu0 0
    %1750 = vmatpush1.bf16.xpose.msra.mxu0 0
    %1751 = vmatprep.subr.bf16.mxu0 0
    %1752 = vmatpush1.bf16.xpose.msra.mxu0 0
    %1753 = vmatprep.subr.bf16.mxu0 0
    %1754 = vmatpush1.bf16.xpose.msra.mxu0 0
    %1755 = vmatprep.subr.bf16.mxu0 0
    %1756 = vmatpush1.bf16.xpose.msra.mxu0 0
    %1757 = vmatprep.subr.bf16.mxu0 0
    %1758 = vmatpush1.bf16.xpose.msra.mxu0 0
    %1759 = vmatprep.subr.bf16.mxu0 0
    %1760 = vmatpush1.bf16.xpose.msra.mxu0 0
    %1761 = vmatprep.subr.bf16.mxu0 0
    %1762 = vmatpush1.bf16.xpose.msra.mxu0 0
    %1763 = vmatprep.subr.bf16.mxu0 0
    %1764 = vmatpush1.bf16.xpose.msra.mxu0 0
    %1765 = vmatprep.mubr.bf16.mxu0 0
    %1766 = vmatmul.mubr.bf16.gmra.mrb[0].mxu0 %v1728
    %v1767 = vpop.f32.mrb[0].mxu0
    %v1768 = vadd.f32 0.0, %v1767
    %v1769 = vpop.f32.mrb[0].mxu0
    %v1770 = vpop.f32.mrb[0].mxu0
    %v1771 = vadd.f32 0.0, %v1770
    %v1772 = vpop.f32.mrb[0].mxu0
    %1773 = vdwg.mxu0
    %1774 = vrot.lane.b32.xlu0 %v300, 96
    %v1775 = vpop.permute.xlu0 %1774
    %v1777 = vsel %vm305, %v300, 0
    %v1780 = vsel %vm305, %v1775, 0
    %1782 = vmatprep.subr.bf16.mxu0 0
    %1783 = vmatpush1.bf16.xpose.msra.mxu0 %v1780
    %1784 = vmatprep.subr.bf16.mxu0 0
    %1785 = vmatpush1.bf16.xpose.msra.mxu0 0
    %1786 = vmatprep.subr.bf16.mxu0 0
    %1787 = vmatpush1.bf16.xpose.msra.mxu0 0
    %1788 = vmatprep.subr.bf16.mxu0 0
    %1789 = vmatpush1.bf16.xpose.msra.mxu0 0
    %1790 = vmatprep.subr.bf16.mxu0 0
    %1791 = vmatpush1.bf16.xpose.msra.mxu0 0
    %1792 = vmatprep.subr.bf16.mxu0 0
    %1793 = vmatpush1.bf16.xpose.msra.mxu0 0
    %1794 = vmatprep.subr.bf16.mxu0 0
    %1795 = vmatpush1.bf16.xpose.msra.mxu0 0
    %1796 = vmatprep.subr.bf16.mxu0 0
    %1797 = vmatpush1.bf16.xpose.msra.mxu0 0
    %1798 = vmatprep.subr.bf16.mxu0 0
    %1799 = vmatpush1.bf16.xpose.msra.mxu0 0
    %1800 = vmatprep.subr.bf16.mxu0 0
    %1801 = vmatpush1.bf16.xpose.msra.mxu0 0
    %1802 = vmatprep.subr.bf16.mxu0 0
    %1803 = vmatpush1.bf16.xpose.msra.mxu0 0
    %1804 = vmatprep.subr.bf16.mxu0 0
    %1805 = vmatpush1.bf16.xpose.msra.mxu0 0
    %1806 = vmatprep.subr.bf16.mxu0 0
    %1807 = vmatpush1.bf16.xpose.msra.mxu0 0
    %1808 = vmatprep.subr.bf16.mxu0 0
    %1809 = vmatpush1.bf16.xpose.msra.mxu0 0
    %1810 = vmatprep.subr.bf16.mxu0 0
    %1811 = vmatpush1.bf16.xpose.msra.mxu0 0
    %1812 = vmatprep.subr.bf16.mxu0 0
    %1813 = vmatpush1.bf16.xpose.msra.mxu0 0
    %1814 = vmatprep.mubr.bf16.mxu0 0
    %1815 = vmatmul.mubr.bf16.gmra.mrb[0].mxu0 %v1777
    %v1816 = vpop.f32.mrb[0].mxu0
    %v1817 = vadd.f32 0.0, %v1816
    %v1818 = vpop.f32.mrb[0].mxu0
    %v1819 = vpop.f32.mrb[0].mxu0
    %v1820 = vadd.f32 0.0, %v1819
    %v1821 = vpop.f32.mrb[0].mxu0
    %1822 = vdwg.mxu0
    %1823 = vrot.lane.b32.xlu0 %v302, 96
    %v1824 = vpop.permute.xlu0 %1823
    %v1826 = vsel %vm305, %v302, 0
    %v1829 = vsel %vm305, %v1824, 0
    %1831 = vmatprep.subr.bf16.mxu0 0
    %1832 = vmatpush1.bf16.xpose.msra.mxu0 %v1829
    %1833 = vmatprep.subr.bf16.mxu0 0
    %1834 = vmatpush1.bf16.xpose.msra.mxu0 0
    %1835 = vmatprep.subr.bf16.mxu0 0
    %1836 = vmatpush1.bf16.xpose.msra.mxu0 0
    %1837 = vmatprep.subr.bf16.mxu0 0
    %1838 = vmatpush1.bf16.xpose.msra.mxu0 0
    %1839 = vmatprep.subr.bf16.mxu0 0
    %1840 = vmatpush1.bf16.xpose.msra.mxu0 0
    %1841 = vmatprep.subr.bf16.mxu0 0
    %1842 = vmatpush1.bf16.xpose.msra.mxu0 0
    %1843 = vmatprep.subr.bf16.mxu0 0
    %1844 = vmatpush1.bf16.xpose.msra.mxu0 0
    %1845 = vmatprep.subr.bf16.mxu0 0
    %1846 = vmatpush1.bf16.xpose.msra.mxu0 0
    %1847 = vmatprep.subr.bf16.mxu0 0
    %1848 = vmatpush1.bf16.xpose.msra.mxu0 0
    %1849 = vmatprep.subr.bf16.mxu0 0
    %1850 = vmatpush1.bf16.xpose.msra.mxu0 0
    %1851 = vmatprep.subr.bf16.mxu0 0
    %1852 = vmatpush1.bf16.xpose.msra.mxu0 0
    %1853 = vmatprep.subr.bf16.mxu0 0
    %1854 = vmatpush1.bf16.xpose.msra.mxu0 0
    %1855 = vmatprep.subr.bf16.mxu0 0
    %1856 = vmatpush1.bf16.xpose.msra.mxu0 0
    %1857 = vmatprep.subr.bf16.mxu0 0
    %1858 = vmatpush1.bf16.xpose.msra.mxu0 0
    %1859 = vmatprep.subr.bf16.mxu0 0
    %1860 = vmatpush1.bf16.xpose.msra.mxu0 0
    %1861 = vmatprep.subr.bf16.mxu0 0
    %1862 = vmatpush1.bf16.xpose.msra.mxu0 0
    %1863 = vmatprep.mubr.bf16.mxu0 0
    %1864 = vmatmul.mubr.bf16.gmra.mrb[0].mxu0 %v1826
    %v1865 = vpop.f32.mrb[0].mxu0
    %v1866 = vadd.f32 0.0, %v1865
    %v1867 = vpop.f32.mrb[0].mxu0
    %v1868 = vpop.f32.mrb[0].mxu0
    %v1869 = vadd.f32 0.0, %v1868
    %v1870 = vpop.f32.mrb[0].mxu0
    %1871 = vdwg.mxu0
    %v1872 = vld [vmem:[#allocation2] sm:$0xf]
    %v1873 = vld [vmem:[#allocation2 + $0x4] sm:$0xf]
    %v1874 = vld [vmem:[#allocation2 + $0x8] sm:$0xf]
    %v1875 = vld [vmem:[#allocation2 + $0xc] sm:$0xf]
    %v1876 = vld [vmem:[#allocation2 + $0x10] sm:$0xf]
    %v1877 = vld [vmem:[#allocation2 + $0x14] sm:$0xf]
    %v1878 = vld [vmem:[#allocation2 + $0x18] sm:$0xf]
    %v1879 = vld [vmem:[#allocation2 + $0x1c] sm:$0xf]
    %v1880 = vld [vmem:[#allocation2 + $0x20] sm:$0xf]
    %v1881 = vld [vmem:[#allocation2 + $0x24] sm:$0xf]
    %v1882 = vld [vmem:[#allocation2 + $0x28] sm:$0xf]
    %v1883 = vld [vmem:[#allocation2 + $0x2c] sm:$0xf]
    %v1884 = vld [vmem:[#allocation2 + $0x30] sm:$0xf]
    %v1885 = vld [vmem:[#allocation2 + $0x34] sm:$0xf]
    %v1886 = vld [vmem:[#allocation2 + $0x38] sm:$0xf]
    %v1887 = vld [vmem:[#allocation2 + $0x3c] sm:$0xf]
    %v1888 = vld [vmem:[#allocation2 + $0x40] sm:$0xf]
    %v1889 = vld [vmem:[#allocation2 + $0x44] sm:$0xf]
    %v1890 = vld [vmem:[#allocation2 + $0x48] sm:$0xf]
    %v1891 = vld [vmem:[#allocation2 + $0x4c] sm:$0xf]
    %v1892 = vld [vmem:[#allocation2 + $0x50] sm:$0xf]
    %v1893 = vld [vmem:[#allocation2 + $0x54] sm:$0xf]
    %v1894 = vld [vmem:[#allocation2 + $0x58] sm:$0xf]
    %v1895 = vld [vmem:[#allocation2 + $0x5c] sm:$0xf]
    %v1896 = vld [vmem:[#allocation2 + $0x60] sm:$0xf]
    %v1897 = vld [vmem:[#allocation2 + $0x64] sm:$0xf]
    %v1898 = vld [vmem:[#allocation2 + $0x68] sm:$0xf]
    %v1899 = vld [vmem:[#allocation2 + $0x6c] sm:$0xf]
    %v1900 = vld [vmem:[#allocation2 + $0x70] sm:$0xf]
    %v1901 = vld [vmem:[#allocation2 + $0x74] sm:$0xf]
    %v1902 = vld [vmem:[#allocation2 + $0x78] sm:$0xf]
    %v1903 = vld [vmem:[#allocation2 + $0x7c] sm:$0xf]
    %v1904 = vld [vmem:[#allocation2 + $0x80] sm:$0xf]
    %v1905 = vld [vmem:[#allocation2 + $0x84] sm:$0xf]
    %v1906 = vld [vmem:[#allocation2 + $0x88] sm:$0xf]
    %v1907 = vld [vmem:[#allocation2 + $0x8c] sm:$0xf]
    %v1908 = vld [vmem:[#allocation2 + $0x90] sm:$0xf]
    %v1909 = vld [vmem:[#allocation2 + $0x94] sm:$0xf]
    %v1910 = vld [vmem:[#allocation2 + $0x98] sm:$0xf]
    %v1911 = vld [vmem:[#allocation2 + $0x9c] sm:$0xf]
    %v1912 = vld [vmem:[#allocation2 + $0xa0] sm:$0xf]
    %v1913 = vld [vmem:[#allocation2 + $0xa4] sm:$0xf]
    %v1914 = vld [vmem:[#allocation2 + $0xa8] sm:$0xf]
    %v1915 = vld [vmem:[#allocation2 + $0xac] sm:$0xf]
    %v1916 = vld [vmem:[#allocation2 + $0xb0] sm:$0xf]
    %v1917 = vld [vmem:[#allocation2 + $0xb4] sm:$0xf]
    %v1918 = vld [vmem:[#allocation2 + $0xb8] sm:$0xf]
    %v1919 = vld [vmem:[#allocation2 + $0xbc] sm:$0xf]
    %v1920 = vld [vmem:[#allocation2 + $0xc0] sm:$0xf]
    %v1921 = vld [vmem:[#allocation2 + $0xc4] sm:$0xf]
    %v1922 = vld [vmem:[#allocation2 + $0xc8] sm:$0xf]
    %v1923 = vld [vmem:[#allocation2 + $0xcc] sm:$0xf]
    %v1924 = vld [vmem:[#allocation2 + $0xd0] sm:$0xf]
    %v1925 = vld [vmem:[#allocation2 + $0xd4] sm:$0xf]
    %v1926 = vld [vmem:[#allocation2 + $0xd8] sm:$0xf]
    %v1927 = vld [vmem:[#allocation2 + $0xdc] sm:$0xf]
    %v1928 = vld [vmem:[#allocation2 + $0xe0] sm:$0xf]
    %v1929 = vld [vmem:[#allocation2 + $0xe4] sm:$0xf]
    %v1930 = vld [vmem:[#allocation2 + $0xe8] sm:$0xf]
    %v1931 = vld [vmem:[#allocation2 + $0xec] sm:$0xf]
    %v1932 = vld [vmem:[#allocation2 + $0xf0] sm:$0xf]
    %v1933 = vld [vmem:[#allocation2 + $0xf4] sm:$0xf]
    %v1934 = vld [vmem:[#allocation2 + $0xf8] sm:$0xf]
    %v1935 = vld [vmem:[#allocation2 + $0xfc] sm:$0xf]
    %v1936 = vunpack.c.l.bf16 %v1872
    %v1937 = vunpack.c.l.bf16 %v1873
    %v1938 = vunpack.c.l.bf16 %v1874
    %v1939 = vunpack.c.l.bf16 %v1875
    %v1940 = vunpack.c.l.bf16 %v1876
    %v1941 = vunpack.c.l.bf16 %v1877
    %v1942 = vunpack.c.l.bf16 %v1878
    %v1943 = vunpack.c.l.bf16 %v1879
    %v1944 = vunpack.c.l.bf16 %v1880
    %v1945 = vunpack.c.l.bf16 %v1881
    %v1946 = vunpack.c.l.bf16 %v1882
    %v1947 = vunpack.c.l.bf16 %v1883
    %v1948 = vunpack.c.l.bf16 %v1884
    %v1949 = vunpack.c.l.bf16 %v1885
    %v1950 = vunpack.c.l.bf16 %v1886
    %v1951 = vunpack.c.l.bf16 %v1887
    %v1952 = vunpack.c.l.bf16 %v1888
    %v1953 = vunpack.c.l.bf16 %v1889
    %v1954 = vunpack.c.l.bf16 %v1890
    %v1955 = vunpack.c.l.bf16 %v1891
    %v1956 = vunpack.c.l.bf16 %v1892
    %v1957 = vunpack.c.l.bf16 %v1893
    %v1958 = vunpack.c.l.bf16 %v1894
    %v1959 = vunpack.c.l.bf16 %v1895
    %v1960 = vunpack.c.l.bf16 %v1896
    %v1961 = vunpack.c.l.bf16 %v1897
    %v1962 = vunpack.c.l.bf16 %v1898
    %v1963 = vunpack.c.l.bf16 %v1899
    %v1964 = vunpack.c.l.bf16 %v1900
    %v1965 = vunpack.c.l.bf16 %v1901
    %v1966 = vunpack.c.l.bf16 %v1902
    %v1967 = vunpack.c.l.bf16 %v1903
    %v1968 = vunpack.c.l.bf16 %v1904
    %v1969 = vunpack.c.l.bf16 %v1905
    %v1970 = vunpack.c.l.bf16 %v1906
    %v1971 = vunpack.c.l.bf16 %v1907
    %v1972 = vunpack.c.l.bf16 %v1908
    %v1973 = vunpack.c.l.bf16 %v1909
    %v1974 = vunpack.c.l.bf16 %v1910
    %v1975 = vunpack.c.l.bf16 %v1911
    %v1976 = vunpack.c.l.bf16 %v1912
    %v1977 = vunpack.c.l.bf16 %v1913
    %v1978 = vunpack.c.l.bf16 %v1914
    %v1979 = vunpack.c.l.bf16 %v1915
    %v1980 = vunpack.c.l.bf16 %v1916
    %v1981 = vunpack.c.l.bf16 %v1917
    %v1982 = vunpack.c.l.bf16 %v1918
    %v1983 = vunpack.c.l.bf16 %v1919
    %v1984 = vunpack.c.l.bf16 %v1920
    %v1985 = vunpack.c.l.bf16 %v1921
    %v1986 = vunpack.c.l.bf16 %v1922
    %v1987 = vunpack.c.l.bf16 %v1923
    %v1988 = vunpack.c.l.bf16 %v1924
    %v1989 = vunpack.c.l.bf16 %v1925
    %v1990 = vunpack.c.l.bf16 %v1926
    %v1991 = vunpack.c.l.bf16 %v1927
    %v1992 = vunpack.c.l.bf16 %v1928
    %v1993 = vunpack.c.l.bf16 %v1929
    %v1994 = vunpack.c.l.bf16 %v1930
    %v1995 = vunpack.c.l.bf16 %v1931
    %v1996 = vunpack.c.l.bf16 %v1932
    %v1997 = vunpack.c.l.bf16 %v1933
    %v1998 = vunpack.c.l.bf16 %v1934
    %v1999 = vunpack.c.l.bf16 %v1935
    %v2000 = vadd.f32 %v347, %v1936
    %v2001 = vadd.f32 %v350, %v1937
    %v2002 = vadd.f32 %v396, %v1938
    %v2003 = vadd.f32 %v399, %v1939
    %v2004 = vadd.f32 %v445, %v1940
    %v2005 = vadd.f32 %v448, %v1941
    %v2006 = vadd.f32 %v494, %v1942
    %v2007 = vadd.f32 %v497, %v1943
    %v2008 = vadd.f32 %v543, %v1944
    %v2009 = vadd.f32 %v546, %v1945
    %v2010 = vadd.f32 %v592, %v1946
    %v2011 = vadd.f32 %v595, %v1947
    %v2012 = vadd.f32 %v641, %v1948
    %v2013 = vadd.f32 %v644, %v1949
    %v2014 = vadd.f32 %v690, %v1950
    %v2015 = vadd.f32 %v693, %v1951
    %v2016 = vadd.f32 %v739, %v1952
    %v2017 = vadd.f32 %v742, %v1953
    %v2018 = vadd.f32 %v788, %v1954
    %v2019 = vadd.f32 %v791, %v1955
    %v2020 = vadd.f32 %v837, %v1956
    %v2021 = vadd.f32 %v840, %v1957
    %v2022 = vadd.f32 %v886, %v1958
    %v2023 = vadd.f32 %v889, %v1959
    %v2024 = vadd.f32 %v935, %v1960
    %v2025 = vadd.f32 %v938, %v1961
    %v2026 = vadd.f32 %v984, %v1962
    %v2027 = vadd.f32 %v987, %v1963
    %v2028 = vadd.f32 %v1033, %v1964
    %v2029 = vadd.f32 %v1036, %v1965
    %v2030 = vadd.f32 %v1082, %v1966
    %v2031 = vadd.f32 %v1085, %v1967
    %v2032 = vadd.f32 %v1131, %v1968
    %v2033 = vadd.f32 %v1134, %v1969
    %v2034 = vadd.f32 %v1180, %v1970
    %v2035 = vadd.f32 %v1183, %v1971
    %v2036 = vadd.f32 %v1229, %v1972
    %v2037 = vadd.f32 %v1232, %v1973
    %v2038 = vadd.f32 %v1278, %v1974
    %v2039 = vadd.f32 %v1281, %v1975
    %v2040 = vadd.f32 %v1327, %v1976
    %v2041 = vadd.f32 %v1330, %v1977
    %v2042 = vadd.f32 %v1376, %v1978
    %v2043 = vadd.f32 %v1379, %v1979
    %v2044 = vadd.f32 %v1425, %v1980
    %v2045 = vadd.f32 %v1428, %v1981
    %v2046 = vadd.f32 %v1474, %v1982
    %v2047 = vadd.f32 %v1477, %v1983
    %v2048 = vadd.f32 %v1523, %v1984
    %v2049 = vadd.f32 %v1526, %v1985
    %v2050 = vadd.f32 %v1572, %v1986
    %v2051 = vadd.f32 %v1575, %v1987
    %v2052 = vadd.f32 %v1621, %v1988
    %v2053 = vadd.f32 %v1624, %v1989
    %v2054 = vadd.f32 %v1670, %v1990
    %v2055 = vadd.f32 %v1673, %v1991
    %v2056 = vadd.f32 %v1719, %v1992
    %v2057 = vadd.f32 %v1722, %v1993
    %v2058 = vadd.f32 %v1768, %v1994
    %v2059 = vadd.f32 %v1771, %v1995
    %v2060 = vadd.f32 %v1817, %v1996
    %v2061 = vadd.f32 %v1820, %v1997
    %v2062 = vadd.f32 %v1866, %v1998
    %v2063 = vadd.f32 %v1869, %v1999
    %vm2064 = vcmask 130048
    %v2065 = vsel %vm2064, %v2000, -inf
    %2066 = vmax.xlane.f32.xlu0 %v2065
    %v2067 = vpop.xlane.xlu0 %2066
    %v2068 = vsel %vm2064, %v2001, -inf
    %2069 = vmax.xlane.f32.xlu0 %v2068
    %v2070 = vpop.xlane.xlu0 %2069
    %v2071 = vsel %vm2064, %v2002, -inf
    %2072 = vmax.xlane.f32.xlu0 %v2071
    %v2073 = vpop.xlane.xlu0 %2072
    %v2074 = vsel %vm2064, %v2003, -inf
    %2075 = vmax.xlane.f32.xlu0 %v2074
    %v2076 = vpop.xlane.xlu0 %2075
    %v2077 = vsel %vm2064, %v2004, -inf
    %2078 = vmax.xlane.f32.xlu0 %v2077
    %v2079 = vpop.xlane.xlu0 %2078
    %v2080 = vsel %vm2064, %v2005, -inf
    %2081 = vmax.xlane.f32.xlu0 %v2080
    %v2082 = vpop.xlane.xlu0 %2081
    %v2083 = vsel %vm2064, %v2006, -inf
    %2084 = vmax.xlane.f32.xlu0 %v2083
    %v2085 = vpop.xlane.xlu0 %2084
    %v2086 = vsel %vm2064, %v2007, -inf
    %2087 = vmax.xlane.f32.xlu0 %v2086
    %v2088 = vpop.xlane.xlu0 %2087
    %v2089 = vsel %vm2064, %v2008, -inf
    %2090 = vmax.xlane.f32.xlu0 %v2089
    %v2091 = vpop.xlane.xlu0 %2090
    %v2092 = vsel %vm2064, %v2009, -inf
    %2093 = vmax.xlane.f32.xlu0 %v2092
    %v2094 = vpop.xlane.xlu0 %2093
    %v2095 = vsel %vm2064, %v2010, -inf
    %2096 = vmax.xlane.f32.xlu0 %v2095
    %v2097 = vpop.xlane.xlu0 %2096
    %v2098 = vsel %vm2064, %v2011, -inf
    %2099 = vmax.xlane.f32.xlu0 %v2098
    %v2100 = vpop.xlane.xlu0 %2099
    %v2101 = vsel %vm2064, %v2012, -inf
    %2102 = vmax.xlane.f32.xlu0 %v2101
    %v2103 = vpop.xlane.xlu0 %2102
    %v2104 = vsel %vm2064, %v2013, -inf
    %2105 = vmax.xlane.f32.xlu0 %v2104
    %v2106 = vpop.xlane.xlu0 %2105
    %v2107 = vsel %vm2064, %v2014, -inf
    %2108 = vmax.xlane.f32.xlu0 %v2107
    %v2109 = vpop.xlane.xlu0 %2108
    %v2110 = vsel %vm2064, %v2015, -inf
    %2111 = vmax.xlane.f32.xlu0 %v2110
    %v2112 = vpop.xlane.xlu0 %2111
    %v2113 = vsel %vm2064, %v2016, -inf
    %2114 = vmax.xlane.f32.xlu0 %v2113
    %v2115 = vpop.xlane.xlu0 %2114
    %v2116 = vsel %vm2064, %v2017, -inf
    %2117 = vmax.xlane.f32.xlu0 %v2116
    %v2118 = vpop.xlane.xlu0 %2117
    %v2119 = vsel %vm2064, %v2018, -inf
    %2120 = vmax.xlane.f32.xlu0 %v2119
    %v2121 = vpop.xlane.xlu0 %2120
    %v2122 = vsel %vm2064, %v2019, -inf
    %2123 = vmax.xlane.f32.xlu0 %v2122
    %v2124 = vpop.xlane.xlu0 %2123
    %v2125 = vsel %vm2064, %v2020, -inf
    %2126 = vmax.xlane.f32.xlu0 %v2125
    %v2127 = vpop.xlane.xlu0 %2126
    %v2128 = vsel %vm2064, %v2021, -inf
    %2129 = vmax.xlane.f32.xlu0 %v2128
    %v2130 = vpop.xlane.xlu0 %2129
    %v2131 = vsel %vm2064, %v2022, -inf
    %2132 = vmax.xlane.f32.xlu0 %v2131
    %v2133 = vpop.xlane.xlu0 %2132
    %v2134 = vsel %vm2064, %v2023, -inf
    %2135 = vmax.xlane.f32.xlu0 %v2134
    %v2136 = vpop.xlane.xlu0 %2135
    %v2137 = vsel %vm2064, %v2024, -inf
    %2138 = vmax.xlane.f32.xlu0 %v2137
    %v2139 = vpop.xlane.xlu0 %2138
    %v2140 = vsel %vm2064, %v2025, -inf
    %2141 = vmax.xlane.f32.xlu0 %v2140
    %v2142 = vpop.xlane.xlu0 %2141
    %v2143 = vsel %vm2064, %v2026, -inf
    %2144 = vmax.xlane.f32.xlu0 %v2143
    %v2145 = vpop.xlane.xlu0 %2144
    %v2146 = vsel %vm2064, %v2027, -inf
    %2147 = vmax.xlane.f32.xlu0 %v2146
    %v2148 = vpop.xlane.xlu0 %2147
    %v2149 = vsel %vm2064, %v2028, -inf
    %2150 = vmax.xlane.f32.xlu0 %v2149
    %v2151 = vpop.xlane.xlu0 %2150
    %v2152 = vsel %vm2064, %v2029, -inf
    %2153 = vmax.xlane.f32.xlu0 %v2152
    %v2154 = vpop.xlane.xlu0 %2153
    %v2155 = vsel %vm2064, %v2030, -inf
    %2156 = vmax.xlane.f32.xlu0 %v2155
    %v2157 = vpop.xlane.xlu0 %2156
    %v2158 = vsel %vm2064, %v2031, -inf
    %2159 = vmax.xlane.f32.xlu0 %v2158
    %v2160 = vpop.xlane.xlu0 %2159
    %v2161 = vsel %vm2064, %v2032, -inf
    %2162 = vmax.xlane.f32.xlu0 %v2161
    %v2163 = vpop.xlane.xlu0 %2162
    %v2164 = vsel %vm2064, %v2033, -inf
    %2165 = vmax.xlane.f32.xlu0 %v2164
    %v2166 = vpop.xlane.xlu0 %2165
    %v2167 = vsel %vm2064, %v2034, -inf
    %2168 = vmax.xlane.f32.xlu0 %v2167
    %v2169 = vpop.xlane.xlu0 %2168
    %v2170 = vsel %vm2064, %v2035, -inf
    %2171 = vmax.xlane.f32.xlu0 %v2170
    %v2172 = vpop.xlane.xlu0 %2171
    %v2173 = vsel %vm2064, %v2036, -inf
    %2174 = vmax.xlane.f32.xlu0 %v2173
    %v2175 = vpop.xlane.xlu0 %2174
    %v2176 = vsel %vm2064, %v2037, -inf
    %2177 = vmax.xlane.f32.xlu0 %v2176
    %v2178 = vpop.xlane.xlu0 %2177
    %v2179 = vsel %vm2064, %v2038, -inf
    %2180 = vmax.xlane.f32.xlu0 %v2179
    %v2181 = vpop.xlane.xlu0 %2180
    %v2182 = vsel %vm2064, %v2039, -inf
    %2183 = vmax.xlane.f32.xlu0 %v2182
    %v2184 = vpop.xlane.xlu0 %2183
    %v2185 = vsel %vm2064, %v2040, -inf
    %2186 = vmax.xlane.f32.xlu0 %v2185
    %v2187 = vpop.xlane.xlu0 %2186
    %v2188 = vsel %vm2064, %v2041, -inf
    %2189 = vmax.xlane.f32.xlu0 %v2188
    %v2190 = vpop.xlane.xlu0 %2189
    %v2191 = vsel %vm2064, %v2042, -inf
    %2192 = vmax.xlane.f32.xlu0 %v2191
    %v2193 = vpop.xlane.xlu0 %2192
    %v2194 = vsel %vm2064, %v2043, -inf
    %2195 = vmax.xlane.f32.xlu0 %v2194
    %v2196 = vpop.xlane.xlu0 %2195
    %v2197 = vsel %vm2064, %v2044, -inf
    %2198 = vmax.xlane.f32.xlu0 %v2197
    %v2199 = vpop.xlane.xlu0 %2198
    %v2200 = vsel %vm2064, %v2045, -inf
    %2201 = vmax.xlane.f32.xlu0 %v2200
    %v2202 = vpop.xlane.xlu0 %2201
    %v2203 = vsel %vm2064, %v2046, -inf
    %2204 = vmax.xlane.f32.xlu0 %v2203
    %v2205 = vpop.xlane.xlu0 %2204
    %v2206 = vsel %vm2064, %v2047, -inf
    %2207 = vmax.xlane.f32.xlu0 %v2206
    %v2208 = vpop.xlane.xlu0 %2207
    %v2209 = vsel %vm2064, %v2048, -inf
    %2210 = vmax.xlane.f32.xlu0 %v2209
    %v2211 = vpop.xlane.xlu0 %2210
    %v2212 = vsel %vm2064, %v2049, -inf
    %2213 = vmax.xlane.f32.xlu0 %v2212
    %v2214 = vpop.xlane.xlu0 %2213
    %v2215 = vsel %vm2064, %v2050, -inf
    %2216 = vmax.xlane.f32.xlu0 %v2215
    %v2217 = vpop.xlane.xlu0 %2216
    %v2218 = vsel %vm2064, %v2051, -inf
    %2219 = vmax.xlane.f32.xlu0 %v2218
    %v2220 = vpop.xlane.xlu0 %2219
    %v2221 = vsel %vm2064, %v2052, -inf
    %2222 = vmax.xlane.f32.xlu0 %v2221
    %v2223 = vpop.xlane.xlu0 %2222
    %v2224 = vsel %vm2064, %v2053, -inf
    %2225 = vmax.xlane.f32.xlu0 %v2224
    %v2226 = vpop.xlane.xlu0 %2225
    %v2227 = vsel %vm2064, %v2054, -inf
    %2228 = vmax.xlane.f32.xlu0 %v2227
    %v2229 = vpop.xlane.xlu0 %2228
    %v2230 = vsel %vm2064, %v2055, -inf
    %2231 = vmax.xlane.f32.xlu0 %v2230
    %v2232 = vpop.xlane.xlu0 %2231
    %v2233 = vsel %vm2064, %v2056, -inf
    %2234 = vmax.xlane.f32.xlu0 %v2233
    %v2235 = vpop.xlane.xlu0 %2234
    %v2236 = vsel %vm2064, %v2057, -inf
    %2237 = vmax.xlane.f32.xlu0 %v2236
    %v2238 = vpop.xlane.xlu0 %2237
    %v2239 = vsel %vm2064, %v2058, -inf
    %2240 = vmax.xlane.f32.xlu0 %v2239
    %v2241 = vpop.xlane.xlu0 %2240
    %v2242 = vsel %vm2064, %v2059, -inf
    %2243 = vmax.xlane.f32.xlu0 %v2242
    %v2244 = vpop.xlane.xlu0 %2243
    %v2245 = vsel %vm2064, %v2060, -inf
    %2246 = vmax.xlane.f32.xlu0 %v2245
    %v2247 = vpop.xlane.xlu0 %2246
    %v2248 = vsel %vm2064, %v2061, -inf
    %2249 = vmax.xlane.f32.xlu0 %v2248
    %v2250 = vpop.xlane.xlu0 %2249
    %v2251 = vsel %vm2064, %v2062, -inf
    %2252 = vmax.xlane.f32.xlu0 %v2251
    %v2253 = vpop.xlane.xlu0 %2252
    %v2254 = vsel %vm2064, %v2063, -inf
    %2255 = vmax.xlane.f32.xlu0 %v2254
    %v2256 = vpop.xlane.xlu0 %2255
    %v2257 = vsub.f32 %v2000, %v2067
    %v2258 = vsub.f32 %v2001, %v2070
    %v2259 = vsub.f32 %v2002, %v2073
    %v2260 = vsub.f32 %v2003, %v2076
    %v2261 = vsub.f32 %v2004, %v2079
    %v2262 = vsub.f32 %v2005, %v2082
    %v2263 = vsub.f32 %v2006, %v2085
    %v2264 = vsub.f32 %v2007, %v2088
    %v2265 = vsub.f32 %v2008, %v2091
    %v2266 = vsub.f32 %v2009, %v2094
    %v2267 = vsub.f32 %v2010, %v2097
    %v2268 = vsub.f32 %v2011, %v2100
    %v2269 = vsub.f32 %v2012, %v2103
    %v2270 = vsub.f32 %v2013, %v2106
    %v2271 = vsub.f32 %v2014, %v2109
    %v2272 = vsub.f32 %v2015, %v2112
    %v2273 = vsub.f32 %v2016, %v2115
    %v2274 = vsub.f32 %v2017, %v2118
    %v2275 = vsub.f32 %v2018, %v2121
    %v2276 = vsub.f32 %v2019, %v2124
    %v2277 = vsub.f32 %v2020, %v2127
    %v2278 = vsub.f32 %v2021, %v2130
    %v2279 = vsub.f32 %v2022, %v2133
    %v2280 = vsub.f32 %v2023, %v2136
    %v2281 = vsub.f32 %v2024, %v2139
    %v2282 = vsub.f32 %v2025, %v2142
    %v2283 = vsub.f32 %v2026, %v2145
    %v2284 = vsub.f32 %v2027, %v2148
    %v2285 = vsub.f32 %v2028, %v2151
    %v2286 = vsub.f32 %v2029, %v2154
    %v2287 = vsub.f32 %v2030, %v2157
    %v2288 = vsub.f32 %v2031, %v2160
    %v2289 = vsub.f32 %v2032, %v2163
    %v2290 = vsub.f32 %v2033, %v2166
    %v2291 = vsub.f32 %v2034, %v2169
    %v2292 = vsub.f32 %v2035, %v2172
    %v2293 = vsub.f32 %v2036, %v2175
    %v2294 = vsub.f32 %v2037, %v2178
    %v2295 = vsub.f32 %v2038, %v2181
    %v2296 = vsub.f32 %v2039, %v2184
    %v2297 = vsub.f32 %v2040, %v2187
    %v2298 = vsub.f32 %v2041, %v2190
    %v2299 = vsub.f32 %v2042, %v2193
    %v2300 = vsub.f32 %v2043, %v2196
    %v2301 = vsub.f32 %v2044, %v2199
    %v2302 = vsub.f32 %v2045, %v2202
    %v2303 = vsub.f32 %v2046, %v2205
    %v2304 = vsub.f32 %v2047, %v2208
    %v2305 = vsub.f32 %v2048, %v2211
    %v2306 = vsub.f32 %v2049, %v2214
    %v2307 = vsub.f32 %v2050, %v2217
    %v2308 = vsub.f32 %v2051, %v2220
    %v2309 = vsub.f32 %v2052, %v2223
    %v2310 = vsub.f32 %v2053, %v2226
    %v2311 = vsub.f32 %v2054, %v2229
    %v2312 = vsub.f32 %v2055, %v2232
    %v2313 = vsub.f32 %v2056, %v2235
    %v2314 = vsub.f32 %v2057, %v2238
    %v2315 = vsub.f32 %v2058, %v2241
    %v2316 = vsub.f32 %v2059, %v2244
    %v2317 = vsub.f32 %v2060, %v2247
    %v2318 = vsub.f32 %v2061, %v2250
    %v2319 = vsub.f32 %v2062, %v2253
    %v2320 = vsub.f32 %v2063, %v2256
    %v2321 = vmul.f32 %v2257, 1.442695
    %v2322 = vpow.pop %v2321
    %v2323 = vmul.f32 %v2258, 1.442695
    %v2324 = vpow.pop %v2323
    %v2325 = vmul.f32 %v2259, 1.442695
    %v2326 = vpow.pop %v2325
    %v2327 = vmul.f32 %v2260, 1.442695
    %v2328 = vpow.pop %v2327
    %v2329 = vmul.f32 %v2261, 1.442695
    %v2330 = vpow.pop %v2329
    %v2331 = vmul.f32 %v2262, 1.442695
    %v2332 = vpow.pop %v2331
    %v2333 = vmul.f32 %v2263, 1.442695
    %v2334 = vpow.pop %v2333
    %v2335 = vmul.f32 %v2264, 1.442695
    %v2336 = vpow.pop %v2335
    %v2337 = vmul.f32 %v2265, 1.442695
    %v2338 = vpow.pop %v2337
    %v2339 = vmul.f32 %v2266, 1.442695
    %v2340 = vpow.pop %v2339
    %v2341 = vmul.f32 %v2267, 1.442695
    %v2342 = vpow.pop %v2341
    %v2343 = vmul.f32 %v2268, 1.442695
    %v2344 = vpow.pop %v2343
    %v2345 = vmul.f32 %v2269, 1.442695
    %v2346 = vpow.pop %v2345
    %v2347 = vmul.f32 %v2270, 1.442695
    %v2348 = vpow.pop %v2347
    %v2349 = vmul.f32 %v2271, 1.442695
    %v2350 = vpow.pop %v2349
    %v2351 = vmul.f32 %v2272, 1.442695
    %v2352 = vpow.pop %v2351
    %v2353 = vmul.f32 %v2273, 1.442695
    %v2354 = vpow.pop %v2353
    %v2355 = vmul.f32 %v2274, 1.442695
    %v2356 = vpow.pop %v2355
    %v2357 = vmul.f32 %v2275, 1.442695
    %v2358 = vpow.pop %v2357
    %v2359 = vmul.f32 %v2276, 1.442695
    %v2360 = vpow.pop %v2359
    %v2361 = vmul.f32 %v2277, 1.442695
    %v2362 = vpow.pop %v2361
    %v2363 = vmul.f32 %v2278, 1.442695
    %v2364 = vpow.pop %v2363
    %v2365 = vmul.f32 %v2279, 1.442695
    %v2366 = vpow.pop %v2365
    %v2367 = vmul.f32 %v2280, 1.442695
    %v2368 = vpow.pop %v2367
    %v2369 = vmul.f32 %v2281, 1.442695
    %v2370 = vpow.pop %v2369
    %v2371 = vmul.f32 %v2282, 1.442695
    %v2372 = vpow.pop %v2371
    %v2373 = vmul.f32 %v2283, 1.442695
    %v2374 = vpow.pop %v2373
    %v2375 = vmul.f32 %v2284, 1.442695
    %v2376 = vpow.pop %v2375
    %v2377 = vmul.f32 %v2285, 1.442695
    %v2378 = vpow.pop %v2377
    %v2379 = vmul.f32 %v2286, 1.442695
    %v2380 = vpow.pop %v2379
    %v2381 = vmul.f32 %v2287, 1.442695
    %v2382 = vpow.pop %v2381
    %v2383 = vmul.f32 %v2288, 1.442695
    %v2384 = vpow.pop %v2383
    %v2385 = vmul.f32 %v2289, 1.442695
    %v2386 = vpow.pop %v2385
    %v2387 = vmul.f32 %v2290, 1.442695
    %v2388 = vpow.pop %v2387
    %v2389 = vmul.f32 %v2291, 1.442695
    %v2390 = vpow.pop %v2389
    %v2391 = vmul.f32 %v2292, 1.442695
    %v2392 = vpow.pop %v2391
    %v2393 = vmul.f32 %v2293, 1.442695
    %v2394 = vpow.pop %v2393
    %v2395 = vmul.f32 %v2294, 1.442695
    %v2396 = vpow.pop %v2395
    %v2397 = vmul.f32 %v2295, 1.442695
    %v2398 = vpow.pop %v2397
    %v2399 = vmul.f32 %v2296, 1.442695
    %v2400 = vpow.pop %v2399
    %v2401 = vmul.f32 %v2297, 1.442695
    %v2402 = vpow.pop %v2401
    %v2403 = vmul.f32 %v2298, 1.442695
    %v2404 = vpow.pop %v2403
    %v2405 = vmul.f32 %v2299, 1.442695
    %v2406 = vpow.pop %v2405
    %v2407 = vmul.f32 %v2300, 1.442695
    %v2408 = vpow.pop %v2407
    %v2409 = vmul.f32 %v2301, 1.442695
    %v2410 = vpow.pop %v2409
    %v2411 = vmul.f32 %v2302, 1.442695
    %v2412 = vpow.pop %v2411
    %v2413 = vmul.f32 %v2303, 1.442695
    %v2414 = vpow.pop %v2413
    %v2415 = vmul.f32 %v2304, 1.442695
    %v2416 = vpow.pop %v2415
    %v2417 = vmul.f32 %v2305, 1.442695
    %v2418 = vpow.pop %v2417
    %v2419 = vmul.f32 %v2306, 1.442695
    %v2420 = vpow.pop %v2419
    %v2421 = vmul.f32 %v2307, 1.442695
    %v2422 = vpow.pop %v2421
    %v2423 = vmul.f32 %v2308, 1.442695
    %v2424 = vpow.pop %v2423
    %v2425 = vmul.f32 %v2309, 1.442695
    %v2426 = vpow.pop %v2425
    %v2427 = vmul.f32 %v2310, 1.442695
    %v2428 = vpow.pop %v2427
    %v2429 = vmul.f32 %v2311, 1.442695
    %v2430 = vpow.pop %v2429
    %v2431 = vmul.f32 %v2312, 1.442695
    %v2432 = vpow.pop %v2431
    %v2433 = vmul.f32 %v2313, 1.442695
    %v2434 = vpow.pop %v2433
    %v2435 = vmul.f32 %v2314, 1.442695
    %v2436 = vpow.pop %v2435
    %v2437 = vmul.f32 %v2315, 1.442695
    %v2438 = vpow.pop %v2437
    %v2439 = vmul.f32 %v2316, 1.442695
    %v2440 = vpow.pop %v2439
    %v2441 = vmul.f32 %v2317, 1.442695
    %v2442 = vpow.pop %v2441
    %v2443 = vmul.f32 %v2318, 1.442695
    %v2444 = vpow.pop %v2443
    %v2445 = vmul.f32 %v2319, 1.442695
    %v2446 = vpow.pop %v2445
    %v2447 = vmul.f32 %v2320, 1.442695
    %v2448 = vpow.pop %v2447
    %v2449 = vsel %vm2064, %v2322, 0.0
    %2450 = vadd.xlane.f32.xlu0 %v2449
    %v2451 = vpop.xlane.xlu0 %2450
    %v2452 = vsel %vm2064, %v2324, 0.0
    %2453 = vadd.xlane.f32.xlu0 %v2452
    %v2454 = vpop.xlane.xlu0 %2453
    %v2455 = vsel %vm2064, %v2326, 0.0
    %2456 = vadd.xlane.f32.xlu0 %v2455
    %v2457 = vpop.xlane.xlu0 %2456
    %v2458 = vsel %vm2064, %v2328, 0.0
    %2459 = vadd.xlane.f32.xlu0 %v2458
    %v2460 = vpop.xlane.xlu0 %2459
    %v2461 = vsel %vm2064, %v2330, 0.0
    %2462 = vadd.xlane.f32.xlu0 %v2461
    %v2463 = vpop.xlane.xlu0 %2462
    %v2464 = vsel %vm2064, %v2332, 0.0
    %2465 = vadd.xlane.f32.xlu0 %v2464
    %v2466 = vpop.xlane.xlu0 %2465
    %v2467 = vsel %vm2064, %v2334, 0.0
    %2468 = vadd.xlane.f32.xlu0 %v2467
    %v2469 = vpop.xlane.xlu0 %2468
    %v2470 = vsel %vm2064, %v2336, 0.0
    %2471 = vadd.xlane.f32.xlu0 %v2470
    %v2472 = vpop.xlane.xlu0 %2471
    %v2473 = vsel %vm2064, %v2338, 0.0
    %2474 = vadd.xlane.f32.xlu0 %v2473
    %v2475 = vpop.xlane.xlu0 %2474
    %v2476 = vsel %vm2064, %v2340, 0.0
    %2477 = vadd.xlane.f32.xlu0 %v2476
    %v2478 = vpop.xlane.xlu0 %2477
    %v2479 = vsel %vm2064, %v2342, 0.0
    %2480 = vadd.xlane.f32.xlu0 %v2479
    %v2481 = vpop.xlane.xlu0 %2480
    %v2482 = vsel %vm2064, %v2344, 0.0
    %2483 = vadd.xlane.f32.xlu0 %v2482
    %v2484 = vpop.xlane.xlu0 %2483
    %v2485 = vsel %vm2064, %v2346, 0.0
    %2486 = vadd.xlane.f32.xlu0 %v2485
    %v2487 = vpop.xlane.xlu0 %2486
    %v2488 = vsel %vm2064, %v2348, 0.0
    %2489 = vadd.xlane.f32.xlu0 %v2488
    %v2490 = vpop.xlane.xlu0 %2489
    %v2491 = vsel %vm2064, %v2350, 0.0
    %2492 = vadd.xlane.f32.xlu0 %v2491
    %v2493 = vpop.xlane.xlu0 %2492
    %v2494 = vsel %vm2064, %v2352, 0.0
    %2495 = vadd.xlane.f32.xlu0 %v2494
    %v2496 = vpop.xlane.xlu0 %2495
    %v2497 = vsel %vm2064, %v2354, 0.0
    %2498 = vadd.xlane.f32.xlu0 %v2497
    %v2499 = vpop.xlane.xlu0 %2498
    %v2500 = vsel %vm2064, %v2356, 0.0
    %2501 = vadd.xlane.f32.xlu0 %v2500
    %v2502 = vpop.xlane.xlu0 %2501
    %v2503 = vsel %vm2064, %v2358, 0.0
    %2504 = vadd.xlane.f32.xlu0 %v2503
    %v2505 = vpop.xlane.xlu0 %2504
    %v2506 = vsel %vm2064, %v2360, 0.0
    %2507 = vadd.xlane.f32.xlu0 %v2506
    %v2508 = vpop.xlane.xlu0 %2507
    %v2509 = vsel %vm2064, %v2362, 0.0
    %2510 = vadd.xlane.f32.xlu0 %v2509
    %v2511 = vpop.xlane.xlu0 %2510
    %v2512 = vsel %vm2064, %v2364, 0.0
    %2513 = vadd.xlane.f32.xlu0 %v2512
    %v2514 = vpop.xlane.xlu0 %2513
    %v2515 = vsel %vm2064, %v2366, 0.0
    %2516 = vadd.xlane.f32.xlu0 %v2515
    %v2517 = vpop.xlane.xlu0 %2516
    %v2518 = vsel %vm2064, %v2368, 0.0
    %2519 = vadd.xlane.f32.xlu0 %v2518
    %v2520 = vpop.xlane.xlu0 %2519
    %v2521 = vsel %vm2064, %v2370, 0.0
    %2522 = vadd.xlane.f32.xlu0 %v2521
    %v2523 = vpop.xlane.xlu0 %2522
    %v2524 = vsel %vm2064, %v2372, 0.0
    %2525 = vadd.xlane.f32.xlu0 %v2524
    %v2526 = vpop.xlane.xlu0 %2525
    %v2527 = vsel %vm2064, %v2374, 0.0
    %2528 = vadd.xlane.f32.xlu0 %v2527
    %v2529 = vpop.xlane.xlu0 %2528
    %v2530 = vsel %vm2064, %v2376, 0.0
    %2531 = vadd.xlane.f32.xlu0 %v2530
    %v2532 = vpop.xlane.xlu0 %2531
    %v2533 = vsel %vm2064, %v2378, 0.0
    %2534 = vadd.xlane.f32.xlu0 %v2533
    %v2535 = vpop.xlane.xlu0 %2534
    %v2536 = vsel %vm2064, %v2380, 0.0
    %2537 = vadd.xlane.f32.xlu0 %v2536
    %v2538 = vpop.xlane.xlu0 %2537
    %v2539 = vsel %vm2064, %v2382, 0.0
    %2540 = vadd.xlane.f32.xlu0 %v2539
    %v2541 = vpop.xlane.xlu0 %2540
    %v2542 = vsel %vm2064, %v2384, 0.0
    %2543 = vadd.xlane.f32.xlu0 %v2542
    %v2544 = vpop.xlane.xlu0 %2543
    %v2545 = vsel %vm2064, %v2386, 0.0
    %2546 = vadd.xlane.f32.xlu0 %v2545
    %v2547 = vpop.xlane.xlu0 %2546
    %v2548 = vsel %vm2064, %v2388, 0.0
    %2549 = vadd.xlane.f32.xlu0 %v2548
    %v2550 = vpop.xlane.xlu0 %2549
    %v2551 = vsel %vm2064, %v2390, 0.0
    %2552 = vadd.xlane.f32.xlu0 %v2551
    %v2553 = vpop.xlane.xlu0 %2552
    %v2554 = vsel %vm2064, %v2392, 0.0
    %2555 = vadd.xlane.f32.xlu0 %v2554
    %v2556 = vpop.xlane.xlu0 %2555
    %v2557 = vsel %vm2064, %v2394, 0.0
    %2558 = vadd.xlane.f32.xlu0 %v2557
    %v2559 = vpop.xlane.xlu0 %2558
    %v2560 = vsel %vm2064, %v2396, 0.0
    %2561 = vadd.xlane.f32.xlu0 %v2560
    %v2562 = vpop.xlane.xlu0 %2561
    %v2563 = vsel %vm2064, %v2398, 0.0
    %2564 = vadd.xlane.f32.xlu0 %v2563
    %v2565 = vpop.xlane.xlu0 %2564
    %v2566 = vsel %vm2064, %v2400, 0.0
    %2567 = vadd.xlane.f32.xlu0 %v2566
    %v2568 = vpop.xlane.xlu0 %2567
    %v2569 = vsel %vm2064, %v2402, 0.0
    %2570 = vadd.xlane.f32.xlu0 %v2569
    %v2571 = vpop.xlane.xlu0 %2570
    %v2572 = vsel %vm2064, %v2404, 0.0
    %2573 = vadd.xlane.f32.xlu0 %v2572
    %v2574 = vpop.xlane.xlu0 %2573
    %v2575 = vsel %vm2064, %v2406, 0.0
    %2576 = vadd.xlane.f32.xlu0 %v2575
    %v2577 = vpop.xlane.xlu0 %2576
    %v2578 = vsel %vm2064, %v2408, 0.0
    %2579 = vadd.xlane.f32.xlu0 %v2578
    %v2580 = vpop.xlane.xlu0 %2579
    %v2581 = vsel %vm2064, %v2410, 0.0
    %2582 = vadd.xlane.f32.xlu0 %v2581
    %v2583 = vpop.xlane.xlu0 %2582
    %v2584 = vsel %vm2064, %v2412, 0.0
    %2585 = vadd.xlane.f32.xlu0 %v2584
    %v2586 = vpop.xlane.xlu0 %2585
    %v2587 = vsel %vm2064, %v2414, 0.0
    %2588 = vadd.xlane.f32.xlu0 %v2587
    %v2589 = vpop.xlane.xlu0 %2588
    %v2590 = vsel %vm2064, %v2416, 0.0
    %2591 = vadd.xlane.f32.xlu0 %v2590
    %v2592 = vpop.xlane.xlu0 %2591
    %v2593 = vsel %vm2064, %v2418, 0.0
    %2594 = vadd.xlane.f32.xlu0 %v2593
    %v2595 = vpop.xlane.xlu0 %2594
    %v2596 = vsel %vm2064, %v2420, 0.0
    %2597 = vadd.xlane.f32.xlu0 %v2596
    %v2598 = vpop.xlane.xlu0 %2597
    %v2599 = vsel %vm2064, %v2422, 0.0
    %2600 = vadd.xlane.f32.xlu0 %v2599
    %v2601 = vpop.xlane.xlu0 %2600
    %v2602 = vsel %vm2064, %v2424, 0.0
    %2603 = vadd.xlane.f32.xlu0 %v2602
    %v2604 = vpop.xlane.xlu0 %2603
    %v2605 = vsel %vm2064, %v2426, 0.0
    %2606 = vadd.xlane.f32.xlu0 %v2605
    %v2607 = vpop.xlane.xlu0 %2606
    %v2608 = vsel %vm2064, %v2428, 0.0
    %2609 = vadd.xlane.f32.xlu0 %v2608
    %v2610 = vpop.xlane.xlu0 %2609
    %v2611 = vsel %vm2064, %v2430, 0.0
    %2612 = vadd.xlane.f32.xlu0 %v2611
    %v2613 = vpop.xlane.xlu0 %2612
    %v2614 = vsel %vm2064, %v2432, 0.0
    %2615 = vadd.xlane.f32.xlu0 %v2614
    %v2616 = vpop.xlane.xlu0 %2615
    %v2617 = vsel %vm2064, %v2434, 0.0
    %2618 = vadd.xlane.f32.xlu0 %v2617
    %v2619 = vpop.xlane.xlu0 %2618
    %v2620 = vsel %vm2064, %v2436, 0.0
    %2621 = vadd.xlane.f32.xlu0 %v2620
    %v2622 = vpop.xlane.xlu0 %2621
    %v2623 = vsel %vm2064, %v2438, 0.0
    %2624 = vadd.xlane.f32.xlu0 %v2623
    %v2625 = vpop.xlane.xlu0 %2624
    %v2626 = vsel %vm2064, %v2440, 0.0
    %2627 = vadd.xlane.f32.xlu0 %v2626
    %v2628 = vpop.xlane.xlu0 %2627
    %v2629 = vsel %vm2064, %v2442, 0.0
    %2630 = vadd.xlane.f32.xlu0 %v2629
    %v2631 = vpop.xlane.xlu0 %2630
    %v2632 = vsel %vm2064, %v2444, 0.0
    %2633 = vadd.xlane.f32.xlu0 %v2632
    %v2634 = vpop.xlane.xlu0 %2633
    %v2635 = vsel %vm2064, %v2446, 0.0
    %2636 = vadd.xlane.f32.xlu0 %v2635
    %v2637 = vpop.xlane.xlu0 %2636
    %v2638 = vsel %vm2064, %v2448, 0.0
    %2639 = vadd.xlane.f32.xlu0 %v2638
    %v2640 = vpop.xlane.xlu0 %2639
    %v2641 = vrcp.pop %v2451
    %v2642 = vrcp.pop %v2454
    %v2643 = vrcp.pop %v2457
    %v2644 = vrcp.pop %v2460
    %v2645 = vrcp.pop %v2463
    %v2646 = vrcp.pop %v2466
    %v2647 = vrcp.pop %v2469
    %v2648 = vrcp.pop %v2472
    %v2649 = vrcp.pop %v2475
    %v2650 = vrcp.pop %v2478
    %v2651 = vrcp.pop %v2481
    %v2652 = vrcp.pop %v2484
    %v2653 = vrcp.pop %v2487
    %v2654 = vrcp.pop %v2490
    %v2655 = vrcp.pop %v2493
    %v2656 = vrcp.pop %v2496
    %v2657 = vrcp.pop %v2499
    %v2658 = vrcp.pop %v2502
    %v2659 = vrcp.pop %v2505
    %v2660 = vrcp.pop %v2508
    %v2661 = vrcp.pop %v2511
    %v2662 = vrcp.pop %v2514
    %v2663 = vrcp.pop %v2517
    %v2664 = vrcp.pop %v2520
    %v2665 = vrcp.pop %v2523
    %v2666 = vrcp.pop %v2526
    %v2667 = vrcp.pop %v2529
    %v2668 = vrcp.pop %v2532
    %v2669 = vrcp.pop %v2535
    %v2670 = vrcp.pop %v2538
    %v2671 = vrcp.pop %v2541
    %v2672 = vrcp.pop %v2544
    %v2673 = vrcp.pop %v2547
    %v2674 = vrcp.pop %v2550
    %v2675 = vrcp.pop %v2553
    %v2676 = vrcp.pop %v2556
    %v2677 = vrcp.pop %v2559
    %v2678 = vrcp.pop %v2562
    %v2679 = vrcp.pop %v2565
    %v2680 = vrcp.pop %v2568
    %v2681 = vrcp.pop %v2571
    %v2682 = vrcp.pop %v2574
    %v2683 = vrcp.pop %v2577
    %v2684 = vrcp.pop %v2580
    %v2685 = vrcp.pop %v2583
    %v2686 = vrcp.pop %v2586
    %v2687 = vrcp.pop %v2589
    %v2688 = vrcp.pop %v2592
    %v2689 = vrcp.pop %v2595
    %v2690 = vrcp.pop %v2598
    %v2691 = vrcp.pop %v2601
    %v2692 = vrcp.pop %v2604
    %v2693 = vrcp.pop %v2607
    %v2694 = vrcp.pop %v2610
    %v2695 = vrcp.pop %v2613
    %v2696 = vrcp.pop %v2616
    %v2697 = vrcp.pop %v2619
    %v2698 = vrcp.pop %v2622
    %v2699 = vrcp.pop %v2625
    %v2700 = vrcp.pop %v2628
    %v2701 = vrcp.pop %v2631
    %v2702 = vrcp.pop %v2634
    %v2703 = vrcp.pop %v2637
    %v2704 = vrcp.pop %v2640
    %v2705 = vmul.f32 %v2322, %v2641
    %v2706 = vmul.f32 %v2324, %v2642
    %v2707 = vmul.f32 %v2326, %v2643
    %v2708 = vmul.f32 %v2328, %v2644
    %v2709 = vmul.f32 %v2330, %v2645
    %v2710 = vmul.f32 %v2332, %v2646
    %v2711 = vmul.f32 %v2334, %v2647
    %v2712 = vmul.f32 %v2336, %v2648
    %v2713 = vmul.f32 %v2338, %v2649
    %v2714 = vmul.f32 %v2340, %v2650
    %v2715 = vmul.f32 %v2342, %v2651
    %v2716 = vmul.f32 %v2344, %v2652
    %v2717 = vmul.f32 %v2346, %v2653
    %v2718 = vmul.f32 %v2348, %v2654
    %v2719 = vmul.f32 %v2350, %v2655
    %v2720 = vmul.f32 %v2352, %v2656
    %v2721 = vmul.f32 %v2354, %v2657
    %v2722 = vmul.f32 %v2356, %v2658
    %v2723 = vmul.f32 %v2358, %v2659
    %v2724 = vmul.f32 %v2360, %v2660
    %v2725 = vmul.f32 %v2362, %v2661
    %v2726 = vmul.f32 %v2364, %v2662
    %v2727 = vmul.f32 %v2366, %v2663
    %v2728 = vmul.f32 %v2368, %v2664
    %v2729 = vmul.f32 %v2370, %v2665
    %v2730 = vmul.f32 %v2372, %v2666
    %v2731 = vmul.f32 %v2374, %v2667
    %v2732 = vmul.f32 %v2376, %v2668
    %v2733 = vmul.f32 %v2378, %v2669
    %v2734 = vmul.f32 %v2380, %v2670
    %v2735 = vmul.f32 %v2382, %v2671
    %v2736 = vmul.f32 %v2384, %v2672
    %v2737 = vmul.f32 %v2386, %v2673
    %v2738 = vmul.f32 %v2388, %v2674
    %v2739 = vmul.f32 %v2390, %v2675
    %v2740 = vmul.f32 %v2392, %v2676
    %v2741 = vmul.f32 %v2394, %v2677
    %v2742 = vmul.f32 %v2396, %v2678
    %v2743 = vmul.f32 %v2398, %v2679
    %v2744 = vmul.f32 %v2400, %v2680
    %v2745 = vmul.f32 %v2402, %v2681
    %v2746 = vmul.f32 %v2404, %v2682
    %v2747 = vmul.f32 %v2406, %v2683
    %v2748 = vmul.f32 %v2408, %v2684
    %v2749 = vmul.f32 %v2410, %v2685
    %v2750 = vmul.f32 %v2412, %v2686
    %v2751 = vmul.f32 %v2414, %v2687
    %v2752 = vmul.f32 %v2416, %v2688
    %v2753 = vmul.f32 %v2418, %v2689
    %v2754 = vmul.f32 %v2420, %v2690
    %v2755 = vmul.f32 %v2422, %v2691
    %v2756 = vmul.f32 %v2424, %v2692
    %v2757 = vmul.f32 %v2426, %v2693
    %v2758 = vmul.f32 %v2428, %v2694
    %v2759 = vmul.f32 %v2430, %v2695
    %v2760 = vmul.f32 %v2432, %v2696
    %v2761 = vmul.f32 %v2434, %v2697
    %v2762 = vmul.f32 %v2436, %v2698
    %v2763 = vmul.f32 %v2438, %v2699
    %v2764 = vmul.f32 %v2440, %v2700
    %v2765 = vmul.f32 %v2442, %v2701
    %v2766 = vmul.f32 %v2444, %v2702
    %v2767 = vmul.f32 %v2446, %v2703
    %v2768 = vmul.f32 %v2448, %v2704
    %v2769 = vpack.c.bf16 %v2706, %v2705
    %v2770 = vpack.c.bf16 %v2708, %v2707
    %v2771 = vpack.c.bf16 %v2710, %v2709
    %v2772 = vpack.c.bf16 %v2712, %v2711
    %v2773 = vpack.c.bf16 %v2714, %v2713
    %v2774 = vpack.c.bf16 %v2716, %v2715
    %v2775 = vpack.c.bf16 %v2718, %v2717
    %v2776 = vpack.c.bf16 %v2720, %v2719
    %v2777 = vpack.c.bf16 %v2722, %v2721
    %v2778 = vpack.c.bf16 %v2724, %v2723
    %v2779 = vpack.c.bf16 %v2726, %v2725
    %v2780 = vpack.c.bf16 %v2728, %v2727
    %v2781 = vpack.c.bf16 %v2730, %v2729
    %v2782 = vpack.c.bf16 %v2732, %v2731
    %v2783 = vpack.c.bf16 %v2734, %v2733
    %v2784 = vpack.c.bf16 %v2736, %v2735
    %v2785 = vpack.c.bf16 %v2738, %v2737
    %v2786 = vpack.c.bf16 %v2740, %v2739
    %v2787 = vpack.c.bf16 %v2742, %v2741
    %v2788 = vpack.c.bf16 %v2744, %v2743
    %v2789 = vpack.c.bf16 %v2746, %v2745
    %v2790 = vpack.c.bf16 %v2748, %v2747
    %v2791 = vpack.c.bf16 %v2750, %v2749
    %v2792 = vpack.c.bf16 %v2752, %v2751
    %v2793 = vpack.c.bf16 %v2754, %v2753
    %v2794 = vpack.c.bf16 %v2756, %v2755
    %v2795 = vpack.c.bf16 %v2758, %v2757
    %v2796 = vpack.c.bf16 %v2760, %v2759
    %v2797 = vpack.c.bf16 %v2762, %v2761
    %v2798 = vpack.c.bf16 %v2764, %v2763
    %v2799 = vpack.c.bf16 %v2766, %v2765
    %v2800 = vpack.c.bf16 %v2768, %v2767
    %2801 = vrot.lane.b32.xlu0 %v239, 64
    %v2802 = vpop.permute.xlu0 %2801
    %v2805 = vsel %vm2064, %v2769, 0
    %2807 = vmatprep.subr.bf16.mxu0 0
    %2808 = vmatpush1.bf16.msra.mxu0 %v2802
    %2809 = vmatprep.subr.bf16.mxu0 0
    %2810 = vmatpush1.bf16.msra.mxu0 0
    %2811 = vmatprep.subr.bf16.mxu0 0
    %2812 = vmatpush1.bf16.msra.mxu0 0
    %2813 = vmatprep.subr.bf16.mxu0 0
    %2814 = vmatpush1.bf16.msra.mxu0 0
    %2815 = vmatprep.subr.bf16.mxu0 0
    %2816 = vmatpush1.bf16.msra.mxu0 0
    %2817 = vmatprep.subr.bf16.mxu0 0
    %2818 = vmatpush1.bf16.msra.mxu0 0
    %2819 = vmatprep.subr.bf16.mxu0 0
    %2820 = vmatpush1.bf16.msra.mxu0 0
    %2821 = vmatprep.subr.bf16.mxu0 0
    %2822 = vmatpush1.bf16.msra.mxu0 0
    %2823 = vmatprep.subr.bf16.mxu0 0
    %2824 = vmatpush1.bf16.msra.mxu0 0
    %2825 = vmatprep.subr.bf16.mxu0 0
    %2826 = vmatpush1.bf16.msra.mxu0 0
    %2827 = vmatprep.subr.bf16.mxu0 0
    %2828 = vmatpush1.bf16.msra.mxu0 0
    %2829 = vmatprep.subr.bf16.mxu0 0
    %2830 = vmatpush1.bf16.msra.mxu0 0
    %2831 = vmatprep.subr.bf16.mxu0 0
    %2832 = vmatpush1.bf16.msra.mxu0 0
    %2833 = vmatprep.subr.bf16.mxu0 0
    %2834 = vmatpush1.bf16.msra.mxu0 0
    %2835 = vmatprep.subr.bf16.mxu0 0
    %2836 = vmatpush1.bf16.msra.mxu0 0
    %2837 = vmatprep.subr.bf16.mxu0 0
    %2838 = vmatpush1.bf16.msra.mxu0 0
    %2839 = vmatprep.mubr.bf16.mxu0 0
    %2840 = vmatmul.mubr.bf16.gmra.mrb[0].mxu0 %v2805
    %v2841 = vpop.f32.mrb[0].mxu0
    %v2842 = vadd.f32 0.0, %v2841
    %v2843 = vpop.f32.mrb[0].mxu0
    %v2844 = vpop.f32.mrb[0].mxu0
    %v2845 = vadd.f32 0.0, %v2844
    %v2846 = vpop.f32.mrb[0].mxu0
    %2847 = vdwg.mxu0
    %2848 = vrot.lane.b32.xlu0 %v240, 64
    %v2849 = vpop.permute.xlu0 %2848
    %v2852 = vsel %vm2064, %v2770, 0
    %2854 = vmatprep.subr.bf16.mxu0 0
    %2855 = vmatpush1.bf16.msra.mxu0 %v2849
    %2856 = vmatprep.subr.bf16.mxu0 0
    %2857 = vmatpush1.bf16.msra.mxu0 0
    %2858 = vmatprep.subr.bf16.mxu0 0
    %2859 = vmatpush1.bf16.msra.mxu0 0
    %2860 = vmatprep.subr.bf16.mxu0 0
    %2861 = vmatpush1.bf16.msra.mxu0 0
    %2862 = vmatprep.subr.bf16.mxu0 0
    %2863 = vmatpush1.bf16.msra.mxu0 0
    %2864 = vmatprep.subr.bf16.mxu0 0
    %2865 = vmatpush1.bf16.msra.mxu0 0
    %2866 = vmatprep.subr.bf16.mxu0 0
    %2867 = vmatpush1.bf16.msra.mxu0 0
    %2868 = vmatprep.subr.bf16.mxu0 0
    %2869 = vmatpush1.bf16.msra.mxu0 0
    %2870 = vmatprep.subr.bf16.mxu0 0
    %2871 = vmatpush1.bf16.msra.mxu0 0
    %2872 = vmatprep.subr.bf16.mxu0 0
    %2873 = vmatpush1.bf16.msra.mxu0 0
    %2874 = vmatprep.subr.bf16.mxu0 0
    %2875 = vmatpush1.bf16.msra.mxu0 0
    %2876 = vmatprep.subr.bf16.mxu0 0
    %2877 = vmatpush1.bf16.msra.mxu0 0
    %2878 = vmatprep.subr.bf16.mxu0 0
    %2879 = vmatpush1.bf16.msra.mxu0 0
    %2880 = vmatprep.subr.bf16.mxu0 0
    %2881 = vmatpush1.bf16.msra.mxu0 0
    %2882 = vmatprep.subr.bf16.mxu0 0
    %2883 = vmatpush1.bf16.msra.mxu0 0
    %2884 = vmatprep.subr.bf16.mxu0 0
    %2885 = vmatpush1.bf16.msra.mxu0 0
    %2886 = vmatprep.mubr.bf16.mxu0 0
    %2887 = vmatmul.mubr.bf16.gmra.mrb[0].mxu0 %v2852
    %v2888 = vpop.f32.mrb[0].mxu0
    %v2889 = vadd.f32 0.0, %v2888
    %v2890 = vpop.f32.mrb[0].mxu0
    %v2891 = vpop.f32.mrb[0].mxu0
    %v2892 = vadd.f32 0.0, %v2891
    %v2893 = vpop.f32.mrb[0].mxu0
    %2894 = vdwg.mxu0
    %2895 = vrot.lane.b32.xlu0 %v241, 64
    %v2896 = vpop.permute.xlu0 %2895
    %v2899 = vsel %vm2064, %v2771, 0
    %2901 = vmatprep.subr.bf16.mxu0 0
    %2902 = vmatpush1.bf16.msra.mxu0 %v2896
    %2903 = vmatprep.subr.bf16.mxu0 0
    %2904 = vmatpush1.bf16.msra.mxu0 0
    %2905 = vmatprep.subr.bf16.mxu0 0
    %2906 = vmatpush1.bf16.msra.mxu0 0
    %2907 = vmatprep.subr.bf16.mxu0 0
    %2908 = vmatpush1.bf16.msra.mxu0 0
    %2909 = vmatprep.subr.bf16.mxu0 0
    %2910 = vmatpush1.bf16.msra.mxu0 0
    %2911 = vmatprep.subr.bf16.mxu0 0
    %2912 = vmatpush1.bf16.msra.mxu0 0
    %2913 = vmatprep.subr.bf16.mxu0 0
    %2914 = vmatpush1.bf16.msra.mxu0 0
    %2915 = vmatprep.subr.bf16.mxu0 0
    %2916 = vmatpush1.bf16.msra.mxu0 0
    %2917 = vmatprep.subr.bf16.mxu0 0
    %2918 = vmatpush1.bf16.msra.mxu0 0
    %2919 = vmatprep.subr.bf16.mxu0 0
    %2920 = vmatpush1.bf16.msra.mxu0 0
    %2921 = vmatprep.subr.bf16.mxu0 0
    %2922 = vmatpush1.bf16.msra.mxu0 0
    %2923 = vmatprep.subr.bf16.mxu0 0
    %2924 = vmatpush1.bf16.msra.mxu0 0
    %2925 = vmatprep.subr.bf16.mxu0 0
    %2926 = vmatpush1.bf16.msra.mxu0 0
    %2927 = vmatprep.subr.bf16.mxu0 0
    %2928 = vmatpush1.bf16.msra.mxu0 0
    %2929 = vmatprep.subr.bf16.mxu0 0
    %2930 = vmatpush1.bf16.msra.mxu0 0
    %2931 = vmatprep.subr.bf16.mxu0 0
    %2932 = vmatpush1.bf16.msra.mxu0 0
    %2933 = vmatprep.mubr.bf16.mxu0 0
    %2934 = vmatmul.mubr.bf16.gmra.mrb[0].mxu0 %v2899
    %v2935 = vpop.f32.mrb[0].mxu0
    %v2936 = vadd.f32 0.0, %v2935
    %v2937 = vpop.f32.mrb[0].mxu0
    %v2938 = vpop.f32.mrb[0].mxu0
    %v2939 = vadd.f32 0.0, %v2938
    %v2940 = vpop.f32.mrb[0].mxu0
    %2941 = vdwg.mxu0
    %2942 = vrot.lane.b32.xlu0 %v242, 64
    %v2943 = vpop.permute.xlu0 %2942
    %v2946 = vsel %vm2064, %v2772, 0
    %2948 = vmatprep.subr.bf16.mxu0 0
    %2949 = vmatpush1.bf16.msra.mxu0 %v2943
    %2950 = vmatprep.subr.bf16.mxu0 0
    %2951 = vmatpush1.bf16.msra.mxu0 0
    %2952 = vmatprep.subr.bf16.mxu0 0
    %2953 = vmatpush1.bf16.msra.mxu0 0
    %2954 = vmatprep.subr.bf16.mxu0 0
    %2955 = vmatpush1.bf16.msra.mxu0 0
    %2956 = vmatprep.subr.bf16.mxu0 0
    %2957 = vmatpush1.bf16.msra.mxu0 0
    %2958 = vmatprep.subr.bf16.mxu0 0
    %2959 = vmatpush1.bf16.msra.mxu0 0
    %2960 = vmatprep.subr.bf16.mxu0 0
    %2961 = vmatpush1.bf16.msra.mxu0 0
    %2962 = vmatprep.subr.bf16.mxu0 0
    %2963 = vmatpush1.bf16.msra.mxu0 0
    %2964 = vmatprep.subr.bf16.mxu0 0
    %2965 = vmatpush1.bf16.msra.mxu0 0
    %2966 = vmatprep.subr.bf16.mxu0 0
    %2967 = vmatpush1.bf16.msra.mxu0 0
    %2968 = vmatprep.subr.bf16.mxu0 0
    %2969 = vmatpush1.bf16.msra.mxu0 0
    %2970 = vmatprep.subr.bf16.mxu0 0
    %2971 = vmatpush1.bf16.msra.mxu0 0
    %2972 = vmatprep.subr.bf16.mxu0 0
    %2973 = vmatpush1.bf16.msra.mxu0 0
    %2974 = vmatprep.subr.bf16.mxu0 0
    %2975 = vmatpush1.bf16.msra.mxu0 0
    %2976 = vmatprep.subr.bf16.mxu0 0
    %2977 = vmatpush1.bf16.msra.mxu0 0
    %2978 = vmatprep.subr.bf16.mxu0 0
    %2979 = vmatpush1.bf16.msra.mxu0 0
    %2980 = vmatprep.mubr.bf16.mxu0 0
    %2981 = vmatmul.mubr.bf16.gmra.mrb[0].mxu0 %v2946
    %v2982 = vpop.f32.mrb[0].mxu0
    %v2983 = vadd.f32 0.0, %v2982
    %v2984 = vpop.f32.mrb[0].mxu0
    %v2985 = vpop.f32.mrb[0].mxu0
    %v2986 = vadd.f32 0.0, %v2985
    %v2987 = vpop.f32.mrb[0].mxu0
    %2988 = vdwg.mxu0
    %2989 = vrot.lane.b32.xlu0 %v243, 64
    %v2990 = vpop.permute.xlu0 %2989
    %v2993 = vsel %vm2064, %v2773, 0
    %2995 = vmatprep.subr.bf16.mxu0 0
    %2996 = vmatpush1.bf16.msra.mxu0 %v2990
    %2997 = vmatprep.subr.bf16.mxu0 0
    %2998 = vmatpush1.bf16.msra.mxu0 0
    %2999 = vmatprep.subr.bf16.mxu0 0
    %3000 = vmatpush1.bf16.msra.mxu0 0
    %3001 = vmatprep.subr.bf16.mxu0 0
    %3002 = vmatpush1.bf16.msra.mxu0 0
    %3003 = vmatprep.subr.bf16.mxu0 0
    %3004 = vmatpush1.bf16.msra.mxu0 0
    %3005 = vmatprep.subr.bf16.mxu0 0
    %3006 = vmatpush1.bf16.msra.mxu0 0
    %3007 = vmatprep.subr.bf16.mxu0 0
    %3008 = vmatpush1.bf16.msra.mxu0 0
    %3009 = vmatprep.subr.bf16.mxu0 0
    %3010 = vmatpush1.bf16.msra.mxu0 0
    %3011 = vmatprep.subr.bf16.mxu0 0
    %3012 = vmatpush1.bf16.msra.mxu0 0
    %3013 = vmatprep.subr.bf16.mxu0 0
    %3014 = vmatpush1.bf16.msra.mxu0 0
    %3015 = vmatprep.subr.bf16.mxu0 0
    %3016 = vmatpush1.bf16.msra.mxu0 0
    %3017 = vmatprep.subr.bf16.mxu0 0
    %3018 = vmatpush1.bf16.msra.mxu0 0
    %3019 = vmatprep.subr.bf16.mxu0 0
    %3020 = vmatpush1.bf16.msra.mxu0 0
    %3021 = vmatprep.subr.bf16.mxu0 0
    %3022 = vmatpush1.bf16.msra.mxu0 0
    %3023 = vmatprep.subr.bf16.mxu0 0
    %3024 = vmatpush1.bf16.msra.mxu0 0
    %3025 = vmatprep.subr.bf16.mxu0 0
    %3026 = vmatpush1.bf16.msra.mxu0 0
    %3027 = vmatprep.mubr.bf16.mxu0 0
    %3028 = vmatmul.mubr.bf16.gmra.mrb[0].mxu0 %v2993
    %v3029 = vpop.f32.mrb[0].mxu0
    %v3030 = vadd.f32 0.0, %v3029
    %v3031 = vpop.f32.mrb[0].mxu0
    %v3032 = vpop.f32.mrb[0].mxu0
    %v3033 = vadd.f32 0.0, %v3032
    %v3034 = vpop.f32.mrb[0].mxu0
    %3035 = vdwg.mxu0
    %3036 = vrot.lane.b32.xlu0 %v244, 64
    %v3037 = vpop.permute.xlu0 %3036
    %v3040 = vsel %vm2064, %v2774, 0
    %3042 = vmatprep.subr.bf16.mxu0 0
    %3043 = vmatpush1.bf16.msra.mxu0 %v3037
    %3044 = vmatprep.subr.bf16.mxu0 0
    %3045 = vmatpush1.bf16.msra.mxu0 0
    %3046 = vmatprep.subr.bf16.mxu0 0
    %3047 = vmatpush1.bf16.msra.mxu0 0
    %3048 = vmatprep.subr.bf16.mxu0 0
    %3049 = vmatpush1.bf16.msra.mxu0 0
    %3050 = vmatprep.subr.bf16.mxu0 0
    %3051 = vmatpush1.bf16.msra.mxu0 0
    %3052 = vmatprep.subr.bf16.mxu0 0
    %3053 = vmatpush1.bf16.msra.mxu0 0
    %3054 = vmatprep.subr.bf16.mxu0 0
    %3055 = vmatpush1.bf16.msra.mxu0 0
    %3056 = vmatprep.subr.bf16.mxu0 0
    %3057 = vmatpush1.bf16.msra.mxu0 0
    %3058 = vmatprep.subr.bf16.mxu0 0
    %3059 = vmatpush1.bf16.msra.mxu0 0
    %3060 = vmatprep.subr.bf16.mxu0 0
    %3061 = vmatpush1.bf16.msra.mxu0 0
    %3062 = vmatprep.subr.bf16.mxu0 0
    %3063 = vmatpush1.bf16.msra.mxu0 0
    %3064 = vmatprep.subr.bf16.mxu0 0
    %3065 = vmatpush1.bf16.msra.mxu0 0
    %3066 = vmatprep.subr.bf16.mxu0 0
    %3067 = vmatpush1.bf16.msra.mxu0 0
    %3068 = vmatprep.subr.bf16.mxu0 0
    %3069 = vmatpush1.bf16.msra.mxu0 0
    %3070 = vmatprep.subr.bf16.mxu0 0
    %3071 = vmatpush1.bf16.msra.mxu0 0
    %3072 = vmatprep.subr.bf16.mxu0 0
    %3073 = vmatpush1.bf16.msra.mxu0 0
    %3074 = vmatprep.mubr.bf16.mxu0 0
    %3075 = vmatmul.mubr.bf16.gmra.mrb[0].mxu0 %v3040
    %v3076 = vpop.f32.mrb[0].mxu0
    %v3077 = vadd.f32 0.0, %v3076
    %v3078 = vpop.f32.mrb[0].mxu0
    %v3079 = vpop.f32.mrb[0].mxu0
    %v3080 = vadd.f32 0.0, %v3079
    %v3081 = vpop.f32.mrb[0].mxu0
    %3082 = vdwg.mxu0
    %3083 = vrot.lane.b32.xlu0 %v245, 64
    %v3084 = vpop.permute.xlu0 %3083
    %v3087 = vsel %vm2064, %v2775, 0
    %3089 = vmatprep.subr.bf16.mxu0 0
    %3090 = vmatpush1.bf16.msra.mxu0 %v3084
    %3091 = vmatprep.subr.bf16.mxu0 0
    %3092 = vmatpush1.bf16.msra.mxu0 0
    %3093 = vmatprep.subr.bf16.mxu0 0
    %3094 = vmatpush1.bf16.msra.mxu0 0
    %3095 = vmatprep.subr.bf16.mxu0 0
    %3096 = vmatpush1.bf16.msra.mxu0 0
    %3097 = vmatprep.subr.bf16.mxu0 0
    %3098 = vmatpush1.bf16.msra.mxu0 0
    %3099 = vmatprep.subr.bf16.mxu0 0
    %3100 = vmatpush1.bf16.msra.mxu0 0
    %3101 = vmatprep.subr.bf16.mxu0 0
    %3102 = vmatpush1.bf16.msra.mxu0 0
    %3103 = vmatprep.subr.bf16.mxu0 0
    %3104 = vmatpush1.bf16.msra.mxu0 0
    %3105 = vmatprep.subr.bf16.mxu0 0
    %3106 = vmatpush1.bf16.msra.mxu0 0
    %3107 = vmatprep.subr.bf16.mxu0 0
    %3108 = vmatpush1.bf16.msra.mxu0 0
    %3109 = vmatprep.subr.bf16.mxu0 0
    %3110 = vmatpush1.bf16.msra.mxu0 0
    %3111 = vmatprep.subr.bf16.mxu0 0
    %3112 = vmatpush1.bf16.msra.mxu0 0
    %3113 = vmatprep.subr.bf16.mxu0 0
    %3114 = vmatpush1.bf16.msra.mxu0 0
    %3115 = vmatprep.subr.bf16.mxu0 0
    %3116 = vmatpush1.bf16.msra.mxu0 0
    %3117 = vmatprep.subr.bf16.mxu0 0
    %3118 = vmatpush1.bf16.msra.mxu0 0
    %3119 = vmatprep.subr.bf16.mxu0 0
    %3120 = vmatpush1.bf16.msra.mxu0 0
    %3121 = vmatprep.mubr.bf16.mxu0 0
    %3122 = vmatmul.mubr.bf16.gmra.mrb[0].mxu0 %v3087
    %v3123 = vpop.f32.mrb[0].mxu0
    %v3124 = vadd.f32 0.0, %v3123
    %v3125 = vpop.f32.mrb[0].mxu0
    %v3126 = vpop.f32.mrb[0].mxu0
    %v3127 = vadd.f32 0.0, %v3126
    %v3128 = vpop.f32.mrb[0].mxu0
    %3129 = vdwg.mxu0
    %3130 = vrot.lane.b32.xlu0 %v246, 64
    %v3131 = vpop.permute.xlu0 %3130
    %v3134 = vsel %vm2064, %v2776, 0
    %3136 = vmatprep.subr.bf16.mxu0 0
    %3137 = vmatpush1.bf16.msra.mxu0 %v3131
    %3138 = vmatprep.subr.bf16.mxu0 0
    %3139 = vmatpush1.bf16.msra.mxu0 0
    %3140 = vmatprep.subr.bf16.mxu0 0
    %3141 = vmatpush1.bf16.msra.mxu0 0
    %3142 = vmatprep.subr.bf16.mxu0 0
    %3143 = vmatpush1.bf16.msra.mxu0 0
    %3144 = vmatprep.subr.bf16.mxu0 0
    %3145 = vmatpush1.bf16.msra.mxu0 0
    %3146 = vmatprep.subr.bf16.mxu0 0
    %3147 = vmatpush1.bf16.msra.mxu0 0
    %3148 = vmatprep.subr.bf16.mxu0 0
    %3149 = vmatpush1.bf16.msra.mxu0 0
    %3150 = vmatprep.subr.bf16.mxu0 0
    %3151 = vmatpush1.bf16.msra.mxu0 0
    %3152 = vmatprep.subr.bf16.mxu0 0
    %3153 = vmatpush1.bf16.msra.mxu0 0
    %3154 = vmatprep.subr.bf16.mxu0 0
    %3155 = vmatpush1.bf16.msra.mxu0 0
    %3156 = vmatprep.subr.bf16.mxu0 0
    %3157 = vmatpush1.bf16.msra.mxu0 0
    %3158 = vmatprep.subr.bf16.mxu0 0
    %3159 = vmatpush1.bf16.msra.mxu0 0
    %3160 = vmatprep.subr.bf16.mxu0 0
    %3161 = vmatpush1.bf16.msra.mxu0 0
    %3162 = vmatprep.subr.bf16.mxu0 0
    %3163 = vmatpush1.bf16.msra.mxu0 0
    %3164 = vmatprep.subr.bf16.mxu0 0
    %3165 = vmatpush1.bf16.msra.mxu0 0
    %3166 = vmatprep.subr.bf16.mxu0 0
    %3167 = vmatpush1.bf16.msra.mxu0 0
    %3168 = vmatprep.mubr.bf16.mxu0 0
    %3169 = vmatmul.mubr.bf16.gmra.mrb[0].mxu0 %v3134
    %v3170 = vpop.f32.mrb[0].mxu0
    %v3171 = vadd.f32 0.0, %v3170
    %v3172 = vpop.f32.mrb[0].mxu0
    %v3173 = vpop.f32.mrb[0].mxu0
    %v3174 = vadd.f32 0.0, %v3173
    %v3175 = vpop.f32.mrb[0].mxu0
    %3176 = vdwg.mxu0
    %3177 = vrot.lane.b32.xlu0 %v256, 64
    %v3178 = vpop.permute.xlu0 %3177
    %v3181 = vsel %vm2064, %v2777, 0
    %3183 = vmatprep.subr.bf16.mxu0 0
    %3184 = vmatpush1.bf16.msra.mxu0 %v3178
    %3185 = vmatprep.subr.bf16.mxu0 0
    %3186 = vmatpush1.bf16.msra.mxu0 0
    %3187 = vmatprep.subr.bf16.mxu0 0
    %3188 = vmatpush1.bf16.msra.mxu0 0
    %3189 = vmatprep.subr.bf16.mxu0 0
    %3190 = vmatpush1.bf16.msra.mxu0 0
    %3191 = vmatprep.subr.bf16.mxu0 0
    %3192 = vmatpush1.bf16.msra.mxu0 0
    %3193 = vmatprep.subr.bf16.mxu0 0
    %3194 = vmatpush1.bf16.msra.mxu0 0
    %3195 = vmatprep.subr.bf16.mxu0 0
    %3196 = vmatpush1.bf16.msra.mxu0 0
    %3197 = vmatprep.subr.bf16.mxu0 0
    %3198 = vmatpush1.bf16.msra.mxu0 0
    %3199 = vmatprep.subr.bf16.mxu0 0
    %3200 = vmatpush1.bf16.msra.mxu0 0
    %3201 = vmatprep.subr.bf16.mxu0 0
    %3202 = vmatpush1.bf16.msra.mxu0 0
    %3203 = vmatprep.subr.bf16.mxu0 0
    %3204 = vmatpush1.bf16.msra.mxu0 0
    %3205 = vmatprep.subr.bf16.mxu0 0
    %3206 = vmatpush1.bf16.msra.mxu0 0
    %3207 = vmatprep.subr.bf16.mxu0 0
    %3208 = vmatpush1.bf16.msra.mxu0 0
    %3209 = vmatprep.subr.bf16.mxu0 0
    %3210 = vmatpush1.bf16.msra.mxu0 0
    %3211 = vmatprep.subr.bf16.mxu0 0
    %3212 = vmatpush1.bf16.msra.mxu0 0
    %3213 = vmatprep.subr.bf16.mxu0 0
    %3214 = vmatpush1.bf16.msra.mxu0 0
    %3215 = vmatprep.mubr.bf16.mxu0 0
    %3216 = vmatmul.mubr.bf16.gmra.mrb[0].mxu0 %v3181
    %v3217 = vpop.f32.mrb[0].mxu0
    %v3218 = vadd.f32 0.0, %v3217
    %v3219 = vpop.f32.mrb[0].mxu0
    %v3220 = vpop.f32.mrb[0].mxu0
    %v3221 = vadd.f32 0.0, %v3220
    %v3222 = vpop.f32.mrb[0].mxu0
    %3223 = vdwg.mxu0
    %3224 = vrot.lane.b32.xlu0 %v258, 64
    %v3225 = vpop.permute.xlu0 %3224
    %v3228 = vsel %vm2064, %v2778, 0
    %3230 = vmatprep.subr.bf16.mxu0 0
    %3231 = vmatpush1.bf16.msra.mxu0 %v3225
    %3232 = vmatprep.subr.bf16.mxu0 0
    %3233 = vmatpush1.bf16.msra.mxu0 0
    %3234 = vmatprep.subr.bf16.mxu0 0
    %3235 = vmatpush1.bf16.msra.mxu0 0
    %3236 = vmatprep.subr.bf16.mxu0 0
    %3237 = vmatpush1.bf16.msra.mxu0 0
    %3238 = vmatprep.subr.bf16.mxu0 0
    %3239 = vmatpush1.bf16.msra.mxu0 0
    %3240 = vmatprep.subr.bf16.mxu0 0
    %3241 = vmatpush1.bf16.msra.mxu0 0
    %3242 = vmatprep.subr.bf16.mxu0 0
    %3243 = vmatpush1.bf16.msra.mxu0 0
    %3244 = vmatprep.subr.bf16.mxu0 0
    %3245 = vmatpush1.bf16.msra.mxu0 0
    %3246 = vmatprep.subr.bf16.mxu0 0
    %3247 = vmatpush1.bf16.msra.mxu0 0
    %3248 = vmatprep.subr.bf16.mxu0 0
    %3249 = vmatpush1.bf16.msra.mxu0 0
    %3250 = vmatprep.subr.bf16.mxu0 0
    %3251 = vmatpush1.bf16.msra.mxu0 0
    %3252 = vmatprep.subr.bf16.mxu0 0
    %3253 = vmatpush1.bf16.msra.mxu0 0
    %3254 = vmatprep.subr.bf16.mxu0 0
    %3255 = vmatpush1.bf16.msra.mxu0 0
    %3256 = vmatprep.subr.bf16.mxu0 0
    %3257 = vmatpush1.bf16.msra.mxu0 0
    %3258 = vmatprep.subr.bf16.mxu0 0
    %3259 = vmatpush1.bf16.msra.mxu0 0
    %3260 = vmatprep.subr.bf16.mxu0 0
    %3261 = vmatpush1.bf16.msra.mxu0 0
    %3262 = vmatprep.mubr.bf16.mxu0 0
    %3263 = vmatmul.mubr.bf16.gmra.mrb[0].mxu0 %v3228
    %v3264 = vpop.f32.mrb[0].mxu0
    %v3265 = vadd.f32 0.0, %v3264
    %v3266 = vpop.f32.mrb[0].mxu0
    %v3267 = vpop.f32.mrb[0].mxu0
    %v3268 = vadd.f32 0.0, %v3267
    %v3269 = vpop.f32.mrb[0].mxu0
    %3270 = vdwg.mxu0
    %3271 = vrot.lane.b32.xlu0 %v260, 64
    %v3272 = vpop.permute.xlu0 %3271
    %v3275 = vsel %vm2064, %v2779, 0
    %3277 = vmatprep.subr.bf16.mxu0 0
    %3278 = vmatpush1.bf16.msra.mxu0 %v3272
    %3279 = vmatprep.subr.bf16.mxu0 0
    %3280 = vmatpush1.bf16.msra.mxu0 0
    %3281 = vmatprep.subr.bf16.mxu0 0
    %3282 = vmatpush1.bf16.msra.mxu0 0
    %3283 = vmatprep.subr.bf16.mxu0 0
    %3284 = vmatpush1.bf16.msra.mxu0 0
    %3285 = vmatprep.subr.bf16.mxu0 0
    %3286 = vmatpush1.bf16.msra.mxu0 0
    %3287 = vmatprep.subr.bf16.mxu0 0
    %3288 = vmatpush1.bf16.msra.mxu0 0
    %3289 = vmatprep.subr.bf16.mxu0 0
    %3290 = vmatpush1.bf16.msra.mxu0 0
    %3291 = vmatprep.subr.bf16.mxu0 0
    %3292 = vmatpush1.bf16.msra.mxu0 0
    %3293 = vmatprep.subr.bf16.mxu0 0
    %3294 = vmatpush1.bf16.msra.mxu0 0
    %3295 = vmatprep.subr.bf16.mxu0 0
    %3296 = vmatpush1.bf16.msra.mxu0 0
    %3297 = vmatprep.subr.bf16.mxu0 0
    %3298 = vmatpush1.bf16.msra.mxu0 0
    %3299 = vmatprep.subr.bf16.mxu0 0
    %3300 = vmatpush1.bf16.msra.mxu0 0
    %3301 = vmatprep.subr.bf16.mxu0 0
    %3302 = vmatpush1.bf16.msra.mxu0 0
    %3303 = vmatprep.subr.bf16.mxu0 0
    %3304 = vmatpush1.bf16.msra.mxu0 0
    %3305 = vmatprep.subr.bf16.mxu0 0
    %3306 = vmatpush1.bf16.msra.mxu0 0
    %3307 = vmatprep.subr.bf16.mxu0 0
    %3308 = vmatpush1.bf16.msra.mxu0 0
    %3309 = vmatprep.mubr.bf16.mxu0 0
    %3310 = vmatmul.mubr.bf16.gmra.mrb[0].mxu0 %v3275
    %v3311 = vpop.f32.mrb[0].mxu0
    %v3312 = vadd.f32 0.0, %v3311
    %v3313 = vpop.f32.mrb[0].mxu0
    %v3314 = vpop.f32.mrb[0].mxu0
    %v3315 = vadd.f32 0.0, %v3314
    %v3316 = vpop.f32.mrb[0].mxu0
    %3317 = vdwg.mxu0
    %3318 = vrot.lane.b32.xlu0 %v262, 64
    %v3319 = vpop.permute.xlu0 %3318
    %v3322 = vsel %vm2064, %v2780, 0
    %3324 = vmatprep.subr.bf16.mxu0 0
    %3325 = vmatpush1.bf16.msra.mxu0 %v3319
    %3326 = vmatprep.subr.bf16.mxu0 0
    %3327 = vmatpush1.bf16.msra.mxu0 0
    %3328 = vmatprep.subr.bf16.mxu0 0
    %3329 = vmatpush1.bf16.msra.mxu0 0
    %3330 = vmatprep.subr.bf16.mxu0 0
    %3331 = vmatpush1.bf16.msra.mxu0 0
    %3332 = vmatprep.subr.bf16.mxu0 0
    %3333 = vmatpush1.bf16.msra.mxu0 0
    %3334 = vmatprep.subr.bf16.mxu0 0
    %3335 = vmatpush1.bf16.msra.mxu0 0
    %3336 = vmatprep.subr.bf16.mxu0 0
    %3337 = vmatpush1.bf16.msra.mxu0 0
    %3338 = vmatprep.subr.bf16.mxu0 0
    %3339 = vmatpush1.bf16.msra.mxu0 0
    %3340 = vmatprep.subr.bf16.mxu0 0
    %3341 = vmatpush1.bf16.msra.mxu0 0
    %3342 = vmatprep.subr.bf16.mxu0 0
    %3343 = vmatpush1.bf16.msra.mxu0 0
    %3344 = vmatprep.subr.bf16.mxu0 0
    %3345 = vmatpush1.bf16.msra.mxu0 0
    %3346 = vmatprep.subr.bf16.mxu0 0
    %3347 = vmatpush1.bf16.msra.mxu0 0
    %3348 = vmatprep.subr.bf16.mxu0 0
    %3349 = vmatpush1.bf16.msra.mxu0 0
    %3350 = vmatprep.subr.bf16.mxu0 0
    %3351 = vmatpush1.bf16.msra.mxu0 0
    %3352 = vmatprep.subr.bf16.mxu0 0
    %3353 = vmatpush1.bf16.msra.mxu0 0
    %3354 = vmatprep.subr.bf16.mxu0 0
    %3355 = vmatpush1.bf16.msra.mxu0 0
    %3356 = vmatprep.mubr.bf16.mxu0 0
    %3357 = vmatmul.mubr.bf16.gmra.mrb[0].mxu0 %v3322
    %v3358 = vpop.f32.mrb[0].mxu0
    %v3359 = vadd.f32 0.0, %v3358
    %v3360 = vpop.f32.mrb[0].mxu0
    %v3361 = vpop.f32.mrb[0].mxu0
    %v3362 = vadd.f32 0.0, %v3361
    %v3363 = vpop.f32.mrb[0].mxu0
    %3364 = vdwg.mxu0
    %3365 = vrot.lane.b32.xlu0 %v264, 64
    %v3366 = vpop.permute.xlu0 %3365
    %v3369 = vsel %vm2064, %v2781, 0
    %3371 = vmatprep.subr.bf16.mxu0 0
    %3372 = vmatpush1.bf16.msra.mxu0 %v3366
    %3373 = vmatprep.subr.bf16.mxu0 0
    %3374 = vmatpush1.bf16.msra.mxu0 0
    %3375 = vmatprep.subr.bf16.mxu0 0
    %3376 = vmatpush1.bf16.msra.mxu0 0
    %3377 = vmatprep.subr.bf16.mxu0 0
    %3378 = vmatpush1.bf16.msra.mxu0 0
    %3379 = vmatprep.subr.bf16.mxu0 0
    %3380 = vmatpush1.bf16.msra.mxu0 0
    %3381 = vmatprep.subr.bf16.mxu0 0
    %3382 = vmatpush1.bf16.msra.mxu0 0
    %3383 = vmatprep.subr.bf16.mxu0 0
    %3384 = vmatpush1.bf16.msra.mxu0 0
    %3385 = vmatprep.subr.bf16.mxu0 0
    %3386 = vmatpush1.bf16.msra.mxu0 0
    %3387 = vmatprep.subr.bf16.mxu0 0
    %3388 = vmatpush1.bf16.msra.mxu0 0
    %3389 = vmatprep.subr.bf16.mxu0 0
    %3390 = vmatpush1.bf16.msra.mxu0 0
    %3391 = vmatprep.subr.bf16.mxu0 0
    %3392 = vmatpush1.bf16.msra.mxu0 0
    %3393 = vmatprep.subr.bf16.mxu0 0
    %3394 = vmatpush1.bf16.msra.mxu0 0
    %3395 = vmatprep.subr.bf16.mxu0 0
    %3396 = vmatpush1.bf16.msra.mxu0 0
    %3397 = vmatprep.subr.bf16.mxu0 0
    %3398 = vmatpush1.bf16.msra.mxu0 0
    %3399 = vmatprep.subr.bf16.mxu0 0
    %3400 = vmatpush1.bf16.msra.mxu0 0
    %3401 = vmatprep.subr.bf16.mxu0 0
    %3402 = vmatpush1.bf16.msra.mxu0 0
    %3403 = vmatprep.mubr.bf16.mxu0 0
    %3404 = vmatmul.mubr.bf16.gmra.mrb[0].mxu0 %v3369
    %v3405 = vpop.f32.mrb[0].mxu0
    %v3406 = vadd.f32 0.0, %v3405
    %v3407 = vpop.f32.mrb[0].mxu0
    %v3408 = vpop.f32.mrb[0].mxu0
    %v3409 = vadd.f32 0.0, %v3408
    %v3410 = vpop.f32.mrb[0].mxu0
    %3411 = vdwg.mxu0
    %3412 = vrot.lane.b32.xlu0 %v266, 64
    %v3413 = vpop.permute.xlu0 %3412
    %v3416 = vsel %vm2064, %v2782, 0
    %3418 = vmatprep.subr.bf16.mxu0 0
    %3419 = vmatpush1.bf16.msra.mxu0 %v3413
    %3420 = vmatprep.subr.bf16.mxu0 0
    %3421 = vmatpush1.bf16.msra.mxu0 0
    %3422 = vmatprep.subr.bf16.mxu0 0
    %3423 = vmatpush1.bf16.msra.mxu0 0
    %3424 = vmatprep.subr.bf16.mxu0 0
    %3425 = vmatpush1.bf16.msra.mxu0 0
    %3426 = vmatprep.subr.bf16.mxu0 0
    %3427 = vmatpush1.bf16.msra.mxu0 0
    %3428 = vmatprep.subr.bf16.mxu0 0
    %3429 = vmatpush1.bf16.msra.mxu0 0
    %3430 = vmatprep.subr.bf16.mxu0 0
    %3431 = vmatpush1.bf16.msra.mxu0 0
    %3432 = vmatprep.subr.bf16.mxu0 0
    %3433 = vmatpush1.bf16.msra.mxu0 0
    %3434 = vmatprep.subr.bf16.mxu0 0
    %3435 = vmatpush1.bf16.msra.mxu0 0
    %3436 = vmatprep.subr.bf16.mxu0 0
    %3437 = vmatpush1.bf16.msra.mxu0 0
    %3438 = vmatprep.subr.bf16.mxu0 0
    %3439 = vmatpush1.bf16.msra.mxu0 0
    %3440 = vmatprep.subr.bf16.mxu0 0
    %3441 = vmatpush1.bf16.msra.mxu0 0
    %3442 = vmatprep.subr.bf16.mxu0 0
    %3443 = vmatpush1.bf16.msra.mxu0 0
    %3444 = vmatprep.subr.bf16.mxu0 0
    %3445 = vmatpush1.bf16.msra.mxu0 0
    %3446 = vmatprep.subr.bf16.mxu0 0
    %3447 = vmatpush1.bf16.msra.mxu0 0
    %3448 = vmatprep.subr.bf16.mxu0 0
    %3449 = vmatpush1.bf16.msra.mxu0 0
    %3450 = vmatprep.mubr.bf16.mxu0 0
    %3451 = vmatmul.mubr.bf16.gmra.mrb[0].mxu0 %v3416
    %v3452 = vpop.f32.mrb[0].mxu0
    %v3453 = vadd.f32 0.0, %v3452
    %v3454 = vpop.f32.mrb[0].mxu0
    %v3455 = vpop.f32.mrb[0].mxu0
    %v3456 = vadd.f32 0.0, %v3455
    %v3457 = vpop.f32.mrb[0].mxu0
    %3458 = vdwg.mxu0
    %3459 = vrot.lane.b32.xlu0 %v268, 64
    %v3460 = vpop.permute.xlu0 %3459
    %v3463 = vsel %vm2064, %v2783, 0
    %3465 = vmatprep.subr.bf16.mxu0 0
    %3466 = vmatpush1.bf16.msra.mxu0 %v3460
    %3467 = vmatprep.subr.bf16.mxu0 0
    %3468 = vmatpush1.bf16.msra.mxu0 0
    %3469 = vmatprep.subr.bf16.mxu0 0
    %3470 = vmatpush1.bf16.msra.mxu0 0
    %3471 = vmatprep.subr.bf16.mxu0 0
    %3472 = vmatpush1.bf16.msra.mxu0 0
    %3473 = vmatprep.subr.bf16.mxu0 0
    %3474 = vmatpush1.bf16.msra.mxu0 0
    %3475 = vmatprep.subr.bf16.mxu0 0
    %3476 = vmatpush1.bf16.msra.mxu0 0
    %3477 = vmatprep.subr.bf16.mxu0 0
    %3478 = vmatpush1.bf16.msra.mxu0 0
    %3479 = vmatprep.subr.bf16.mxu0 0
    %3480 = vmatpush1.bf16.msra.mxu0 0
    %3481 = vmatprep.subr.bf16.mxu0 0
    %3482 = vmatpush1.bf16.msra.mxu0 0
    %3483 = vmatprep.subr.bf16.mxu0 0
    %3484 = vmatpush1.bf16.msra.mxu0 0
    %3485 = vmatprep.subr.bf16.mxu0 0
    %3486 = vmatpush1.bf16.msra.mxu0 0
    %3487 = vmatprep.subr.bf16.mxu0 0
    %3488 = vmatpush1.bf16.msra.mxu0 0
    %3489 = vmatprep.subr.bf16.mxu0 0
    %3490 = vmatpush1.bf16.msra.mxu0 0
    %3491 = vmatprep.subr.bf16.mxu0 0
    %3492 = vmatpush1.bf16.msra.mxu0 0
    %3493 = vmatprep.subr.bf16.mxu0 0
    %3494 = vmatpush1.bf16.msra.mxu0 0
    %3495 = vmatprep.subr.bf16.mxu0 0
    %3496 = vmatpush1.bf16.msra.mxu0 0
    %3497 = vmatprep.mubr.bf16.mxu0 0
    %3498 = vmatmul.mubr.bf16.gmra.mrb[0].mxu0 %v3463
    %v3499 = vpop.f32.mrb[0].mxu0
    %v3500 = vadd.f32 0.0, %v3499
    %v3501 = vpop.f32.mrb[0].mxu0
    %v3502 = vpop.f32.mrb[0].mxu0
    %v3503 = vadd.f32 0.0, %v3502
    %v3504 = vpop.f32.mrb[0].mxu0
    %3505 = vdwg.mxu0
    %3506 = vrot.lane.b32.xlu0 %v270, 64
    %v3507 = vpop.permute.xlu0 %3506
    %v3510 = vsel %vm2064, %v2784, 0
    %3512 = vmatprep.subr.bf16.mxu0 0
    %3513 = vmatpush1.bf16.msra.mxu0 %v3507
    %3514 = vmatprep.subr.bf16.mxu0 0
    %3515 = vmatpush1.bf16.msra.mxu0 0
    %3516 = vmatprep.subr.bf16.mxu0 0
    %3517 = vmatpush1.bf16.msra.mxu0 0
    %3518 = vmatprep.subr.bf16.mxu0 0
    %3519 = vmatpush1.bf16.msra.mxu0 0
    %3520 = vmatprep.subr.bf16.mxu0 0
    %3521 = vmatpush1.bf16.msra.mxu0 0
    %3522 = vmatprep.subr.bf16.mxu0 0
    %3523 = vmatpush1.bf16.msra.mxu0 0
    %3524 = vmatprep.subr.bf16.mxu0 0
    %3525 = vmatpush1.bf16.msra.mxu0 0
    %3526 = vmatprep.subr.bf16.mxu0 0
    %3527 = vmatpush1.bf16.msra.mxu0 0
    %3528 = vmatprep.subr.bf16.mxu0 0
    %3529 = vmatpush1.bf16.msra.mxu0 0
    %3530 = vmatprep.subr.bf16.mxu0 0
    %3531 = vmatpush1.bf16.msra.mxu0 0
    %3532 = vmatprep.subr.bf16.mxu0 0
    %3533 = vmatpush1.bf16.msra.mxu0 0
    %3534 = vmatprep.subr.bf16.mxu0 0
    %3535 = vmatpush1.bf16.msra.mxu0 0
    %3536 = vmatprep.subr.bf16.mxu0 0
    %3537 = vmatpush1.bf16.msra.mxu0 0
    %3538 = vmatprep.subr.bf16.mxu0 0
    %3539 = vmatpush1.bf16.msra.mxu0 0
    %3540 = vmatprep.subr.bf16.mxu0 0
    %3541 = vmatpush1.bf16.msra.mxu0 0
    %3542 = vmatprep.subr.bf16.mxu0 0
    %3543 = vmatpush1.bf16.msra.mxu0 0
    %3544 = vmatprep.mubr.bf16.mxu0 0
    %3545 = vmatmul.mubr.bf16.gmra.mrb[0].mxu0 %v3510
    %v3546 = vpop.f32.mrb[0].mxu0
    %v3547 = vadd.f32 0.0, %v3546
    %v3548 = vpop.f32.mrb[0].mxu0
    %v3549 = vpop.f32.mrb[0].mxu0
    %v3550 = vadd.f32 0.0, %v3549
    %v3551 = vpop.f32.mrb[0].mxu0
    %3552 = vdwg.mxu0
    %3553 = vrot.lane.b32.xlu0 %v272, 64
    %v3554 = vpop.permute.xlu0 %3553
    %v3557 = vsel %vm2064, %v2785, 0
    %3559 = vmatprep.subr.bf16.mxu0 0
    %3560 = vmatpush1.bf16.msra.mxu0 %v3554
    %3561 = vmatprep.subr.bf16.mxu0 0
    %3562 = vmatpush1.bf16.msra.mxu0 0
    %3563 = vmatprep.subr.bf16.mxu0 0
    %3564 = vmatpush1.bf16.msra.mxu0 0
    %3565 = vmatprep.subr.bf16.mxu0 0
    %3566 = vmatpush1.bf16.msra.mxu0 0
    %3567 = vmatprep.subr.bf16.mxu0 0
    %3568 = vmatpush1.bf16.msra.mxu0 0
    %3569 = vmatprep.subr.bf16.mxu0 0
    %3570 = vmatpush1.bf16.msra.mxu0 0
    %3571 = vmatprep.subr.bf16.mxu0 0
    %3572 = vmatpush1.bf16.msra.mxu0 0
    %3573 = vmatprep.subr.bf16.mxu0 0
    %3574 = vmatpush1.bf16.msra.mxu0 0
    %3575 = vmatprep.subr.bf16.mxu0 0
    %3576 = vmatpush1.bf16.msra.mxu0 0
    %3577 = vmatprep.subr.bf16.mxu0 0
    %3578 = vmatpush1.bf16.msra.mxu0 0
    %3579 = vmatprep.subr.bf16.mxu0 0
    %3580 = vmatpush1.bf16.msra.mxu0 0
    %3581 = vmatprep.subr.bf16.mxu0 0
    %3582 = vmatpush1.bf16.msra.mxu0 0
    %3583 = vmatprep.subr.bf16.mxu0 0
    %3584 = vmatpush1.bf16.msra.mxu0 0
    %3585 = vmatprep.subr.bf16.mxu0 0
    %3586 = vmatpush1.bf16.msra.mxu0 0
    %3587 = vmatprep.subr.bf16.mxu0 0
    %3588 = vmatpush1.bf16.msra.mxu0 0
    %3589 = vmatprep.subr.bf16.mxu0 0
    %3590 = vmatpush1.bf16.msra.mxu0 0
    %3591 = vmatprep.mubr.bf16.mxu0 0
    %3592 = vmatmul.mubr.bf16.gmra.mrb[0].mxu0 %v3557
    %v3593 = vpop.f32.mrb[0].mxu0
    %v3594 = vadd.f32 0.0, %v3593
    %v3595 = vpop.f32.mrb[0].mxu0
    %v3596 = vpop.f32.mrb[0].mxu0
    %v3597 = vadd.f32 0.0, %v3596
    %v3598 = vpop.f32.mrb[0].mxu0
    %3599 = vdwg.mxu0
    %3600 = vrot.lane.b32.xlu0 %v274, 64
    %v3601 = vpop.permute.xlu0 %3600
    %v3604 = vsel %vm2064, %v2786, 0
    %3606 = vmatprep.subr.bf16.mxu0 0
    %3607 = vmatpush1.bf16.msra.mxu0 %v3601
    %3608 = vmatprep.subr.bf16.mxu0 0
    %3609 = vmatpush1.bf16.msra.mxu0 0
    %3610 = vmatprep.subr.bf16.mxu0 0
    %3611 = vmatpush1.bf16.msra.mxu0 0
    %3612 = vmatprep.subr.bf16.mxu0 0
    %3613 = vmatpush1.bf16.msra.mxu0 0
    %3614 = vmatprep.subr.bf16.mxu0 0
    %3615 = vmatpush1.bf16.msra.mxu0 0
    %3616 = vmatprep.subr.bf16.mxu0 0
    %3617 = vmatpush1.bf16.msra.mxu0 0
    %3618 = vmatprep.subr.bf16.mxu0 0
    %3619 = vmatpush1.bf16.msra.mxu0 0
    %3620 = vmatprep.subr.bf16.mxu0 0
    %3621 = vmatpush1.bf16.msra.mxu0 0
    %3622 = vmatprep.subr.bf16.mxu0 0
    %3623 = vmatpush1.bf16.msra.mxu0 0
    %3624 = vmatprep.subr.bf16.mxu0 0
    %3625 = vmatpush1.bf16.msra.mxu0 0
    %3626 = vmatprep.subr.bf16.mxu0 0
    %3627 = vmatpush1.bf16.msra.mxu0 0
    %3628 = vmatprep.subr.bf16.mxu0 0
    %3629 = vmatpush1.bf16.msra.mxu0 0
    %3630 = vmatprep.subr.bf16.mxu0 0
    %3631 = vmatpush1.bf16.msra.mxu0 0
    %3632 = vmatprep.subr.bf16.mxu0 0
    %3633 = vmatpush1.bf16.msra.mxu0 0
    %3634 = vmatprep.subr.bf16.mxu0 0
    %3635 = vmatpush1.bf16.msra.mxu0 0
    %3636 = vmatprep.subr.bf16.mxu0 0
    %3637 = vmatpush1.bf16.msra.mxu0 0
    %3638 = vmatprep.mubr.bf16.mxu0 0
    %3639 = vmatmul.mubr.bf16.gmra.mrb[0].mxu0 %v3604
    %v3640 = vpop.f32.mrb[0].mxu0
    %v3641 = vadd.f32 0.0, %v3640
    %v3642 = vpop.f32.mrb[0].mxu0
    %v3643 = vpop.f32.mrb[0].mxu0
    %v3644 = vadd.f32 0.0, %v3643
    %v3645 = vpop.f32.mrb[0].mxu0
    %3646 = vdwg.mxu0
    %3647 = vrot.lane.b32.xlu0 %v276, 64
    %v3648 = vpop.permute.xlu0 %3647
    %v3651 = vsel %vm2064, %v2787, 0
    %3653 = vmatprep.subr.bf16.mxu0 0
    %3654 = vmatpush1.bf16.msra.mxu0 %v3648
    %3655 = vmatprep.subr.bf16.mxu0 0
    %3656 = vmatpush1.bf16.msra.mxu0 0
    %3657 = vmatprep.subr.bf16.mxu0 0
    %3658 = vmatpush1.bf16.msra.mxu0 0
    %3659 = vmatprep.subr.bf16.mxu0 0
    %3660 = vmatpush1.bf16.msra.mxu0 0
    %3661 = vmatprep.subr.bf16.mxu0 0
    %3662 = vmatpush1.bf16.msra.mxu0 0
    %3663 = vmatprep.subr.bf16.mxu0 0
    %3664 = vmatpush1.bf16.msra.mxu0 0
    %3665 = vmatprep.subr.bf16.mxu0 0
    %3666 = vmatpush1.bf16.msra.mxu0 0
    %3667 = vmatprep.subr.bf16.mxu0 0
    %3668 = vmatpush1.bf16.msra.mxu0 0
    %3669 = vmatprep.subr.bf16.mxu0 0
    %3670 = vmatpush1.bf16.msra.mxu0 0
    %3671 = vmatprep.subr.bf16.mxu0 0
    %3672 = vmatpush1.bf16.msra.mxu0 0
    %3673 = vmatprep.subr.bf16.mxu0 0
    %3674 = vmatpush1.bf16.msra.mxu0 0
    %3675 = vmatprep.subr.bf16.mxu0 0
    %3676 = vmatpush1.bf16.msra.mxu0 0
    %3677 = vmatprep.subr.bf16.mxu0 0
    %3678 = vmatpush1.bf16.msra.mxu0 0
    %3679 = vmatprep.subr.bf16.mxu0 0
    %3680 = vmatpush1.bf16.msra.mxu0 0
    %3681 = vmatprep.subr.bf16.mxu0 0
    %3682 = vmatpush1.bf16.msra.mxu0 0
    %3683 = vmatprep.subr.bf16.mxu0 0
    %3684 = vmatpush1.bf16.msra.mxu0 0
    %3685 = vmatprep.mubr.bf16.mxu0 0
    %3686 = vmatmul.mubr.bf16.gmra.mrb[0].mxu0 %v3651
    %v3687 = vpop.f32.mrb[0].mxu0
    %v3688 = vadd.f32 0.0, %v3687
    %v3689 = vpop.f32.mrb[0].mxu0
    %v3690 = vpop.f32.mrb[0].mxu0
    %v3691 = vadd.f32 0.0, %v3690
    %v3692 = vpop.f32.mrb[0].mxu0
    %3693 = vdwg.mxu0
    %3694 = vrot.lane.b32.xlu0 %v278, 64
    %v3695 = vpop.permute.xlu0 %3694
    %v3698 = vsel %vm2064, %v2788, 0
    %3700 = vmatprep.subr.bf16.mxu0 0
    %3701 = vmatpush1.bf16.msra.mxu0 %v3695
    %3702 = vmatprep.subr.bf16.mxu0 0
    %3703 = vmatpush1.bf16.msra.mxu0 0
    %3704 = vmatprep.subr.bf16.mxu0 0
    %3705 = vmatpush1.bf16.msra.mxu0 0
    %3706 = vmatprep.subr.bf16.mxu0 0
    %3707 = vmatpush1.bf16.msra.mxu0 0
    %3708 = vmatprep.subr.bf16.mxu0 0
    %3709 = vmatpush1.bf16.msra.mxu0 0
    %3710 = vmatprep.subr.bf16.mxu0 0
    %3711 = vmatpush1.bf16.msra.mxu0 0
    %3712 = vmatprep.subr.bf16.mxu0 0
    %3713 = vmatpush1.bf16.msra.mxu0 0
    %3714 = vmatprep.subr.bf16.mxu0 0
    %3715 = vmatpush1.bf16.msra.mxu0 0
    %3716 = vmatprep.subr.bf16.mxu0 0
    %3717 = vmatpush1.bf16.msra.mxu0 0
    %3718 = vmatprep.subr.bf16.mxu0 0
    %3719 = vmatpush1.bf16.msra.mxu0 0
    %3720 = vmatprep.subr.bf16.mxu0 0
    %3721 = vmatpush1.bf16.msra.mxu0 0
    %3722 = vmatprep.subr.bf16.mxu0 0
    %3723 = vmatpush1.bf16.msra.mxu0 0
    %3724 = vmatprep.subr.bf16.mxu0 0
    %3725 = vmatpush1.bf16.msra.mxu0 0
    %3726 = vmatprep.subr.bf16.mxu0 0
    %3727 = vmatpush1.bf16.msra.mxu0 0
    %3728 = vmatprep.subr.bf16.mxu0 0
    %3729 = vmatpush1.bf16.msra.mxu0 0
    %3730 = vmatprep.subr.bf16.mxu0 0
    %3731 = vmatpush1.bf16.msra.mxu0 0
    %3732 = vmatprep.mubr.bf16.mxu0 0
    %3733 = vmatmul.mubr.bf16.gmra.mrb[0].mxu0 %v3698
    %v3734 = vpop.f32.mrb[0].mxu0
    %v3735 = vadd.f32 0.0, %v3734
    %v3736 = vpop.f32.mrb[0].mxu0
    %v3737 = vpop.f32.mrb[0].mxu0
    %v3738 = vadd.f32 0.0, %v3737
    %v3739 = vpop.f32.mrb[0].mxu0
    %3740 = vdwg.mxu0
    %3741 = vrot.lane.b32.xlu0 %v280, 64
    %v3742 = vpop.permute.xlu0 %3741
    %v3745 = vsel %vm2064, %v2789, 0
    %3747 = vmatprep.subr.bf16.mxu0 0
    %3748 = vmatpush1.bf16.msra.mxu0 %v3742
    %3749 = vmatprep.subr.bf16.mxu0 0
    %3750 = vmatpush1.bf16.msra.mxu0 0
    %3751 = vmatprep.subr.bf16.mxu0 0
    %3752 = vmatpush1.bf16.msra.mxu0 0
    %3753 = vmatprep.subr.bf16.mxu0 0
    %3754 = vmatpush1.bf16.msra.mxu0 0
    %3755 = vmatprep.subr.bf16.mxu0 0
    %3756 = vmatpush1.bf16.msra.mxu0 0
    %3757 = vmatprep.subr.bf16.mxu0 0
    %3758 = vmatpush1.bf16.msra.mxu0 0
    %3759 = vmatprep.subr.bf16.mxu0 0
    %3760 = vmatpush1.bf16.msra.mxu0 0
    %3761 = vmatprep.subr.bf16.mxu0 0
    %3762 = vmatpush1.bf16.msra.mxu0 0
    %3763 = vmatprep.subr.bf16.mxu0 0
    %3764 = vmatpush1.bf16.msra.mxu0 0
    %3765 = vmatprep.subr.bf16.mxu0 0
    %3766 = vmatpush1.bf16.msra.mxu0 0
    %3767 = vmatprep.subr.bf16.mxu0 0
    %3768 = vmatpush1.bf16.msra.mxu0 0
    %3769 = vmatprep.subr.bf16.mxu0 0
    %3770 = vmatpush1.bf16.msra.mxu0 0
    %3771 = vmatprep.subr.bf16.mxu0 0
    %3772 = vmatpush1.bf16.msra.mxu0 0
    %3773 = vmatprep.subr.bf16.mxu0 0
    %3774 = vmatpush1.bf16.msra.mxu0 0
    %3775 = vmatprep.subr.bf16.mxu0 0
    %3776 = vmatpush1.bf16.msra.mxu0 0
    %3777 = vmatprep.subr.bf16.mxu0 0
    %3778 = vmatpush1.bf16.msra.mxu0 0
    %3779 = vmatprep.mubr.bf16.mxu0 0
    %3780 = vmatmul.mubr.bf16.gmra.mrb[0].mxu0 %v3745
    %v3781 = vpop.f32.mrb[0].mxu0
    %v3782 = vadd.f32 0.0, %v3781
    %v3783 = vpop.f32.mrb[0].mxu0
    %v3784 = vpop.f32.mrb[0].mxu0
    %v3785 = vadd.f32 0.0, %v3784
    %v3786 = vpop.f32.mrb[0].mxu0
    %3787 = vdwg.mxu0
    %3788 = vrot.lane.b32.xlu0 %v282, 64
    %v3789 = vpop.permute.xlu0 %3788
    %v3792 = vsel %vm2064, %v2790, 0
    %3794 = vmatprep.subr.bf16.mxu0 0
    %3795 = vmatpush1.bf16.msra.mxu0 %v3789
    %3796 = vmatprep.subr.bf16.mxu0 0
    %3797 = vmatpush1.bf16.msra.mxu0 0
    %3798 = vmatprep.subr.bf16.mxu0 0
    %3799 = vmatpush1.bf16.msra.mxu0 0
    %3800 = vmatprep.subr.bf16.mxu0 0
    %3801 = vmatpush1.bf16.msra.mxu0 0
    %3802 = vmatprep.subr.bf16.mxu0 0
    %3803 = vmatpush1.bf16.msra.mxu0 0
    %3804 = vmatprep.subr.bf16.mxu0 0
    %3805 = vmatpush1.bf16.msra.mxu0 0
    %3806 = vmatprep.subr.bf16.mxu0 0
    %3807 = vmatpush1.bf16.msra.mxu0 0
    %3808 = vmatprep.subr.bf16.mxu0 0
    %3809 = vmatpush1.bf16.msra.mxu0 0
    %3810 = vmatprep.subr.bf16.mxu0 0
    %3811 = vmatpush1.bf16.msra.mxu0 0
    %3812 = vmatprep.subr.bf16.mxu0 0
    %3813 = vmatpush1.bf16.msra.mxu0 0
    %3814 = vmatprep.subr.bf16.mxu0 0
    %3815 = vmatpush1.bf16.msra.mxu0 0
    %3816 = vmatprep.subr.bf16.mxu0 0
    %3817 = vmatpush1.bf16.msra.mxu0 0
    %3818 = vmatprep.subr.bf16.mxu0 0
    %3819 = vmatpush1.bf16.msra.mxu0 0
    %3820 = vmatprep.subr.bf16.mxu0 0
    %3821 = vmatpush1.bf16.msra.mxu0 0
    %3822 = vmatprep.subr.bf16.mxu0 0
    %3823 = vmatpush1.bf16.msra.mxu0 0
    %3824 = vmatprep.subr.bf16.mxu0 0
    %3825 = vmatpush1.bf16.msra.mxu0 0
    %3826 = vmatprep.mubr.bf16.mxu0 0
    %3827 = vmatmul.mubr.bf16.gmra.mrb[0].mxu0 %v3792
    %v3828 = vpop.f32.mrb[0].mxu0
    %v3829 = vadd.f32 0.0, %v3828
    %v3830 = vpop.f32.mrb[0].mxu0
    %v3831 = vpop.f32.mrb[0].mxu0
    %v3832 = vadd.f32 0.0, %v3831
    %v3833 = vpop.f32.mrb[0].mxu0
    %3834 = vdwg.mxu0
    %3835 = vrot.lane.b32.xlu0 %v284, 64
    %v3836 = vpop.permute.xlu0 %3835
    %v3839 = vsel %vm2064, %v2791, 0
    %3841 = vmatprep.subr.bf16.mxu0 0
    %3842 = vmatpush1.bf16.msra.mxu0 %v3836
    %3843 = vmatprep.subr.bf16.mxu0 0
    %3844 = vmatpush1.bf16.msra.mxu0 0
    %3845 = vmatprep.subr.bf16.mxu0 0
    %3846 = vmatpush1.bf16.msra.mxu0 0
    %3847 = vmatprep.subr.bf16.mxu0 0
    %3848 = vmatpush1.bf16.msra.mxu0 0
    %3849 = vmatprep.subr.bf16.mxu0 0
    %3850 = vmatpush1.bf16.msra.mxu0 0
    %3851 = vmatprep.subr.bf16.mxu0 0
    %3852 = vmatpush1.bf16.msra.mxu0 0
    %3853 = vmatprep.subr.bf16.mxu0 0
    %3854 = vmatpush1.bf16.msra.mxu0 0
    %3855 = vmatprep.subr.bf16.mxu0 0
    %3856 = vmatpush1.bf16.msra.mxu0 0
    %3857 = vmatprep.subr.bf16.mxu0 0
    %3858 = vmatpush1.bf16.msra.mxu0 0
    %3859 = vmatprep.subr.bf16.mxu0 0
    %3860 = vmatpush1.bf16.msra.mxu0 0
    %3861 = vmatprep.subr.bf16.mxu0 0
    %3862 = vmatpush1.bf16.msra.mxu0 0
    %3863 = vmatprep.subr.bf16.mxu0 0
    %3864 = vmatpush1.bf16.msra.mxu0 0
    %3865 = vmatprep.subr.bf16.mxu0 0
    %3866 = vmatpush1.bf16.msra.mxu0 0
    %3867 = vmatprep.subr.bf16.mxu0 0
    %3868 = vmatpush1.bf16.msra.mxu0 0
    %3869 = vmatprep.subr.bf16.mxu0 0
    %3870 = vmatpush1.bf16.msra.mxu0 0
    %3871 = vmatprep.subr.bf16.mxu0 0
    %3872 = vmatpush1.bf16.msra.mxu0 0
    %3873 = vmatprep.mubr.bf16.mxu0 0
    %3874 = vmatmul.mubr.bf16.gmra.mrb[0].mxu0 %v3839
    %v3875 = vpop.f32.mrb[0].mxu0
    %v3876 = vadd.f32 0.0, %v3875
    %v3877 = vpop.f32.mrb[0].mxu0
    %v3878 = vpop.f32.mrb[0].mxu0
    %v3879 = vadd.f32 0.0, %v3878
    %v3880 = vpop.f32.mrb[0].mxu0
    %3881 = vdwg.mxu0
    %3882 = vrot.lane.b32.xlu0 %v286, 64
    %v3883 = vpop.permute.xlu0 %3882
    %v3886 = vsel %vm2064, %v2792, 0
    %3888 = vmatprep.subr.bf16.mxu0 0
    %3889 = vmatpush1.bf16.msra.mxu0 %v3883
    %3890 = vmatprep.subr.bf16.mxu0 0
    %3891 = vmatpush1.bf16.msra.mxu0 0
    %3892 = vmatprep.subr.bf16.mxu0 0
    %3893 = vmatpush1.bf16.msra.mxu0 0
    %3894 = vmatprep.subr.bf16.mxu0 0
    %3895 = vmatpush1.bf16.msra.mxu0 0
    %3896 = vmatprep.subr.bf16.mxu0 0
    %3897 = vmatpush1.bf16.msra.mxu0 0
    %3898 = vmatprep.subr.bf16.mxu0 0
    %3899 = vmatpush1.bf16.msra.mxu0 0
    %3900 = vmatprep.subr.bf16.mxu0 0
    %3901 = vmatpush1.bf16.msra.mxu0 0
    %3902 = vmatprep.subr.bf16.mxu0 0
    %3903 = vmatpush1.bf16.msra.mxu0 0
    %3904 = vmatprep.subr.bf16.mxu0 0
    %3905 = vmatpush1.bf16.msra.mxu0 0
    %3906 = vmatprep.subr.bf16.mxu0 0
    %3907 = vmatpush1.bf16.msra.mxu0 0
    %3908 = vmatprep.subr.bf16.mxu0 0
    %3909 = vmatpush1.bf16.msra.mxu0 0
    %3910 = vmatprep.subr.bf16.mxu0 0
    %3911 = vmatpush1.bf16.msra.mxu0 0
    %3912 = vmatprep.subr.bf16.mxu0 0
    %3913 = vmatpush1.bf16.msra.mxu0 0
    %3914 = vmatprep.subr.bf16.mxu0 0
    %3915 = vmatpush1.bf16.msra.mxu0 0
    %3916 = vmatprep.subr.bf16.mxu0 0
    %3917 = vmatpush1.bf16.msra.mxu0 0
    %3918 = vmatprep.subr.bf16.mxu0 0
    %3919 = vmatpush1.bf16.msra.mxu0 0
    %3920 = vmatprep.mubr.bf16.mxu0 0
    %3921 = vmatmul.mubr.bf16.gmra.mrb[0].mxu0 %v3886
    %v3922 = vpop.f32.mrb[0].mxu0
    %v3923 = vadd.f32 0.0, %v3922
    %v3924 = vpop.f32.mrb[0].mxu0
    %v3925 = vpop.f32.mrb[0].mxu0
    %v3926 = vadd.f32 0.0, %v3925
    %v3927 = vpop.f32.mrb[0].mxu0
    %3928 = vdwg.mxu0
    %3929 = vrot.lane.b32.xlu0 %v288, 64
    %v3930 = vpop.permute.xlu0 %3929
    %v3933 = vsel %vm2064, %v2793, 0
    %3935 = vmatprep.subr.bf16.mxu0 0
    %3936 = vmatpush1.bf16.msra.mxu0 %v3930
    %3937 = vmatprep.subr.bf16.mxu0 0
    %3938 = vmatpush1.bf16.msra.mxu0 0
    %3939 = vmatprep.subr.bf16.mxu0 0
    %3940 = vmatpush1.bf16.msra.mxu0 0
    %3941 = vmatprep.subr.bf16.mxu0 0
    %3942 = vmatpush1.bf16.msra.mxu0 0
    %3943 = vmatprep.subr.bf16.mxu0 0
    %3944 = vmatpush1.bf16.msra.mxu0 0
    %3945 = vmatprep.subr.bf16.mxu0 0
    %3946 = vmatpush1.bf16.msra.mxu0 0
    %3947 = vmatprep.subr.bf16.mxu0 0
    %3948 = vmatpush1.bf16.msra.mxu0 0
    %3949 = vmatprep.subr.bf16.mxu0 0
    %3950 = vmatpush1.bf16.msra.mxu0 0
    %3951 = vmatprep.subr.bf16.mxu0 0
    %3952 = vmatpush1.bf16.msra.mxu0 0
    %3953 = vmatprep.subr.bf16.mxu0 0
    %3954 = vmatpush1.bf16.msra.mxu0 0
    %3955 = vmatprep.subr.bf16.mxu0 0
    %3956 = vmatpush1.bf16.msra.mxu0 0
    %3957 = vmatprep.subr.bf16.mxu0 0
    %3958 = vmatpush1.bf16.msra.mxu0 0
    %3959 = vmatprep.subr.bf16.mxu0 0
    %3960 = vmatpush1.bf16.msra.mxu0 0
    %3961 = vmatprep.subr.bf16.mxu0 0
    %3962 = vmatpush1.bf16.msra.mxu0 0
    %3963 = vmatprep.subr.bf16.mxu0 0
    %3964 = vmatpush1.bf16.msra.mxu0 0
    %3965 = vmatprep.subr.bf16.mxu0 0
    %3966 = vmatpush1.bf16.msra.mxu0 0
    %3967 = vmatprep.mubr.bf16.mxu0 0
    %3968 = vmatmul.mubr.bf16.gmra.mrb[0].mxu0 %v3933
    %v3969 = vpop.f32.mrb[0].mxu0
    %v3970 = vadd.f32 0.0, %v3969
    %v3971 = vpop.f32.mrb[0].mxu0
    %v3972 = vpop.f32.mrb[0].mxu0
    %v3973 = vadd.f32 0.0, %v3972
    %v3974 = vpop.f32.mrb[0].mxu0
    %3975 = vdwg.mxu0
    %3976 = vrot.lane.b32.xlu0 %v290, 64
    %v3977 = vpop.permute.xlu0 %3976
    %v3980 = vsel %vm2064, %v2794, 0
    %3982 = vmatprep.subr.bf16.mxu0 0
    %3983 = vmatpush1.bf16.msra.mxu0 %v3977
    %3984 = vmatprep.subr.bf16.mxu0 0
    %3985 = vmatpush1.bf16.msra.mxu0 0
    %3986 = vmatprep.subr.bf16.mxu0 0
    %3987 = vmatpush1.bf16.msra.mxu0 0
    %3988 = vmatprep.subr.bf16.mxu0 0
    %3989 = vmatpush1.bf16.msra.mxu0 0
    %3990 = vmatprep.subr.bf16.mxu0 0
    %3991 = vmatpush1.bf16.msra.mxu0 0
    %3992 = vmatprep.subr.bf16.mxu0 0
    %3993 = vmatpush1.bf16.msra.mxu0 0
    %3994 = vmatprep.subr.bf16.mxu0 0
    %3995 = vmatpush1.bf16.msra.mxu0 0
    %3996 = vmatprep.subr.bf16.mxu0 0
    %3997 = vmatpush1.bf16.msra.mxu0 0
    %3998 = vmatprep.subr.bf16.mxu0 0
    %3999 = vmatpush1.bf16.msra.mxu0 0
    %4000 = vmatprep.subr.bf16.mxu0 0
    %4001 = vmatpush1.bf16.msra.mxu0 0
    %4002 = vmatprep.subr.bf16.mxu0 0
    %4003 = vmatpush1.bf16.msra.mxu0 0
    %4004 = vmatprep.subr.bf16.mxu0 0
    %4005 = vmatpush1.bf16.msra.mxu0 0
    %4006 = vmatprep.subr.bf16.mxu0 0
    %4007 = vmatpush1.bf16.msra.mxu0 0
    %4008 = vmatprep.subr.bf16.mxu0 0
    %4009 = vmatpush1.bf16.msra.mxu0 0
    %4010 = vmatprep.subr.bf16.mxu0 0
    %4011 = vmatpush1.bf16.msra.mxu0 0
    %4012 = vmatprep.subr.bf16.mxu0 0
    %4013 = vmatpush1.bf16.msra.mxu0 0
    %4014 = vmatprep.mubr.bf16.mxu0 0
    %4015 = vmatmul.mubr.bf16.gmra.mrb[0].mxu0 %v3980
    %v4016 = vpop.f32.mrb[0].mxu0
    %v4017 = vadd.f32 0.0, %v4016
    %v4018 = vpop.f32.mrb[0].mxu0
    %v4019 = vpop.f32.mrb[0].mxu0
    %v4020 = vadd.f32 0.0, %v4019
    %v4021 = vpop.f32.mrb[0].mxu0
    %4022 = vdwg.mxu0
    %4023 = vrot.lane.b32.xlu0 %v292, 64
    %v4024 = vpop.permute.xlu0 %4023
    %v4027 = vsel %vm2064, %v2795, 0
    %4029 = vmatprep.subr.bf16.mxu0 0
    %4030 = vmatpush1.bf16.msra.mxu0 %v4024
    %4031 = vmatprep.subr.bf16.mxu0 0
    %4032 = vmatpush1.bf16.msra.mxu0 0
    %4033 = vmatprep.subr.bf16.mxu0 0
    %4034 = vmatpush1.bf16.msra.mxu0 0
    %4035 = vmatprep.subr.bf16.mxu0 0
    %4036 = vmatpush1.bf16.msra.mxu0 0
    %4037 = vmatprep.subr.bf16.mxu0 0
    %4038 = vmatpush1.bf16.msra.mxu0 0
    %4039 = vmatprep.subr.bf16.mxu0 0
    %4040 = vmatpush1.bf16.msra.mxu0 0
    %4041 = vmatprep.subr.bf16.mxu0 0
    %4042 = vmatpush1.bf16.msra.mxu0 0
    %4043 = vmatprep.subr.bf16.mxu0 0
    %4044 = vmatpush1.bf16.msra.mxu0 0
    %4045 = vmatprep.subr.bf16.mxu0 0
    %4046 = vmatpush1.bf16.msra.mxu0 0
    %4047 = vmatprep.subr.bf16.mxu0 0
    %4048 = vmatpush1.bf16.msra.mxu0 0
    %4049 = vmatprep.subr.bf16.mxu0 0
    %4050 = vmatpush1.bf16.msra.mxu0 0
    %4051 = vmatprep.subr.bf16.mxu0 0
    %4052 = vmatpush1.bf16.msra.mxu0 0
    %4053 = vmatprep.subr.bf16.mxu0 0
    %4054 = vmatpush1.bf16.msra.mxu0 0
    %4055 = vmatprep.subr.bf16.mxu0 0
    %4056 = vmatpush1.bf16.msra.mxu0 0
    %4057 = vmatprep.subr.bf16.mxu0 0
    %4058 = vmatpush1.bf16.msra.mxu0 0
    %4059 = vmatprep.subr.bf16.mxu0 0
    %4060 = vmatpush1.bf16.msra.mxu0 0
    %4061 = vmatprep.mubr.bf16.mxu0 0
    %4062 = vmatmul.mubr.bf16.gmra.mrb[0].mxu0 %v4027
    %v4063 = vpop.f32.mrb[0].mxu0
    %v4064 = vadd.f32 0.0, %v4063
    %v4065 = vpop.f32.mrb[0].mxu0
    %v4066 = vpop.f32.mrb[0].mxu0
    %v4067 = vadd.f32 0.0, %v4066
    %v4068 = vpop.f32.mrb[0].mxu0
    %4069 = vdwg.mxu0
    %4070 = vrot.lane.b32.xlu0 %v294, 64
    %v4071 = vpop.permute.xlu0 %4070
    %v4074 = vsel %vm2064, %v2796, 0
    %4076 = vmatprep.subr.bf16.mxu0 0
    %4077 = vmatpush1.bf16.msra.mxu0 %v4071
    %4078 = vmatprep.subr.bf16.mxu0 0
    %4079 = vmatpush1.bf16.msra.mxu0 0
    %4080 = vmatprep.subr.bf16.mxu0 0
    %4081 = vmatpush1.bf16.msra.mxu0 0
    %4082 = vmatprep.subr.bf16.mxu0 0
    %4083 = vmatpush1.bf16.msra.mxu0 0
    %4084 = vmatprep.subr.bf16.mxu0 0
    %4085 = vmatpush1.bf16.msra.mxu0 0
    %4086 = vmatprep.subr.bf16.mxu0 0
    %4087 = vmatpush1.bf16.msra.mxu0 0
    %4088 = vmatprep.subr.bf16.mxu0 0
    %4089 = vmatpush1.bf16.msra.mxu0 0
    %4090 = vmatprep.subr.bf16.mxu0 0
    %4091 = vmatpush1.bf16.msra.mxu0 0
    %4092 = vmatprep.subr.bf16.mxu0 0
    %4093 = vmatpush1.bf16.msra.mxu0 0
    %4094 = vmatprep.subr.bf16.mxu0 0
    %4095 = vmatpush1.bf16.msra.mxu0 0
    %4096 = vmatprep.subr.bf16.mxu0 0
    %4097 = vmatpush1.bf16.msra.mxu0 0
    %4098 = vmatprep.subr.bf16.mxu0 0
    %4099 = vmatpush1.bf16.msra.mxu0 0
    %4100 = vmatprep.subr.bf16.mxu0 0
    %4101 = vmatpush1.bf16.msra.mxu0 0
    %4102 = vmatprep.subr.bf16.mxu0 0
    %4103 = vmatpush1.bf16.msra.mxu0 0
    %4104 = vmatprep.subr.bf16.mxu0 0
    %4105 = vmatpush1.bf16.msra.mxu0 0
    %4106 = vmatprep.subr.bf16.mxu0 0
    %4107 = vmatpush1.bf16.msra.mxu0 0
    %4108 = vmatprep.mubr.bf16.mxu0 0
    %4109 = vmatmul.mubr.bf16.gmra.mrb[0].mxu0 %v4074
    %v4110 = vpop.f32.mrb[0].mxu0
    %v4111 = vadd.f32 0.0, %v4110
    %v4112 = vpop.f32.mrb[0].mxu0
    %v4113 = vpop.f32.mrb[0].mxu0
    %v4114 = vadd.f32 0.0, %v4113
    %v4115 = vpop.f32.mrb[0].mxu0
    %4116 = vdwg.mxu0
    %4117 = vrot.lane.b32.xlu0 %v296, 64
    %v4118 = vpop.permute.xlu0 %4117
    %v4121 = vsel %vm2064, %v2797, 0
    %4123 = vmatprep.subr.bf16.mxu0 0
    %4124 = vmatpush1.bf16.msra.mxu0 %v4118
    %4125 = vmatprep.subr.bf16.mxu0 0
    %4126 = vmatpush1.bf16.msra.mxu0 0
    %4127 = vmatprep.subr.bf16.mxu0 0
    %4128 = vmatpush1.bf16.msra.mxu0 0
    %4129 = vmatprep.subr.bf16.mxu0 0
    %4130 = vmatpush1.bf16.msra.mxu0 0
    %4131 = vmatprep.subr.bf16.mxu0 0
    %4132 = vmatpush1.bf16.msra.mxu0 0
    %4133 = vmatprep.subr.bf16.mxu0 0
    %4134 = vmatpush1.bf16.msra.mxu0 0
    %4135 = vmatprep.subr.bf16.mxu0 0
    %4136 = vmatpush1.bf16.msra.mxu0 0
    %4137 = vmatprep.subr.bf16.mxu0 0
    %4138 = vmatpush1.bf16.msra.mxu0 0
    %4139 = vmatprep.subr.bf16.mxu0 0
    %4140 = vmatpush1.bf16.msra.mxu0 0
    %4141 = vmatprep.subr.bf16.mxu0 0
    %4142 = vmatpush1.bf16.msra.mxu0 0
    %4143 = vmatprep.subr.bf16.mxu0 0
    %4144 = vmatpush1.bf16.msra.mxu0 0
    %4145 = vmatprep.subr.bf16.mxu0 0
    %4146 = vmatpush1.bf16.msra.mxu0 0
    %4147 = vmatprep.subr.bf16.mxu0 0
    %4148 = vmatpush1.bf16.msra.mxu0 0
    %4149 = vmatprep.subr.bf16.mxu0 0
    %4150 = vmatpush1.bf16.msra.mxu0 0
    %4151 = vmatprep.subr.bf16.mxu0 0
    %4152 = vmatpush1.bf16.msra.mxu0 0
    %4153 = vmatprep.subr.bf16.mxu0 0
    %4154 = vmatpush1.bf16.msra.mxu0 0
    %4155 = vmatprep.mubr.bf16.mxu0 0
    %4156 = vmatmul.mubr.bf16.gmra.mrb[0].mxu0 %v4121
    %v4157 = vpop.f32.mrb[0].mxu0
    %v4158 = vadd.f32 0.0, %v4157
    %v4159 = vpop.f32.mrb[0].mxu0
    %v4160 = vpop.f32.mrb[0].mxu0
    %v4161 = vadd.f32 0.0, %v4160
    %v4162 = vpop.f32.mrb[0].mxu0
    %4163 = vdwg.mxu0
    %4164 = vrot.lane.b32.xlu0 %v298, 64
    %v4165 = vpop.permute.xlu0 %4164
    %v4168 = vsel %vm2064, %v2798, 0
    %4170 = vmatprep.subr.bf16.mxu0 0
    %4171 = vmatpush1.bf16.msra.mxu0 %v4165
    %4172 = vmatprep.subr.bf16.mxu0 0
    %4173 = vmatpush1.bf16.msra.mxu0 0
    %4174 = vmatprep.subr.bf16.mxu0 0
    %4175 = vmatpush1.bf16.msra.mxu0 0
    %4176 = vmatprep.subr.bf16.mxu0 0
    %4177 = vmatpush1.bf16.msra.mxu0 0
    %4178 = vmatprep.subr.bf16.mxu0 0
    %4179 = vmatpush1.bf16.msra.mxu0 0
    %4180 = vmatprep.subr.bf16.mxu0 0
    %4181 = vmatpush1.bf16.msra.mxu0 0
    %4182 = vmatprep.subr.bf16.mxu0 0
    %4183 = vmatpush1.bf16.msra.mxu0 0
    %4184 = vmatprep.subr.bf16.mxu0 0
    %4185 = vmatpush1.bf16.msra.mxu0 0
    %4186 = vmatprep.subr.bf16.mxu0 0
    %4187 = vmatpush1.bf16.msra.mxu0 0
    %4188 = vmatprep.subr.bf16.mxu0 0
    %4189 = vmatpush1.bf16.msra.mxu0 0
    %4190 = vmatprep.subr.bf16.mxu0 0
    %4191 = vmatpush1.bf16.msra.mxu0 0
    %4192 = vmatprep.subr.bf16.mxu0 0
    %4193 = vmatpush1.bf16.msra.mxu0 0
    %4194 = vmatprep.subr.bf16.mxu0 0
    %4195 = vmatpush1.bf16.msra.mxu0 0
    %4196 = vmatprep.subr.bf16.mxu0 0
    %4197 = vmatpush1.bf16.msra.mxu0 0
    %4198 = vmatprep.subr.bf16.mxu0 0
    %4199 = vmatpush1.bf16.msra.mxu0 0
    %4200 = vmatprep.subr.bf16.mxu0 0
    %4201 = vmatpush1.bf16.msra.mxu0 0
    %4202 = vmatprep.mubr.bf16.mxu0 0
    %4203 = vmatmul.mubr.bf16.gmra.mrb[0].mxu0 %v4168
    %v4204 = vpop.f32.mrb[0].mxu0
    %v4205 = vadd.f32 0.0, %v4204
    %v4206 = vpop.f32.mrb[0].mxu0
    %v4207 = vpop.f32.mrb[0].mxu0
    %v4208 = vadd.f32 0.0, %v4207
    %v4209 = vpop.f32.mrb[0].mxu0
    %4210 = vdwg.mxu0
    %4211 = vrot.lane.b32.xlu0 %v300, 64
    %v4212 = vpop.permute.xlu0 %4211
    %v4215 = vsel %vm2064, %v2799, 0
    %4217 = vmatprep.subr.bf16.mxu0 0
    %4218 = vmatpush1.bf16.msra.mxu0 %v4212
    %4219 = vmatprep.subr.bf16.mxu0 0
    %4220 = vmatpush1.bf16.msra.mxu0 0
    %4221 = vmatprep.subr.bf16.mxu0 0
    %4222 = vmatpush1.bf16.msra.mxu0 0
    %4223 = vmatprep.subr.bf16.mxu0 0
    %4224 = vmatpush1.bf16.msra.mxu0 0
    %4225 = vmatprep.subr.bf16.mxu0 0
    %4226 = vmatpush1.bf16.msra.mxu0 0
    %4227 = vmatprep.subr.bf16.mxu0 0
    %4228 = vmatpush1.bf16.msra.mxu0 0
    %4229 = vmatprep.subr.bf16.mxu0 0
    %4230 = vmatpush1.bf16.msra.mxu0 0
    %4231 = vmatprep.subr.bf16.mxu0 0
    %4232 = vmatpush1.bf16.msra.mxu0 0
    %4233 = vmatprep.subr.bf16.mxu0 0
    %4234 = vmatpush1.bf16.msra.mxu0 0
    %4235 = vmatprep.subr.bf16.mxu0 0
    %4236 = vmatpush1.bf16.msra.mxu0 0
    %4237 = vmatprep.subr.bf16.mxu0 0
    %4238 = vmatpush1.bf16.msra.mxu0 0
    %4239 = vmatprep.subr.bf16.mxu0 0
    %4240 = vmatpush1.bf16.msra.mxu0 0
    %4241 = vmatprep.subr.bf16.mxu0 0
    %4242 = vmatpush1.bf16.msra.mxu0 0
    %4243 = vmatprep.subr.bf16.mxu0 0
    %4244 = vmatpush1.bf16.msra.mxu0 0
    %4245 = vmatprep.subr.bf16.mxu0 0
    %4246 = vmatpush1.bf16.msra.mxu0 0
    %4247 = vmatprep.subr.bf16.mxu0 0
    %4248 = vmatpush1.bf16.msra.mxu0 0
    %4249 = vmatprep.mubr.bf16.mxu0 0
    %4250 = vmatmul.mubr.bf16.gmra.mrb[0].mxu0 %v4215
    %v4251 = vpop.f32.mrb[0].mxu0
    %v4252 = vadd.f32 0.0, %v4251
    %v4253 = vpop.f32.mrb[0].mxu0
    %v4254 = vpop.f32.mrb[0].mxu0
    %v4255 = vadd.f32 0.0, %v4254
    %v4256 = vpop.f32.mrb[0].mxu0
    %4257 = vdwg.mxu0
    %4258 = vrot.lane.b32.xlu0 %v302, 64
    %v4259 = vpop.permute.xlu0 %4258
    %v4262 = vsel %vm2064, %v2800, 0
    %4264 = vmatprep.subr.bf16.mxu0 0
    %4265 = vmatpush1.bf16.msra.mxu0 %v4259
    %4266 = vmatprep.subr.bf16.mxu0 0
    %4267 = vmatpush1.bf16.msra.mxu0 0
    %4268 = vmatprep.subr.bf16.mxu0 0
    %4269 = vmatpush1.bf16.msra.mxu0 0
    %4270 = vmatprep.subr.bf16.mxu0 0
    %4271 = vmatpush1.bf16.msra.mxu0 0
    %4272 = vmatprep.subr.bf16.mxu0 0
    %4273 = vmatpush1.bf16.msra.mxu0 0
    %4274 = vmatprep.subr.bf16.mxu0 0
    %4275 = vmatpush1.bf16.msra.mxu0 0
    %4276 = vmatprep.subr.bf16.mxu0 0
    %4277 = vmatpush1.bf16.msra.mxu0 0
    %4278 = vmatprep.subr.bf16.mxu0 0
    %4279 = vmatpush1.bf16.msra.mxu0 0
    %4280 = vmatprep.subr.bf16.mxu0 0
    %4281 = vmatpush1.bf16.msra.mxu0 0
    %4282 = vmatprep.subr.bf16.mxu0 0
    %4283 = vmatpush1.bf16.msra.mxu0 0
    %4284 = vmatprep.subr.bf16.mxu0 0
    %4285 = vmatpush1.bf16.msra.mxu0 0
    %4286 = vmatprep.subr.bf16.mxu0 0
    %4287 = vmatpush1.bf16.msra.mxu0 0
    %4288 = vmatprep.subr.bf16.mxu0 0
    %4289 = vmatpush1.bf16.msra.mxu0 0
    %4290 = vmatprep.subr.bf16.mxu0 0
    %4291 = vmatpush1.bf16.msra.mxu0 0
    %4292 = vmatprep.subr.bf16.mxu0 0
    %4293 = vmatpush1.bf16.msra.mxu0 0
    %4294 = vmatprep.subr.bf16.mxu0 0
    %4295 = vmatpush1.bf16.msra.mxu0 0
    %4296 = vmatprep.mubr.bf16.mxu0 0
    %4297 = vmatmul.mubr.bf16.gmra.mrb[0].mxu0 %v4262
    %v4298 = vpop.f32.mrb[0].mxu0
    %v4299 = vadd.f32 0.0, %v4298
    %v4300 = vpop.f32.mrb[0].mxu0
    %v4301 = vpop.f32.mrb[0].mxu0
    %v4302 = vadd.f32 0.0, %v4301
    %v4303 = vpop.f32.mrb[0].mxu0
    %4304 = vdwg.mxu0
    %4321 = vrot.lane.b32.xlu0 %v3218, 8
    %v4322 = vpop.permute.xlu0 %4321
    %4323 = vrot.lane.b32.xlu0 %v3221, 8
    %v4324 = vpop.permute.xlu0 %4323
    %4325 = vrot.lane.b32.xlu0 %v3265, 8
    %v4326 = vpop.permute.xlu0 %4325
    %4327 = vrot.lane.b32.xlu0 %v3268, 8
    %v4328 = vpop.permute.xlu0 %4327
    %4329 = vrot.lane.b32.xlu0 %v3312, 8
    %v4330 = vpop.permute.xlu0 %4329
    %4331 = vrot.lane.b32.xlu0 %v3315, 8
    %v4332 = vpop.permute.xlu0 %4331
    %4333 = vrot.lane.b32.xlu0 %v3359, 8
    %v4334 = vpop.permute.xlu0 %4333
    %4335 = vrot.lane.b32.xlu0 %v3362, 8
    %v4336 = vpop.permute.xlu0 %4335
    %4337 = vrot.lane.b32.xlu0 %v3406, 8
    %v4338 = vpop.permute.xlu0 %4337
    %4339 = vrot.lane.b32.xlu0 %v3409, 8
    %v4340 = vpop.permute.xlu0 %4339
    %4341 = vrot.lane.b32.xlu0 %v3453, 8
    %v4342 = vpop.permute.xlu0 %4341
    %4343 = vrot.lane.b32.xlu0 %v3456, 8
    %v4344 = vpop.permute.xlu0 %4343
    %4345 = vrot.lane.b32.xlu0 %v3500, 8
    %v4346 = vpop.permute.xlu0 %4345
    %4347 = vrot.lane.b32.xlu0 %v3503, 8
    %v4348 = vpop.permute.xlu0 %4347
    %4349 = vrot.lane.b32.xlu0 %v3547, 8
    %v4350 = vpop.permute.xlu0 %4349
    %4351 = vrot.lane.b32.xlu0 %v3550, 8
    %v4352 = vpop.permute.xlu0 %4351
    %4385 = vrot.lane.b32.xlu0 %v3594, 16
    %v4386 = vpop.permute.xlu0 %4385
    %4387 = vrot.lane.b32.xlu0 %v3597, 16
    %v4388 = vpop.permute.xlu0 %4387
    %4389 = vrot.lane.b32.xlu0 %v3641, 16
    %v4390 = vpop.permute.xlu0 %4389
    %4391 = vrot.lane.b32.xlu0 %v3644, 16
    %v4392 = vpop.permute.xlu0 %4391
    %4393 = vrot.lane.b32.xlu0 %v3688, 16
    %v4394 = vpop.permute.xlu0 %4393
    %4395 = vrot.lane.b32.xlu0 %v3691, 16
    %v4396 = vpop.permute.xlu0 %4395
    %4397 = vrot.lane.b32.xlu0 %v3735, 16
    %v4398 = vpop.permute.xlu0 %4397
    %4399 = vrot.lane.b32.xlu0 %v3738, 16
    %v4400 = vpop.permute.xlu0 %4399
    %4401 = vrot.lane.b32.xlu0 %v3782, 16
    %v4402 = vpop.permute.xlu0 %4401
    %4403 = vrot.lane.b32.xlu0 %v3785, 16
    %v4404 = vpop.permute.xlu0 %4403
    %4405 = vrot.lane.b32.xlu0 %v3829, 16
    %v4406 = vpop.permute.xlu0 %4405
    %4407 = vrot.lane.b32.xlu0 %v3832, 16
    %v4408 = vpop.permute.xlu0 %4407
    %4409 = vrot.lane.b32.xlu0 %v3876, 16
    %v4410 = vpop.permute.xlu0 %4409
    %4411 = vrot.lane.b32.xlu0 %v3879, 16
    %v4412 = vpop.permute.xlu0 %4411
    %4413 = vrot.lane.b32.xlu0 %v3923, 16
    %v4414 = vpop.permute.xlu0 %4413
    %4415 = vrot.lane.b32.xlu0 %v3926, 16
    %v4416 = vpop.permute.xlu0 %4415
    %4449 = vrot.lane.b32.xlu0 %v3970, 24
    %v4450 = vpop.permute.xlu0 %4449
    %4451 = vrot.lane.b32.xlu0 %v3973, 24
    %v4452 = vpop.permute.xlu0 %4451
    %4453 = vrot.lane.b32.xlu0 %v4017, 24
    %v4454 = vpop.permute.xlu0 %4453
    %4455 = vrot.lane.b32.xlu0 %v4020, 24
    %v4456 = vpop.permute.xlu0 %4455
    %4457 = vrot.lane.b32.xlu0 %v4064, 24
    %v4458 = vpop.permute.xlu0 %4457
    %4459 = vrot.lane.b32.xlu0 %v4067, 24
    %v4460 = vpop.permute.xlu0 %4459
    %4461 = vrot.lane.b32.xlu0 %v4111, 24
    %v4462 = vpop.permute.xlu0 %4461
    %4463 = vrot.lane.b32.xlu0 %v4114, 24
    %v4464 = vpop.permute.xlu0 %4463
    %4465 = vrot.lane.b32.xlu0 %v4158, 24
    %v4466 = vpop.permute.xlu0 %4465
    %4467 = vrot.lane.b32.xlu0 %v4161, 24
    %v4468 = vpop.permute.xlu0 %4467
    %4469 = vrot.lane.b32.xlu0 %v4205, 24
    %v4470 = vpop.permute.xlu0 %4469
    %4471 = vrot.lane.b32.xlu0 %v4208, 24
    %v4472 = vpop.permute.xlu0 %4471
    %4473 = vrot.lane.b32.xlu0 %v4252, 24
    %v4474 = vpop.permute.xlu0 %4473
    %4475 = vrot.lane.b32.xlu0 %v4255, 24
    %v4476 = vpop.permute.xlu0 %4475
    %4477 = vrot.lane.b32.xlu0 %v4299, 24
    %v4478 = vpop.permute.xlu0 %4477
    %4479 = vrot.lane.b32.xlu0 %v4302, 24
    %v4480 = vpop.permute.xlu0 %4479
    %v4497 = vsel %vm305, %v2842, %v4322
    %v4498 = vsel %vm305, %v2845, %v4324
    %v4499 = vsel %vm305, %v2889, %v4326
    %v4500 = vsel %vm305, %v2892, %v4328
    %v4501 = vsel %vm305, %v2936, %v4330
    %v4502 = vsel %vm305, %v2939, %v4332
    %v4503 = vsel %vm305, %v2983, %v4334
    %v4504 = vsel %vm305, %v2986, %v4336
    %v4505 = vsel %vm305, %v3030, %v4338
    %v4506 = vsel %vm305, %v3033, %v4340
    %v4507 = vsel %vm305, %v3077, %v4342
    %v4508 = vsel %vm305, %v3080, %v4344
    %v4509 = vsel %vm305, %v3124, %v4346
    %v4510 = vsel %vm305, %v3127, %v4348
    %v4511 = vsel %vm305, %v3171, %v4350
    %v4512 = vsel %vm305, %v3174, %v4352
    %v4513 = vsel %vm2064, %v4497, %v4386
    %v4514 = vsel %vm2064, %v4498, %v4388
    %v4515 = vsel %vm2064, %v4499, %v4390
    %v4516 = vsel %vm2064, %v4500, %v4392
    %v4517 = vsel %vm2064, %v4501, %v4394
    %v4518 = vsel %vm2064, %v4502, %v4396
    %v4519 = vsel %vm2064, %v4503, %v4398
    %v4520 = vsel %vm2064, %v4504, %v4400
    %v4521 = vsel %vm2064, %v4505, %v4402
    %v4522 = vsel %vm2064, %v4506, %v4404
    %v4523 = vsel %vm2064, %v4507, %v4406
    %v4524 = vsel %vm2064, %v4508, %v4408
    %v4525 = vsel %vm2064, %v4509, %v4410
    %v4526 = vsel %vm2064, %v4510, %v4412
    %v4527 = vsel %vm2064, %v4511, %v4414
    %v4528 = vsel %vm2064, %v4512, %v4416
    %vm4529 = vcmask 195584
    %v4530 = vsel %vm4529, %v4513, %v4450
    %v4531 = vsel %vm4529, %v4514, %v4452
    %v4532 = vsel %vm4529, %v4515, %v4454
    %v4533 = vsel %vm4529, %v4516, %v4456
    %v4534 = vsel %vm4529, %v4517, %v4458
    %v4535 = vsel %vm4529, %v4518, %v4460
    %v4536 = vsel %vm4529, %v4519, %v4462
    %v4537 = vsel %vm4529, %v4520, %v4464
    %v4538 = vsel %vm4529, %v4521, %v4466
    %v4539 = vsel %vm4529, %v4522, %v4468
    %v4540 = vsel %vm4529, %v4523, %v4470
    %v4541 = vsel %vm4529, %v4524, %v4472
    %v4542 = vsel %vm4529, %v4525, %v4474
    %v4543 = vsel %vm4529, %v4526, %v4476
    %v4544 = vsel %vm4529, %v4527, %v4478
    %v4545 = vsel %vm4529, %v4528, %v4480
    %v4546 = vpack.c.bf16 %v4531, %v4530
    %v4547 = vpack.c.bf16 %v4533, %v4532
    %v4548 = vpack.c.bf16 %v4535, %v4534
    %v4549 = vpack.c.bf16 %v4537, %v4536
    %v4550 = vpack.c.bf16 %v4539, %v4538
    %v4551 = vpack.c.bf16 %v4541, %v4540
    %v4552 = vpack.c.bf16 %v4543, %v4542
    %v4553 = vpack.c.bf16 %v4545, %v4544
    %v4554 = vld [vmem:[%s3] sm:$0xf]
    %v4555 = vld [vmem:[%s3 + $0x4] sm:$0xf]
    %v4556 = vld [vmem:[%s3 + $0x8] sm:$0xf]
    %v4557 = vld [vmem:[%s3 + $0xc] sm:$0xf]
    %v4558 = vld [vmem:[%s4] sm:$0x1]
    %v4560 = vlaneseq
    %v4561 = vshrl.u32 %v4560, 7
    %v4562 = vsub.s32 0, %v4561
    %v4563 = vrot.slane %v4558, %v4562
    %v4569 = vunpack.c.l.b16 %v4554
    %v4570 = vunpack.c.l.b16 %v4555
    %v4571 = vunpack.c.l.b16 %v4556
    %v4572 = vunpack.c.l.b16 %v4557
    %v4573 = vpack.c.b16 %v4570, %v4569
    %v4574 = vpack.c.b16 %v4572, %v4571
    %v4578 = vsel %vm117, %v4546, 0
    %v4581 = vsel %vm117, %v4547, 0
    %v4584 = vsel %vm117, %v4548, 0
    %v4587 = vsel %vm117, %v4549, 0
    %v4590 = vsel %vm117, %v4550, 0
    %v4593 = vsel %vm117, %v4551, 0
    %v4596 = vsel %vm117, %v4552, 0
    %v4599 = vsel %vm117, %v4553, 0
    %4601 = vmatprep.subr.bf16.mxu0 0
    %4602 = vmatpush1.bf16.msra.mxu0 %v4573
    %4603 = vmatprep.subr.bf16.mxu0 0
    %4604 = vmatpush1.bf16.msra.mxu0 %v4574
    %4605 = vmatprep.subr.bf16.mxu0 0
    %4606 = vmatpush1.bf16.msra.mxu0 0
    %4607 = vmatprep.subr.bf16.mxu0 0
    %4608 = vmatpush1.bf16.msra.mxu0 0
    %4609 = vmatprep.subr.bf16.mxu0 0
    %4610 = vmatpush1.bf16.msra.mxu0 0
    %4611 = vmatprep.subr.bf16.mxu0 0
    %4612 = vmatpush1.bf16.msra.mxu0 0
    %4613 = vmatprep.subr.bf16.mxu0 0
    %4614 = vmatpush1.bf16.msra.mxu0 0
    %4615 = vmatprep.subr.bf16.mxu0 0
    %4616 = vmatpush1.bf16.msra.mxu0 0
    %4617 = vmatprep.subr.bf16.mxu0 0
    %4618 = vmatpush1.bf16.msra.mxu0 0
    %4619 = vmatprep.subr.bf16.mxu0 0
    %4620 = vmatpush1.bf16.msra.mxu0 0
    %4621 = vmatprep.subr.bf16.mxu0 0
    %4622 = vmatpush1.bf16.msra.mxu0 0
    %4623 = vmatprep.subr.bf16.mxu0 0
    %4624 = vmatpush1.bf16.msra.mxu0 0
    %4625 = vmatprep.subr.bf16.mxu0 0
    %4626 = vmatpush1.bf16.msra.mxu0 0
    %4627 = vmatprep.subr.bf16.mxu0 0
    %4628 = vmatpush1.bf16.msra.mxu0 0
    %4629 = vmatprep.subr.bf16.mxu0 0
    %4630 = vmatpush1.bf16.msra.mxu0 0
    %4631 = vmatprep.subr.bf16.mxu0 0
    %4632 = vmatpush1.bf16.msra.mxu0 0
    %4633 = vmatprep.mubr.bf16.mxu0 0
    %4634 = vmatmul.mubr.bf16.gmra.mrb[0].mxu0 %v4578
    %v4635 = vpop.f32.mrb[0].mxu0
    %v4636 = vadd.f32 %v4563, %v4635
    %v4637 = vpop.f32.mrb[0].mxu0
    %v4638 = vpop.f32.mrb[0].mxu0
    %v4639 = vadd.f32 %v4563, %v4638
    %v4640 = vpop.f32.mrb[0].mxu0
    %4641 = vmatprep.mubr.bf16.mxu0 0
    %4642 = vmatmul.mubr.bf16.gmra.mrb[0].mxu0 %v4581
    %v4643 = vpop.f32.mrb[0].mxu0
    %v4644 = vadd.f32 %v4563, %v4643
    %v4645 = vpop.f32.mrb[0].mxu0
    %v4646 = vpop.f32.mrb[0].mxu0
    %v4647 = vadd.f32 %v4563, %v4646
    %v4648 = vpop.f32.mrb[0].mxu0
    %4649 = vmatprep.mubr.bf16.mxu0 0
    %4650 = vmatmul.mubr.bf16.gmra.mrb[0].mxu0 %v4584
    %v4651 = vpop.f32.mrb[0].mxu0
    %v4652 = vadd.f32 %v4563, %v4651
    %v4653 = vpop.f32.mrb[0].mxu0
    %v4654 = vpop.f32.mrb[0].mxu0
    %v4655 = vadd.f32 %v4563, %v4654
    %v4656 = vpop.f32.mrb[0].mxu0
    %4657 = vmatprep.mubr.bf16.mxu0 0
    %4658 = vmatmul.mubr.bf16.gmra.mrb[0].mxu0 %v4587
    %v4659 = vpop.f32.mrb[0].mxu0
    %v4660 = vadd.f32 %v4563, %v4659
    %v4661 = vpop.f32.mrb[0].mxu0
    %v4662 = vpop.f32.mrb[0].mxu0
    %v4663 = vadd.f32 %v4563, %v4662
    %v4664 = vpop.f32.mrb[0].mxu0
    %4665 = vmatprep.mubr.bf16.mxu0 0
    %4666 = vmatmul.mubr.bf16.gmra.mrb[0].mxu0 %v4590
    %v4667 = vpop.f32.mrb[0].mxu0
    %v4668 = vadd.f32 %v4563, %v4667
    %v4669 = vpop.f32.mrb[0].mxu0
    %v4670 = vpop.f32.mrb[0].mxu0
    %v4671 = vadd.f32 %v4563, %v4670
    %v4672 = vpop.f32.mrb[0].mxu0
    %4673 = vmatprep.mubr.bf16.mxu0 0
    %4674 = vmatmul.mubr.bf16.gmra.mrb[0].mxu0 %v4593
    %v4675 = vpop.f32.mrb[0].mxu0
    %v4676 = vadd.f32 %v4563, %v4675
    %v4677 = vpop.f32.mrb[0].mxu0
    %v4678 = vpop.f32.mrb[0].mxu0
    %v4679 = vadd.f32 %v4563, %v4678
    %v4680 = vpop.f32.mrb[0].mxu0
    %4681 = vmatprep.mubr.bf16.mxu0 0
    %4682 = vmatmul.mubr.bf16.gmra.mrb[0].mxu0 %v4596
    %v4683 = vpop.f32.mrb[0].mxu0
    %v4684 = vadd.f32 %v4563, %v4683
    %v4685 = vpop.f32.mrb[0].mxu0
    %v4686 = vpop.f32.mrb[0].mxu0
    %v4687 = vadd.f32 %v4563, %v4686
    %v4688 = vpop.f32.mrb[0].mxu0
    %4689 = vmatprep.mubr.bf16.mxu0 0
    %4690 = vmatmul.mubr.bf16.gmra.mrb[0].mxu0 %v4599
    %v4691 = vpop.f32.mrb[0].mxu0
    %v4692 = vadd.f32 %v4563, %v4691
    %v4693 = vpop.f32.mrb[0].mxu0
    %v4694 = vpop.f32.mrb[0].mxu0
    %v4695 = vadd.f32 %v4563, %v4694
    %v4696 = vpop.f32.mrb[0].mxu0
    %4697 = vdwg.mxu0
    %v4698 = vpack.c.bf16 %v4639, %v4636
    %v4699 = vpack.c.bf16 %v4647, %v4644
    %v4700 = vpack.c.bf16 %v4655, %v4652
    %v4701 = vpack.c.bf16 %v4663, %v4660
    %v4702 = vpack.c.bf16 %v4671, %v4668
    %v4703 = vpack.c.bf16 %v4679, %v4676
    %v4704 = vpack.c.bf16 %v4687, %v4684
    %v4705 = vpack.c.bf16 %v4695, %v4692
    %v4714 = vunpack.c.l.b16 %v4698
    %v4715 = vunpack.c.h.b16 %v4698
    %v4716 = vunpack.c.l.b16 %v4699
    %v4717 = vunpack.c.h.b16 %v4699
    %v4718 = vunpack.c.l.b16 %v4700
    %v4719 = vunpack.c.h.b16 %v4700
    %v4720 = vunpack.c.l.b16 %v4701
    %v4721 = vunpack.c.h.b16 %v4701
    %v4722 = vunpack.c.l.b16 %v4702
    %v4723 = vunpack.c.h.b16 %v4702
    %v4724 = vunpack.c.l.b16 %v4703
    %v4725 = vunpack.c.h.b16 %v4703
    %v4726 = vunpack.c.l.b16 %v4704
    %v4727 = vunpack.c.h.b16 %v4704
    %v4728 = vunpack.c.l.b16 %v4705
    %v4729 = vunpack.c.h.b16 %v4705
    %v4730 = vpack.c.b16 %v4714, %v4714
    %v4731 = vpack.c.b16 %v4715, %v4715
    %v4732 = vpack.c.b16 %v4716, %v4716
    %v4733 = vpack.c.b16 %v4717, %v4717
    %v4734 = vpack.c.b16 %v4718, %v4718
    %v4735 = vpack.c.b16 %v4719, %v4719
    %v4736 = vpack.c.b16 %v4720, %v4720
    %v4737 = vpack.c.b16 %v4721, %v4721
    %v4738 = vpack.c.b16 %v4722, %v4722
    %v4739 = vpack.c.b16 %v4723, %v4723
    %v4740 = vpack.c.b16 %v4724, %v4724
    %v4741 = vpack.c.b16 %v4725, %v4725
    %v4742 = vpack.c.b16 %v4726, %v4726
    %v4743 = vpack.c.b16 %v4727, %v4727
    %v4744 = vpack.c.b16 %v4728, %v4728
    %v4745 = vpack.c.b16 %v4729, %v4729
    %vm4762 = vcmask 257024
    %4763 = vst.msk [vmem:[%s6] sm:$0xf] %vm4762, %v4730
    %4764 = vst.msk [vmem:[%s6 + $0x4] sm:$0xf] %vm4762, %v4731
    %4765 = vst.msk [vmem:[%s6 + $0x8] sm:$0xf] %vm4762, %v4732
    %4766 = vst.msk [vmem:[%s6 + $0xc] sm:$0xf] %vm4762, %v4733
    %4767 = vst.msk [vmem:[%s6 + $0x10] sm:$0xf] %vm4762, %v4734
    %4768 = vst.msk [vmem:[%s6 + $0x14] sm:$0xf] %vm4762, %v4735
    %4769 = vst.msk [vmem:[%s6 + $0x18] sm:$0xf] %vm4762, %v4736
    %4770 = vst.msk [vmem:[%s6 + $0x1c] sm:$0xf] %vm4762, %v4737
    %4771 = vst.msk [vmem:[%s6 + $0x20] sm:$0xf] %vm4762, %v4738
    %4772 = vst.msk [vmem:[%s6 + $0x24] sm:$0xf] %vm4762, %v4739
    %4773 = vst.msk [vmem:[%s6 + $0x28] sm:$0xf] %vm4762, %v4740
    %4774 = vst.msk [vmem:[%s6 + $0x2c] sm:$0xf] %vm4762, %v4741
    %4775 = vst.msk [vmem:[%s6 + $0x30] sm:$0xf] %vm4762, %v4742
    %4776 = vst.msk [vmem:[%s6 + $0x34] sm:$0xf] %vm4762, %v4743
    %4777 = vst.msk [vmem:[%s6 + $0x38] sm:$0xf] %vm4762, %v4744
    %4778 = vst.msk [vmem:[%s6 + $0x3c] sm:$0xf] %vm4762, %v4745
    // Predicated region
    $region30: #{tpu_custom_call.1} parent=1 // pred_check
      _
    $region31: #{tpu_custom_call.1} parent=1 // pred_check_branch
      %4780 = sbr.rel (0) target = $region33
    $region32: #{tpu_custom_call.1} parent=1 // pred_region
      _
    $region33: #{tpu_custom_call.1} parent=1 // pred_fallthru
      _
    // Predicated region
    $region34: #{tpu_custom_call.1} parent=1 // pred_check
      _
    $region35: #{tpu_custom_call.1} parent=1 // pred_check_branch
      %4782 = sbr.rel (0) target = $region37
    $region36: #{tpu_custom_call.1} parent=1 // pred_region
      _
    $region37: #{tpu_custom_call.1} parent=1 // pred_fallthru
      _
    %4783 = vsyncpa [#allocation3], 1

</llo_original>
